<compile_context>
chip_gen: v7x
topology: tpu7x:2x2x1
jax: 0.10.0
libtpu: 0.0.40
codegen_flags: <defaults>
</compile_context>

<pallas_src>
import numpy as np
import jax
import jax.numpy as jnp
from jax import lax
from jax.experimental import pallas as pl
from jax.experimental.pallas import tpu as pltpu

# ---- model hyper-parameters (small, consistent with the module) ----
B = 2          # batch size
N_NODE = 8     # n_node_type
N_EDGE = 2     # n_edge_type
HIDDEN = 32    # hidden_dim
ANNO = 1       # annotation_dim
N_STEPS = 5    # n_steps
LN_EPS = 1e-5  # torch.nn.LayerNorm default eps

H, E, N = HIDDEN, N_EDGE, N_NODE
BN = B * N          # 16 node-rows across the batch (sublane dim)
EH = E * H          # 64  LayerNorm width
NE = N * E          # 16  adjacency width per direction (torch layout)
INV_EH = 1.0 / EH

# lane offsets inside the packed 32-row weight matrix `w_all` [H, 384]
_OFF_WX = 0          # [:,   0:256] fused x weight: fc_in | fc_out | gz_x | gr_x | 0 | 0
_OFF_WT_X = 256      # [:, 256:288] trans rows hit by r*x
_OFF_WFC1_X = 288    # [:, 288:320] fc1 rows hit by x
_W_ALL_COLS = 384


# ---------------------------------------------------------------------------
# Pallas kernel: full batch, full propagation + output head in one invocation (no grid).
# ---------------------------------------------------------------------------
def _ggnn_ln_kernel(nd_ref, adj_ref, w_ref, wa_ref, vec_ref, out_ref, rhs_ref):
    # zero the block-diagonal RHS scratch once; only its two diagonal blocks are rewritten per step
    rhs_ref[...] = jnp.zeros_like(rhs_ref)

    x = nd_ref[:, 0:H]                                   # [BN, H] initial hidden state
    adjb = adj_ref[...]                                  # [BN, 2*E*BN] block-diag adjacency (in|out)
    wa = wa_ref[...]                                     # [2H, 4H] fused a_in/a_out gate weight
    w_x = w_ref[:, _OFF_WX:_OFF_WX + 8 * H]              # [H, 256] fused x weight
    wt_x = w_ref[:, _OFF_WT_X:_OFF_WT_X + H]             # [H, H]   trans(r*x)

    # loop-invariant row vectors, broadcast ONCE (broadcast_in_dim is not CSE'd by JAX)
    b_io_f = jnp.broadcast_to(vec_ref[0:1, :], (BN, 2 * EH))     # fc_in|fc_out bias
    g_in_f = jnp.broadcast_to(vec_ref[1:2, :], (BN, 2 * EH))     # gamma_in | zeros
    beta_f = jnp.broadcast_to(vec_ref[2:3, :], (BN, 2 * EH))     # beta_in  | beta_out
    b_zrt_f = jnp.broadcast_to(vec_ref[3:4, :], (BN, 2 * EH))    # b_z | b_r | b_t | 0
    mask_in_f = jnp.broadcast_to(vec_ref[5:6, :], (BN, 2 * EH))  # ones(EH) | zeros(EH)
    g_out_f = jnp.broadcast_to(vec_ref[6:7, :], (BN, 2 * EH))    # zeros | gamma_out

    def mm(a, b):
        return jnp.dot(a, b, preferred_element_type=jnp.float32)

    # ---- n_steps of gated propagation (statically unrolled) ----
    for _ in range(N_STEPS):
        # (1) fused x matmul: [pre_in | pre_out | gate_z(x) | gate_r(x) | 0 | 0]
        xmm = mm(x, w_x)                                          # [BN, 256]
        pre = xmm[:, 0:2 * EH] + b_io_f                           # [BN, 128] fc_in|fc_out pre-LN
        gx = xmm[:, 2 * EH:4 * EH] + b_zrt_f                      # [BN, 128] x gate term + biases

        # per-half LayerNorm; stats via full-width lane-masked reductions (one-pass E[x],E[x^2])
        p_in = pre * mask_in_f
        p_out = pre - p_in
        mu_in = jnp.sum(p_in, axis=-1, keepdims=True) * INV_EH
        mu_out = jnp.sum(p_out, axis=-1, keepdims=True) * INV_EH
        ms_in = jnp.sum(p_in * p_in, axis=-1, keepdims=True) * INV_EH
        ms_out = jnp.sum(p_out * p_out, axis=-1, keepdims=True) * INV_EH
        sc_in = lax.rsqrt(ms_in - mu_in * mu_in + LN_EPS)
        sc_out = lax.rsqrt(ms_out - mu_out * mu_out + LN_EPS)
        mu_sel = mu_out + (mu_in - mu_out) * mask_in_f            # per-half mean, full width
        sg_sel = sc_in * g_in_f + sc_out * g_out_f                # gamma pre-masked per half
        ln = (pre - mu_sel) * sg_sel + beta_f                     # [BN, 128] = ln_in | ln_out

        # (2) block-diagonal adjacency matmul. RHS rows ordered (direction, edge, batch, node);
        #     a_in lands in output lanes 0:H, a_out in lanes H:2H (zero blocks stay from init).
        rhs_ref[0:BN, 0:H] = ln[:, 0:H]                           # in,  e=0
        rhs_ref[BN:2 * BN, 0:H] = ln[:, H:2 * H]                  # in,  e=1
        rhs_ref[2 * BN:3 * BN, H:2 * H] = ln[:, 2 * H:3 * H]      # out, e=0
        rhs_ref[3 * BN:4 * BN, H:2 * H] = ln[:, 3 * H:4 * H]      # out, e=1
        a = mm(adjb, rhs_ref[...])                                # [BN, 2H] = [a_in | a_out]

        # (3) fused a-gate matmul + (4) trans(r*x)
        g = mm(a, wa) + gx                                        # [BN, 128]: z | r | t | pad
        z = jax.nn.sigmoid(g[:, 0:H])
        r = jax.nn.sigmoid(g[:, H:2 * H])
        h_hat = jnp.tanh(g[:, 2 * H:3 * H] + mm(r * x, wt_x))
        x = x + z * (h_hat - x)                                   # = (1-z)*x + z*h_hat

    # ---- output head (task_id not in {18,19}): fc1 -> tanh -> fc2 -> sum over size-1 dim ----
    # head-only constants are touched only here (not loop-carried).
    anno = nd_ref[:, H:H + ANNO]                                  # [BN, 1]
    wfc1_x = w_ref[:, _OFF_WFC1_X:_OFF_WFC1_X + H]                # [H, H]
    head = vec_ref[4:5, :]                                        # [1, 128]
    b_fc1_f = jnp.broadcast_to(head[:, 0:H], (BN, H))
    wfc1_a_f = jnp.broadcast_to(head[:, H:2 * H], (BN, H))
    wfc2_f = jnp.broadcast_to(head[:, 2 * H:3 * H], (BN, H))
    b_fc2 = head[:, 3 * H:3 * H + 1]                              # [1, 1]

    h1 = jnp.tanh(mm(x, wfc1_x) + anno * wfc1_a_f + b_fc1_f)      # [BN, H]
    out_ref[...] = jnp.sum(h1 * wfc2_f, axis=-1, keepdims=True) + b_fc2


# ---------------------------------------------------------------------------
# Wrapper: pack inputs/parameters into 5 lane-aligned buffers + pallas_call (no grid).
# ---------------------------------------------------------------------------
def ggnn_ln_forward(x, a, m, params):
    assert x.shape == (B, N, H) and a.shape == (B, N, ANNO) and m.shape == (B, N, 2 * NE)
    f32 = jnp.float32

    # ---- per-node data slab: [x | annotation | pad] -> [BN, 64]
    nd = jnp.concatenate([
        x.reshape(BN, H).astype(f32),
        a.reshape(BN, ANNO).astype(f32),
        jnp.zeros((BN, 2 * H - H - ANNO), f32),
    ], axis=-1)

    # ---- block-diagonal adjacency LHS [BN, 2*E*BN] = [16, 64], pre-shaped off the kernel path.
    # Column layout: dir*E*BN + e*BN + b*N + n'  (dir 0 = in, dir 1 = out).
    mf = m.astype(f32)
    adjb = jnp.zeros((BN, 2 * E * BN), f32)
    for b in range(B):
        for e in range(E):
            adjb = adjb.at[b * N:(b + 1) * N,
                           e * BN + b * N: e * BN + (b + 1) * N].set(mf[b, :, e * N:(e + 1) * N])
            adjb = adjb.at[b * N:(b + 1) * N,
                           E * BN + e * BN + b * N: E * BN + e * BN + (b + 1) * N].set(
                mf[b, :, NE + e * N: NE + (e + 1) * N])

    # fc_in / fc_out output-column permutation: torch column h*E+e -> blocked column e*H+h,
    # so the view/transpose/view of the reference collapses to static lane slices.
    perm = np.arange(H * E).reshape(H, E).T.reshape(-1)

    w_in = params["fc_in.W"].T[:, perm]            # [H, E*H]
    w_out = params["fc_out.W"].T[:, perm]          # [H, E*H]
    w_z = params["gate_z.W"].T                     # [3H, H]
    w_r = params["gate_r.W"].T
    w_t = params["trans.W"].T
    w_fc1 = params["fc1.W"].T                      # [H+ANNO, H]
    w_fc2 = params["fc2.W"].T                      # [H, 1]

    zeros_hh = jnp.zeros((H, H), f32)
    # all 32-row weight blocks packed into one [H, 384] matrix
    w_all = jnp.concatenate([
        w_in, w_out,                                         #   0:128  fc_in | fc_out
        w_z[2 * H:], w_r[2 * H:], zeros_hh, zeros_hh,        # 128:256  gate rows hit by x (t zeroed)
        w_t[2 * H:],                                         # 256:288  trans rows hit by r*x
        w_fc1[0:H],                                          # 288:320  fc1 rows hit by x
        jnp.zeros((H, 2 * H), f32),                          # 320:384  pad
    ], axis=1)
    assert w_all.shape == (H, _W_ALL_COLS)

    # fused gate weight for [a_in | a_out]: [2H, 4H] = [64, 128], columns z | r | t | pad
    w_a = jnp.concatenate([
        jnp.concatenate([w_z[0:H], w_r[0:H], w_t[0:H], zeros_hh], axis=1),          # a_in rows
        jnp.concatenate([w_z[H:2 * H], w_r[H:2 * H], w_t[H:2 * H], zeros_hh], axis=1),  # a_out rows
    ], axis=0)

    # all row vectors packed into one [8, 128] slab
    b_in = params["fc_in.b"][perm]
    b_out = params["fc_out.b"][perm]
    g_in, be_in = params["fc_in_ln.g"][perm], params["fc_in_ln.b"][perm]
    g_out, be_out = params["fc_out_ln.g"][perm], params["fc_out_ln.b"][perm]

    def row128(*pieces):
        v = jnp.concatenate([jnp.asarray(p, f32).reshape(-1) for p in pieces])
        return jnp.pad(v, (0, 2 * EH - v.shape[0]))[None, :]

    vecs = jnp.concatenate([
        row128(b_in, b_out),                                             # 0: fc_in|fc_out bias
        row128(g_in, jnp.zeros((EH,), f32)),                             # 1: gamma_in | 0
        row128(be_in, be_out),                                           # 2: LN beta
        row128(params["gate_z.b"], params["gate_r.b"], params["trans.b"]),  # 3: b_z | b_r | b_t
        row128(params["fc1.b"], w_fc1[H], w_fc2[:, 0], params["fc2.b"]),    # 4: head params
        row128(jnp.ones((EH,), f32)),                                    # 5: in-half lane mask
        row128(jnp.zeros((EH,), f32), g_out),                            # 6: 0 | gamma_out
        jnp.zeros((1, 2 * EH), f32),                                     # 7: pad to 8 sublanes
    ], axis=0)

    vmem = pl.BlockSpec(memory_space=pltpu.MemorySpace.VMEM)
    out = pl.pallas_call(
        _ggnn_ln_kernel,
        out_shape=jax.ShapeDtypeStruct((BN, 1), jnp.float32),
        in_specs=[vmem] * 5,
        out_specs=vmem,
        scratch_shapes=[pltpu.VMEM((2 * E * BN, 2 * H), jnp.float32)],   # block-diag matmul RHS
    )(nd, adjb, w_all, w_a, vecs)

    return out[:, 0].reshape(B, N)   # torch's .sum(2) over the size-1 last dim -> [B, N]


# ---------------------------------------------------------------------------
# Pure-JAX literal port of the PyTorch forward (for verification).
# ---------------------------------------------------------------------------
def ggnn_ln_reference(x, a, m, params):
    Bsz = x.shape[0]

    def lin(v, W, b):
        return v @ W.T + b

    def layer_norm(v, g, b):
        mu = v.mean(-1, keepdims=True)
        var = ((v - mu) ** 2).mean(-1, keepdims=True)
        return (v - mu) / jnp.sqrt(var + LN_EPS) * g + b

    for _ in range(N_STEPS):
        in_states = layer_norm(lin(x, params["fc_in.W"], params["fc_in.b"]),
                               params["fc_in_ln.g"], params["fc_in_ln.b"])
        out_states = layer_norm(lin(x, params["fc_out.W"], params["fc_out.b"]),
                                params["fc_out_ln.g"], params["fc_out_ln.b"])
        in_states = in_states.reshape(Bsz, N, H, E).transpose(0, 3, 1, 2).reshape(Bsz, N * E, H)
        out_states = out_states.reshape(Bsz, N, H, E).transpose(0, 3, 1, 2).reshape(Bsz, N * E, H)
        m_in = m[:, :, :N * E]
        m_out = m[:, :, N * E:]
        a_in = jnp.einsum("bij,bjh->bih", m_in, in_states)
        a_out = jnp.einsum("bij,bjh->bih", m_out, out_states)
        cat = jnp.concatenate([a_in, a_out, x], axis=2)
        z = jax.nn.sigmoid(lin(cat, params["gate_z.W"], params["gate_z.b"]))
        r = jax.nn.sigmoid(lin(cat, params["gate_r.W"], params["gate_r.b"]))
        joint = jnp.concatenate([a_in, a_out, r * x], axis=2)
        h_hat = jnp.tanh(lin(joint, params["trans.W"], params["trans.b"]))
        x = (1.0 - z) * x + z * h_hat

    out = jnp.tanh(lin(jnp.concatenate([x, a], axis=2), params["fc1.W"], params["fc1.b"]))
    out = lin(out, params["fc2.W"], params["fc2.b"]).sum(2)
    return out


# ---------------------------------------------------------------------------
# Deterministic parameter init (PyTorch Linear/LayerNorm shapes).
# ---------------------------------------------------------------------------
def init_params(key):
    def linear(k, out_dim, in_dim):
        k1, k2 = jax.random.split(k)
        s = 1.0 / np.sqrt(in_dim)
        W = jax.random.uniform(k1, (out_dim, in_dim), jnp.float32, -s, s)
        b = jax.random.uniform(k2, (out_dim,), jnp.float32, -s, s)
        return W, b

    keys = jax.random.split(key, 11)
    p = {}
    p["fc_in.W"], p["fc_in.b"] = linear(keys[0], HIDDEN * N_EDGE, HIDDEN)
    p["fc_out.W"], p["fc_out.b"] = linear(keys[1], HIDDEN * N_EDGE, HIDDEN)
    p["gate_z.W"], p["gate_z.b"] = linear(keys[2], HIDDEN, 3 * HIDDEN)
    p["gate_r.W"], p["gate_r.b"] = linear(keys[3], HIDDEN, 3 * HIDDEN)
    p["trans.W"], p["trans.b"] = linear(keys[4], HIDDEN, 3 * HIDDEN)
    p["fc1.W"], p["fc1.b"] = linear(keys[5], HIDDEN, HIDDEN + ANNO)
    p["fc2.W"], p["fc2.b"] = linear(keys[6], 1, HIDDEN)
    p["fc_in_ln.g"] = 1.0 + 0.1 * jax.random.normal(keys[7], (HIDDEN * N_EDGE,), jnp.float32)
    p["fc_in_ln.b"] = 0.1 * jax.random.normal(keys[8], (HIDDEN * N_EDGE,), jnp.float32)
    p["fc_out_ln.g"] = 1.0 + 0.1 * jax.random.normal(keys[9], (HIDDEN * N_EDGE,), jnp.float32)
    p["fc_out_ln.b"] = 0.1 * jax.random.normal(keys[10], (HIDDEN * N_EDGE,), jnp.float32)
    return p


if __name__ == "__main__":
    key = jax.random.PRNGKey(0)
    kp, ka, km = jax.random.split(key, 3)
    params = init_params(kp)

    anno = jax.random.uniform(ka, (B, N_NODE, ANNO), jnp.float32)
    # init state = annotation padded with zeros up to hidden_dim
    x0 = jnp.concatenate([anno, jnp.zeros((B, N_NODE, HIDDEN - ANNO), jnp.float32)], axis=2)
    m = (jax.random.uniform(km, (B, N_NODE, 2 * N_NODE * N_EDGE)) > 0.5).astype(jnp.float32)

    out = jax.block_until_ready(ggnn_ln_forward(x0, anno, m, params))
    ref = jax.block_until_ready(ggnn_ln_reference(x0, anno, m, params))

    assert out.shape == (B, N_NODE), out.shape
    if not jnp.allclose(out, ref, rtol=5e-3, atol=5e-3):
        raise AssertionError(
            f"kernel/reference mismatch, max abs diff = {float(jnp.max(jnp.abs(out - ref)))}")
    print("KERNEL_OK")
</pallas_src>

<mosaic_0001>
module attributes {stable_mosaic.version = 11 : i64} {
  func.func @_ggnn_ln_kernel(%arg0: memref<16x64xf32, #tpu.memory_space<vmem>>, %arg1: memref<16x64xf32, #tpu.memory_space<vmem>>, %arg2: memref<32x384xf32, #tpu.memory_space<vmem>>, %arg3: memref<64x128xf32, #tpu.memory_space<vmem>>, %arg4: memref<8x128xf32, #tpu.memory_space<vmem>>, %arg5: memref<16x1xf32, #tpu.memory_space<vmem>>, %arg6: memref<64x64xf32, #tpu.memory_space<vmem>>) attributes {dimension_semantics = [], scalar_prefetch = 0 : i64, scratch_operands = 1 : i64, tpu.core_type = #tpu.core_type<tc>} {
    %cst = arith.constant 0.000000e+00 : f32
    %0 = vector.broadcast %cst : f32 to vector<64x64xf32>
    %c0 = arith.constant 0 : index
    %c0_0 = arith.constant 0 : index
    %1 = vector.load %arg6[%c0, %c0_0] : memref<64x64xf32, #tpu.memory_space<vmem>>, vector<64x64xf32>
    tpu.vector_store %arg6[%c0, %c0_0], %0 {strides = array<i32>} : memref<64x64xf32, #tpu.memory_space<vmem>>, vector<64x64xf32>,
    %c0_1 = arith.constant 0 : index
    %c0_2 = arith.constant 0 : index
    %2 = vector.load %arg0[%c0_1, %c0_2] : memref<16x64xf32, #tpu.memory_space<vmem>>, vector<16x32xf32>
    %c0_3 = arith.constant 0 : index
    %c0_4 = arith.constant 0 : index
    %3 = vector.load %arg1[%c0_3, %c0_4] : memref<16x64xf32, #tpu.memory_space<vmem>>, vector<16x64xf32>
    %c0_5 = arith.constant 0 : index
    %c0_6 = arith.constant 0 : index
    %4 = vector.load %arg3[%c0_5, %c0_6] : memref<64x128xf32, #tpu.memory_space<vmem>>, vector<64x128xf32>
    %c0_7 = arith.constant 0 : index
    %c0_8 = arith.constant 0 : index
    %5 = vector.load %arg2[%c0_7, %c0_8] : memref<32x384xf32, #tpu.memory_space<vmem>>, vector<32x256xf32>
    %c0_9 = arith.constant 0 : index
    %c256 = arith.constant 256 : index
    %6 = vector.load %arg2[%c0_9, %c256] : memref<32x384xf32, #tpu.memory_space<vmem>>, vector<32x32xf32>
    %c0_10 = arith.constant 0 : index
    %c0_11 = arith.constant 0 : index
    %7 = vector.load %arg4[%c0_10, %c0_11] : memref<8x128xf32, #tpu.memory_space<vmem>>, vector<1x128xf32>
    %8 = vector.shape_cast %7 : vector<1x128xf32> to vector<1x128xf32>
    %9 = vector.broadcast %8 : vector<1x128xf32> to vector<16x128xf32>
    %c1 = arith.constant 1 : index
    %c0_12 = arith.constant 0 : index
    %10 = vector.load %arg4[%c1, %c0_12] : memref<8x128xf32, #tpu.memory_space<vmem>>, vector<1x128xf32>
    %11 = vector.shape_cast %10 : vector<1x128xf32> to vector<1x128xf32>
    %12 = vector.broadcast %11 : vector<1x128xf32> to vector<16x128xf32>
    %c2 = arith.constant 2 : index
    %c0_13 = arith.constant 0 : index
    %13 = vector.load %arg4[%c2, %c0_13] : memref<8x128xf32, #tpu.memory_space<vmem>>, vector<1x128xf32>
    %14 = vector.shape_cast %13 : vector<1x128xf32> to vector<1x128xf32>
    %15 = vector.broadcast %14 : vector<1x128xf32> to vector<16x128xf32>
    %c3 = arith.constant 3 : index
    %c0_14 = arith.constant 0 : index
    %16 = vector.load %arg4[%c3, %c0_14] : memref<8x128xf32, #tpu.memory_space<vmem>>, vector<1x128xf32>
    %17 = vector.shape_cast %16 : vector<1x128xf32> to vector<1x128xf32>
    %18 = vector.broadcast %17 : vector<1x128xf32> to vector<16x128xf32>
    %c5 = arith.constant 5 : index
    %c0_15 = arith.constant 0 : index
    %19 = vector.load %arg4[%c5, %c0_15] : memref<8x128xf32, #tpu.memory_space<vmem>>, vector<1x128xf32>
    %20 = vector.shape_cast %19 : vector<1x128xf32> to vector<1x128xf32>
    %21 = vector.broadcast %20 : vector<1x128xf32> to vector<16x128xf32>
    %c6 = arith.constant 6 : index
    %c0_16 = arith.constant 0 : index
    %22 = vector.load %arg4[%c6, %c0_16] : memref<8x128xf32, #tpu.memory_space<vmem>>, vector<1x128xf32>
    %23 = vector.shape_cast %22 : vector<1x128xf32> to vector<1x128xf32>
    %24 = vector.broadcast %23 : vector<1x128xf32> to vector<16x128xf32>
    %cst_17 = arith.constant dense<0.000000e+00> : vector<16x256xf32>
    %25 = tpu.matmul %2, %5, %cst_17 {dimension_numbers = #tpu.dot_dimension_numbers<[1], [0], [0], [1], [0, 0, 1, 1], [], []>} : vector<16x32xf32>, vector<32x256xf32>, vector<16x256xf32> -> vector<16x256xf32>
    %26 = vector.extract_strided_slice %25 {offsets = [0, 0], sizes = [16, 128], strides = [1, 1]} : vector<16x256xf32> to vector<16x128xf32>
    %27 = arith.addf %26, %9 : vector<16x128xf32>
    %28 = vector.extract_strided_slice %25 {offsets = [0, 128], sizes = [16, 128], strides = [1, 1]} : vector<16x256xf32> to vector<16x128xf32>
    %29 = arith.addf %28, %18 : vector<16x128xf32>
    %30 = arith.mulf %27, %21 : vector<16x128xf32>
    %31 = arith.subf %27, %30 : vector<16x128xf32>
    %cst_18 = arith.constant dense<0.000000e+00> : vector<16xf32>
    %32 = vector.multi_reduction <add>, %30, %cst_18 [1] : vector<16x128xf32> to vector<16xf32>
    %33 = vector.shape_cast %32 : vector<16xf32> to vector<16x1xf32>
    %cst_19 = arith.constant 1.562500e-02 : f32
    %34 = vector.broadcast %cst_19 : f32 to vector<16x1xf32>
    %35 = arith.mulf %33, %34 : vector<16x1xf32>
    %cst_20 = arith.constant dense<0.000000e+00> : vector<16xf32>
    %36 = vector.multi_reduction <add>, %31, %cst_20 [1] : vector<16x128xf32> to vector<16xf32>
    %37 = vector.shape_cast %36 : vector<16xf32> to vector<16x1xf32>
    %cst_21 = arith.constant 1.562500e-02 : f32
    %38 = vector.broadcast %cst_21 : f32 to vector<16x1xf32>
    %39 = arith.mulf %37, %38 : vector<16x1xf32>
    %40 = arith.mulf %30, %30 : vector<16x128xf32>
    %cst_22 = arith.constant dense<0.000000e+00> : vector<16xf32>
    %41 = vector.multi_reduction <add>, %40, %cst_22 [1] : vector<16x128xf32> to vector<16xf32>
    %42 = vector.shape_cast %41 : vector<16xf32> to vector<16x1xf32>
    %cst_23 = arith.constant 1.562500e-02 : f32
    %43 = vector.broadcast %cst_23 : f32 to vector<16x1xf32>
    %44 = arith.mulf %42, %43 : vector<16x1xf32>
    %45 = arith.mulf %31, %31 : vector<16x128xf32>
    %cst_24 = arith.constant dense<0.000000e+00> : vector<16xf32>
    %46 = vector.multi_reduction <add>, %45, %cst_24 [1] : vector<16x128xf32> to vector<16xf32>
    %47 = vector.shape_cast %46 : vector<16xf32> to vector<16x1xf32>
    %cst_25 = arith.constant 1.562500e-02 : f32
    %48 = vector.broadcast %cst_25 : f32 to vector<16x1xf32>
    %49 = arith.mulf %47, %48 : vector<16x1xf32>
    %50 = arith.mulf %35, %35 : vector<16x1xf32>
    %51 = arith.subf %44, %50 : vector<16x1xf32>
    %cst_26 = arith.constant 9.99999974E-6 : f32
    %52 = vector.broadcast %cst_26 : f32 to vector<16x1xf32>
    %53 = arith.addf %51, %52 : vector<16x1xf32>
    %54 = math.rsqrt %53 : vector<16x1xf32>
    %55 = arith.mulf %39, %39 : vector<16x1xf32>
    %56 = arith.subf %49, %55 : vector<16x1xf32>
    %cst_27 = arith.constant 9.99999974E-6 : f32
    %57 = vector.broadcast %cst_27 : f32 to vector<16x1xf32>
    %58 = arith.addf %56, %57 : vector<16x1xf32>
    %59 = math.rsqrt %58 : vector<16x1xf32>
    %60 = arith.subf %35, %39 : vector<16x1xf32>
    %61 = vector.broadcast %60 : vector<16x1xf32> to vector<16x128xf32>
    %62 = arith.mulf %61, %21 : vector<16x128xf32>
    %63 = vector.broadcast %39 : vector<16x1xf32> to vector<16x128xf32>
    %64 = arith.addf %63, %62 : vector<16x128xf32>
    %65 = vector.broadcast %54 : vector<16x1xf32> to vector<16x128xf32>
    %66 = arith.mulf %65, %12 : vector<16x128xf32>
    %67 = vector.broadcast %59 : vector<16x1xf32> to vector<16x128xf32>
    %68 = arith.mulf %67, %24 : vector<16x128xf32>
    %69 = arith.addf %66, %68 : vector<16x128xf32>
    %70 = arith.subf %27, %64 : vector<16x128xf32>
    %71 = arith.mulf %70, %69 : vector<16x128xf32>
    %72 = arith.addf %71, %15 : vector<16x128xf32>
    %73 = vector.extract_strided_slice %72 {offsets = [0, 0], sizes = [16, 32], strides = [1, 1]} : vector<16x128xf32> to vector<16x32xf32>
    %c0_28 = arith.constant 0 : index
    %c0_29 = arith.constant 0 : index
    %74 = vector.load %arg6[%c0_28, %c0_29] : memref<64x64xf32, #tpu.memory_space<vmem>>, vector<16x32xf32>
    tpu.vector_store %arg6[%c0_28, %c0_29], %73 {strides = array<i32>} : memref<64x64xf32, #tpu.memory_space<vmem>>, vector<16x32xf32>,
    %75 = vector.extract_strided_slice %72 {offsets = [0, 32], sizes = [16, 32], strides = [1, 1]} : vector<16x128xf32> to vector<16x32xf32>
    %c16 = arith.constant 16 : index
    %c0_30 = arith.constant 0 : index
    %76 = vector.load %arg6[%c16, %c0_30] : memref<64x64xf32, #tpu.memory_space<vmem>>, vector<16x32xf32>
    tpu.vector_store %arg6[%c16, %c0_30], %75 {strides = array<i32>} : memref<64x64xf32, #tpu.memory_space<vmem>>, vector<16x32xf32>,
    %77 = vector.extract_strided_slice %72 {offsets = [0, 64], sizes = [16, 32], strides = [1, 1]} : vector<16x128xf32> to vector<16x32xf32>
    %c32 = arith.constant 32 : index
    %c32_31 = arith.constant 32 : index
    %78 = vector.load %arg6[%c32, %c32_31] : memref<64x64xf32, #tpu.memory_space<vmem>>, vector<16x32xf32>
    tpu.vector_store %arg6[%c32, %c32_31], %77 {strides = array<i32>} : memref<64x64xf32, #tpu.memory_space<vmem>>, vector<16x32xf32>,
    %79 = vector.extract_strided_slice %72 {offsets = [0, 96], sizes = [16, 32], strides = [1, 1]} : vector<16x128xf32> to vector<16x32xf32>
    %c48 = arith.constant 48 : index
    %c32_32 = arith.constant 32 : index
    %80 = vector.load %arg6[%c48, %c32_32] : memref<64x64xf32, #tpu.memory_space<vmem>>, vector<16x32xf32>
    tpu.vector_store %arg6[%c48, %c32_32], %79 {strides = array<i32>} : memref<64x64xf32, #tpu.memory_space<vmem>>, vector<16x32xf32>,
    %c0_33 = arith.constant 0 : index
    %c0_34 = arith.constant 0 : index
    %81 = vector.load %arg6[%c0_33, %c0_34] : memref<64x64xf32, #tpu.memory_space<vmem>>, vector<64x64xf32>
    %cst_35 = arith.constant dense<0.000000e+00> : vector<16x64xf32>
    %82 = tpu.matmul %3, %81, %cst_35 {dimension_numbers = #tpu.dot_dimension_numbers<[1], [0], [0], [1], [0, 0, 1, 1], [], []>} : vector<16x64xf32>, vector<64x64xf32>, vector<16x64xf32> -> vector<16x64xf32>
    %cst_36 = arith.constant dense<0.000000e+00> : vector<16x128xf32>
    %83 = tpu.matmul %82, %4, %cst_36 {dimension_numbers = #tpu.dot_dimension_numbers<[1], [0], [0], [1], [0, 0, 1, 1], [], []>} : vector<16x64xf32>, vector<64x128xf32>, vector<16x128xf32> -> vector<16x128xf32>
    %84 = arith.addf %83, %29 : vector<16x128xf32>
    %85 = vector.extract_strided_slice %84 {offsets = [0, 0], sizes = [16, 32], strides = [1, 1]} : vector<16x128xf32> to vector<16x32xf32>
    %86 = arith.negf %85 : vector<16x32xf32>
    %87 = math.exp %86 : vector<16x32xf32>
    %cst_37 = arith.constant 1.000000e+00 : f32
    %88 = vector.broadcast %cst_37 : f32 to vector<16x32xf32>
    %89 = arith.addf %88, %87 : vector<16x32xf32>
    %90 = arith.divf %88, %89 : vector<16x32xf32>
    %91 = vector.extract_strided_slice %84 {offsets = [0, 32], sizes = [16, 32], strides = [1, 1]} : vector<16x128xf32> to vector<16x32xf32>
    %92 = arith.negf %91 : vector<16x32xf32>
    %93 = math.exp %92 : vector<16x32xf32>
    %cst_38 = arith.constant 1.000000e+00 : f32
    %94 = vector.broadcast %cst_38 : f32 to vector<16x32xf32>
    %95 = arith.addf %94, %93 : vector<16x32xf32>
    %96 = arith.divf %94, %95 : vector<16x32xf32>
    %97 = vector.extract_strided_slice %84 {offsets = [0, 64], sizes = [16, 32], strides = [1, 1]} : vector<16x128xf32> to vector<16x32xf32>
    %98 = arith.mulf %96, %2 : vector<16x32xf32>
    %cst_39 = arith.constant dense<0.000000e+00> : vector<16x32xf32>
    %99 = tpu.matmul %98, %6, %cst_39 {dimension_numbers = #tpu.dot_dimension_numbers<[1], [0], [0], [1], [0, 0, 1, 1], [], []>} : vector<16x32xf32>, vector<32x32xf32>, vector<16x32xf32> -> vector<16x32xf32>
    %100 = arith.addf %97, %99 : vector<16x32xf32>
    %101 = math.tanh %100 : vector<16x32xf32>
    %102 = arith.subf %101, %2 : vector<16x32xf32>
    %103 = arith.mulf %90, %102 : vector<16x32xf32>
    %104 = arith.addf %2, %103 : vector<16x32xf32>
    %cst_40 = arith.constant dense<0.000000e+00> : vector<16x256xf32>
    %105 = tpu.matmul %104, %5, %cst_40 {dimension_numbers = #tpu.dot_dimension_numbers<[1], [0], [0], [1], [0, 0, 1, 1], [], []>} : vector<16x32xf32>, vector<32x256xf32>, vector<16x256xf32> -> vector<16x256xf32>
    %106 = vector.extract_strided_slice %105 {offsets = [0, 0], sizes = [16, 128], strides = [1, 1]} : vector<16x256xf32> to vector<16x128xf32>
    %107 = arith.addf %106, %9 : vector<16x128xf32>
    %108 = vector.extract_strided_slice %105 {offsets = [0, 128], sizes = [16, 128], strides = [1, 1]} : vector<16x256xf32> to vector<16x128xf32>
    %109 = arith.addf %108, %18 : vector<16x128xf32>
    %110 = arith.mulf %107, %21 : vector<16x128xf32>
    %111 = arith.subf %107, %110 : vector<16x128xf32>
    %cst_41 = arith.constant dense<0.000000e+00> : vector<16xf32>
    %112 = vector.multi_reduction <add>, %110, %cst_41 [1] : vector<16x128xf32> to vector<16xf32>
    %113 = vector.shape_cast %112 : vector<16xf32> to vector<16x1xf32>
    %cst_42 = arith.constant 1.562500e-02 : f32
    %114 = vector.broadcast %cst_42 : f32 to vector<16x1xf32>
    %115 = arith.mulf %113, %114 : vector<16x1xf32>
    %cst_43 = arith.constant dense<0.000000e+00> : vector<16xf32>
    %116 = vector.multi_reduction <add>, %111, %cst_43 [1] : vector<16x128xf32> to vector<16xf32>
    %117 = vector.shape_cast %116 : vector<16xf32> to vector<16x1xf32>
    %cst_44 = arith.constant 1.562500e-02 : f32
    %118 = vector.broadcast %cst_44 : f32 to vector<16x1xf32>
    %119 = arith.mulf %117, %118 : vector<16x1xf32>
    %120 = arith.mulf %110, %110 : vector<16x128xf32>
    %cst_45 = arith.constant dense<0.000000e+00> : vector<16xf32>
    %121 = vector.multi_reduction <add>, %120, %cst_45 [1] : vector<16x128xf32> to vector<16xf32>
    %122 = vector.shape_cast %121 : vector<16xf32> to vector<16x1xf32>
    %cst_46 = arith.constant 1.562500e-02 : f32
    %123 = vector.broadcast %cst_46 : f32 to vector<16x1xf32>
    %124 = arith.mulf %122, %123 : vector<16x1xf32>
    %125 = arith.mulf %111, %111 : vector<16x128xf32>
    %cst_47 = arith.constant dense<0.000000e+00> : vector<16xf32>
    %126 = vector.multi_reduction <add>, %125, %cst_47 [1] : vector<16x128xf32> to vector<16xf32>
    %127 = vector.shape_cast %126 : vector<16xf32> to vector<16x1xf32>
    %cst_48 = arith.constant 1.562500e-02 : f32
    %128 = vector.broadcast %cst_48 : f32 to vector<16x1xf32>
    %129 = arith.mulf %127, %128 : vector<16x1xf32>
    %130 = arith.mulf %115, %115 : vector<16x1xf32>
    %131 = arith.subf %124, %130 : vector<16x1xf32>
    %cst_49 = arith.constant 9.99999974E-6 : f32
    %132 = vector.broadcast %cst_49 : f32 to vector<16x1xf32>
    %133 = arith.addf %131, %132 : vector<16x1xf32>
    %134 = math.rsqrt %133 : vector<16x1xf32>
    %135 = arith.mulf %119, %119 : vector<16x1xf32>
    %136 = arith.subf %129, %135 : vector<16x1xf32>
    %cst_50 = arith.constant 9.99999974E-6 : f32
    %137 = vector.broadcast %cst_50 : f32 to vector<16x1xf32>
    %138 = arith.addf %136, %137 : vector<16x1xf32>
    %139 = math.rsqrt %138 : vector<16x1xf32>
    %140 = arith.subf %115, %119 : vector<16x1xf32>
    %141 = vector.broadcast %140 : vector<16x1xf32> to vector<16x128xf32>
    %142 = arith.mulf %141, %21 : vector<16x128xf32>
    %143 = vector.broadcast %119 : vector<16x1xf32> to vector<16x128xf32>
    %144 = arith.addf %143, %142 : vector<16x128xf32>
    %145 = vector.broadcast %134 : vector<16x1xf32> to vector<16x128xf32>
    %146 = arith.mulf %145, %12 : vector<16x128xf32>
    %147 = vector.broadcast %139 : vector<16x1xf32> to vector<16x128xf32>
    %148 = arith.mulf %147, %24 : vector<16x128xf32>
    %149 = arith.addf %146, %148 : vector<16x128xf32>
    %150 = arith.subf %107, %144 : vector<16x128xf32>
    %151 = arith.mulf %150, %149 : vector<16x128xf32>
    %152 = arith.addf %151, %15 : vector<16x128xf32>
    %153 = vector.extract_strided_slice %152 {offsets = [0, 0], sizes = [16, 32], strides = [1, 1]} : vector<16x128xf32> to vector<16x32xf32>
    %c0_51 = arith.constant 0 : index
    %c0_52 = arith.constant 0 : index
    %154 = vector.load %arg6[%c0_51, %c0_52] : memref<64x64xf32, #tpu.memory_space<vmem>>, vector<16x32xf32>
    tpu.vector_store %arg6[%c0_51, %c0_52], %153 {strides = array<i32>} : memref<64x64xf32, #tpu.memory_space<vmem>>, vector<16x32xf32>,
    %155 = vector.extract_strided_slice %152 {offsets = [0, 32], sizes = [16, 32], strides = [1, 1]} : vector<16x128xf32> to vector<16x32xf32>
    %c16_53 = arith.constant 16 : index
    %c0_54 = arith.constant 0 : index
    %156 = vector.load %arg6[%c16_53, %c0_54] : memref<64x64xf32, #tpu.memory_space<vmem>>, vector<16x32xf32>
    tpu.vector_store %arg6[%c16_53, %c0_54], %155 {strides = array<i32>} : memref<64x64xf32, #tpu.memory_space<vmem>>, vector<16x32xf32>,
    %157 = vector.extract_strided_slice %152 {offsets = [0, 64], sizes = [16, 32], strides = [1, 1]} : vector<16x128xf32> to vector<16x32xf32>
    %c32_55 = arith.constant 32 : index
    %c32_56 = arith.constant 32 : index
    %158 = vector.load %arg6[%c32_55, %c32_56] : memref<64x64xf32, #tpu.memory_space<vmem>>, vector<16x32xf32>
    tpu.vector_store %arg6[%c32_55, %c32_56], %157 {strides = array<i32>} : memref<64x64xf32, #tpu.memory_space<vmem>>, vector<16x32xf32>,
    %159 = vector.extract_strided_slice %152 {offsets = [0, 96], sizes = [16, 32], strides = [1, 1]} : vector<16x128xf32> to vector<16x32xf32>
    %c48_57 = arith.constant 48 : index
    %c32_58 = arith.constant 32 : index
    %160 = vector.load %arg6[%c48_57, %c32_58] : memref<64x64xf32, #tpu.memory_space<vmem>>, vector<16x32xf32>
    tpu.vector_store %arg6[%c48_57, %c32_58], %159 {strides = array<i32>} : memref<64x64xf32, #tpu.memory_space<vmem>>, vector<16x32xf32>,
    %c0_59 = arith.constant 0 : index
    %c0_60 = arith.constant 0 : index
    %161 = vector.load %arg6[%c0_59, %c0_60] : memref<64x64xf32, #tpu.memory_space<vmem>>, vector<64x64xf32>
    %cst_61 = arith.constant dense<0.000000e+00> : vector<16x64xf32>
    %162 = tpu.matmul %3, %161, %cst_61 {dimension_numbers = #tpu.dot_dimension_numbers<[1], [0], [0], [1], [0, 0, 1, 1], [], []>} : vector<16x64xf32>, vector<64x64xf32>, vector<16x64xf32> -> vector<16x64xf32>
    %cst_62 = arith.constant dense<0.000000e+00> : vector<16x128xf32>
    %163 = tpu.matmul %162, %4, %cst_62 {dimension_numbers = #tpu.dot_dimension_numbers<[1], [0], [0], [1], [0, 0, 1, 1], [], []>} : vector<16x64xf32>, vector<64x128xf32>, vector<16x128xf32> -> vector<16x128xf32>
    %164 = arith.addf %163, %109 : vector<16x128xf32>
    %165 = vector.extract_strided_slice %164 {offsets = [0, 0], sizes = [16, 32], strides = [1, 1]} : vector<16x128xf32> to vector<16x32xf32>
    %166 = arith.negf %165 : vector<16x32xf32>
    %167 = math.exp %166 : vector<16x32xf32>
    %cst_63 = arith.constant 1.000000e+00 : f32
    %168 = vector.broadcast %cst_63 : f32 to vector<16x32xf32>
    %169 = arith.addf %168, %167 : vector<16x32xf32>
    %170 = arith.divf %168, %169 : vector<16x32xf32>
    %171 = vector.extract_strided_slice %164 {offsets = [0, 32], sizes = [16, 32], strides = [1, 1]} : vector<16x128xf32> to vector<16x32xf32>
    %172 = arith.negf %171 : vector<16x32xf32>
    %173 = math.exp %172 : vector<16x32xf32>
    %cst_64 = arith.constant 1.000000e+00 : f32
    %174 = vector.broadcast %cst_64 : f32 to vector<16x32xf32>
    %175 = arith.addf %174, %173 : vector<16x32xf32>
    %176 = arith.divf %174, %175 : vector<16x32xf32>
    %177 = vector.extract_strided_slice %164 {offsets = [0, 64], sizes = [16, 32], strides = [1, 1]} : vector<16x128xf32> to vector<16x32xf32>
    %178 = arith.mulf %176, %104 : vector<16x32xf32>
    %cst_65 = arith.constant dense<0.000000e+00> : vector<16x32xf32>
    %179 = tpu.matmul %178, %6, %cst_65 {dimension_numbers = #tpu.dot_dimension_numbers<[1], [0], [0], [1], [0, 0, 1, 1], [], []>} : vector<16x32xf32>, vector<32x32xf32>, vector<16x32xf32> -> vector<16x32xf32>
    %180 = arith.addf %177, %179 : vector<16x32xf32>
    %181 = math.tanh %180 : vector<16x32xf32>
    %182 = arith.subf %181, %104 : vector<16x32xf32>
    %183 = arith.mulf %170, %182 : vector<16x32xf32>
    %184 = arith.addf %104, %183 : vector<16x32xf32>
    %cst_66 = arith.constant dense<0.000000e+00> : vector<16x256xf32>
    %185 = tpu.matmul %184, %5, %cst_66 {dimension_numbers = #tpu.dot_dimension_numbers<[1], [0], [0], [1], [0, 0, 1, 1], [], []>} : vector<16x32xf32>, vector<32x256xf32>, vector<16x256xf32> -> vector<16x256xf32>
    %186 = vector.extract_strided_slice %185 {offsets = [0, 0], sizes = [16, 128], strides = [1, 1]} : vector<16x256xf32> to vector<16x128xf32>
    %187 = arith.addf %186, %9 : vector<16x128xf32>
    %188 = vector.extract_strided_slice %185 {offsets = [0, 128], sizes = [16, 128], strides = [1, 1]} : vector<16x256xf32> to vector<16x128xf32>
    %189 = arith.addf %188, %18 : vector<16x128xf32>
    %190 = arith.mulf %187, %21 : vector<16x128xf32>
    %191 = arith.subf %187, %190 : vector<16x128xf32>
    %cst_67 = arith.constant dense<0.000000e+00> : vector<16xf32>
    %192 = vector.multi_reduction <add>, %190, %cst_67 [1] : vector<16x128xf32> to vector<16xf32>
    %193 = vector.shape_cast %192 : vector<16xf32> to vector<16x1xf32>
    %cst_68 = arith.constant 1.562500e-02 : f32
    %194 = vector.broadcast %cst_68 : f32 to vector<16x1xf32>
    %195 = arith.mulf %193, %194 : vector<16x1xf32>
    %cst_69 = arith.constant dense<0.000000e+00> : vector<16xf32>
    %196 = vector.multi_reduction <add>, %191, %cst_69 [1] : vector<16x128xf32> to vector<16xf32>
    %197 = vector.shape_cast %196 : vector<16xf32> to vector<16x1xf32>
    %cst_70 = arith.constant 1.562500e-02 : f32
    %198 = vector.broadcast %cst_70 : f32 to vector<16x1xf32>
    %199 = arith.mulf %197, %198 : vector<16x1xf32>
    %200 = arith.mulf %190, %190 : vector<16x128xf32>
    %cst_71 = arith.constant dense<0.000000e+00> : vector<16xf32>
    %201 = vector.multi_reduction <add>, %200, %cst_71 [1] : vector<16x128xf32> to vector<16xf32>
    %202 = vector.shape_cast %201 : vector<16xf32> to vector<16x1xf32>
    %cst_72 = arith.constant 1.562500e-02 : f32
    %203 = vector.broadcast %cst_72 : f32 to vector<16x1xf32>
    %204 = arith.mulf %202, %203 : vector<16x1xf32>
    %205 = arith.mulf %191, %191 : vector<16x128xf32>
    %cst_73 = arith.constant dense<0.000000e+00> : vector<16xf32>
    %206 = vector.multi_reduction <add>, %205, %cst_73 [1] : vector<16x128xf32> to vector<16xf32>
    %207 = vector.shape_cast %206 : vector<16xf32> to vector<16x1xf32>
    %cst_74 = arith.constant 1.562500e-02 : f32
    %208 = vector.broadcast %cst_74 : f32 to vector<16x1xf32>
    %209 = arith.mulf %207, %208 : vector<16x1xf32>
    %210 = arith.mulf %195, %195 : vector<16x1xf32>
    %211 = arith.subf %204, %210 : vector<16x1xf32>
    %cst_75 = arith.constant 9.99999974E-6 : f32
    %212 = vector.broadcast %cst_75 : f32 to vector<16x1xf32>
    %213 = arith.addf %211, %212 : vector<16x1xf32>
    %214 = math.rsqrt %213 : vector<16x1xf32>
    %215 = arith.mulf %199, %199 : vector<16x1xf32>
    %216 = arith.subf %209, %215 : vector<16x1xf32>
    %cst_76 = arith.constant 9.99999974E-6 : f32
    %217 = vector.broadcast %cst_76 : f32 to vector<16x1xf32>
    %218 = arith.addf %216, %217 : vector<16x1xf32>
    %219 = math.rsqrt %218 : vector<16x1xf32>
    %220 = arith.subf %195, %199 : vector<16x1xf32>
    %221 = vector.broadcast %220 : vector<16x1xf32> to vector<16x128xf32>
    %222 = arith.mulf %221, %21 : vector<16x128xf32>
    %223 = vector.broadcast %199 : vector<16x1xf32> to vector<16x128xf32>
    %224 = arith.addf %223, %222 : vector<16x128xf32>
    %225 = vector.broadcast %214 : vector<16x1xf32> to vector<16x128xf32>
    %226 = arith.mulf %225, %12 : vector<16x128xf32>
    %227 = vector.broadcast %219 : vector<16x1xf32> to vector<16x128xf32>
    %228 = arith.mulf %227, %24 : vector<16x128xf32>
    %229 = arith.addf %226, %228 : vector<16x128xf32>
    %230 = arith.subf %187, %224 : vector<16x128xf32>
    %231 = arith.mulf %230, %229 : vector<16x128xf32>
    %232 = arith.addf %231, %15 : vector<16x128xf32>
    %233 = vector.extract_strided_slice %232 {offsets = [0, 0], sizes = [16, 32], strides = [1, 1]} : vector<16x128xf32> to vector<16x32xf32>
    %c0_77 = arith.constant 0 : index
    %c0_78 = arith.constant 0 : index
    %234 = vector.load %arg6[%c0_77, %c0_78] : memref<64x64xf32, #tpu.memory_space<vmem>>, vector<16x32xf32>
    tpu.vector_store %arg6[%c0_77, %c0_78], %233 {strides = array<i32>} : memref<64x64xf32, #tpu.memory_space<vmem>>, vector<16x32xf32>,
    %235 = vector.extract_strided_slice %232 {offsets = [0, 32], sizes = [16, 32], strides = [1, 1]} : vector<16x128xf32> to vector<16x32xf32>
    %c16_79 = arith.constant 16 : index
    %c0_80 = arith.constant 0 : index
    %236 = vector.load %arg6[%c16_79, %c0_80] : memref<64x64xf32, #tpu.memory_space<vmem>>, vector<16x32xf32>
    tpu.vector_store %arg6[%c16_79, %c0_80], %235 {strides = array<i32>} : memref<64x64xf32, #tpu.memory_space<vmem>>, vector<16x32xf32>,
    %237 = vector.extract_strided_slice %232 {offsets = [0, 64], sizes = [16, 32], strides = [1, 1]} : vector<16x128xf32> to vector<16x32xf32>
    %c32_81 = arith.constant 32 : index
    %c32_82 = arith.constant 32 : index
    %238 = vector.load %arg6[%c32_81, %c32_82] : memref<64x64xf32, #tpu.memory_space<vmem>>, vector<16x32xf32>
    tpu.vector_store %arg6[%c32_81, %c32_82], %237 {strides = array<i32>} : memref<64x64xf32, #tpu.memory_space<vmem>>, vector<16x32xf32>,
    %239 = vector.extract_strided_slice %232 {offsets = [0, 96], sizes = [16, 32], strides = [1, 1]} : vector<16x128xf32> to vector<16x32xf32>
    %c48_83 = arith.constant 48 : index
    %c32_84 = arith.constant 32 : index
    %240 = vector.load %arg6[%c48_83, %c32_84] : memref<64x64xf32, #tpu.memory_space<vmem>>, vector<16x32xf32>
    tpu.vector_store %arg6[%c48_83, %c32_84], %239 {strides = array<i32>} : memref<64x64xf32, #tpu.memory_space<vmem>>, vector<16x32xf32>,
    %c0_85 = arith.constant 0 : index
    %c0_86 = arith.constant 0 : index
    %241 = vector.load %arg6[%c0_85, %c0_86] : memref<64x64xf32, #tpu.memory_space<vmem>>, vector<64x64xf32>
    %cst_87 = arith.constant dense<0.000000e+00> : vector<16x64xf32>
    %242 = tpu.matmul %3, %241, %cst_87 {dimension_numbers = #tpu.dot_dimension_numbers<[1], [0], [0], [1], [0, 0, 1, 1], [], []>} : vector<16x64xf32>, vector<64x64xf32>, vector<16x64xf32> -> vector<16x64xf32>
    %cst_88 = arith.constant dense<0.000000e+00> : vector<16x128xf32>
    %243 = tpu.matmul %242, %4, %cst_88 {dimension_numbers = #tpu.dot_dimension_numbers<[1], [0], [0], [1], [0, 0, 1, 1], [], []>} : vector<16x64xf32>, vector<64x128xf32>, vector<16x128xf32> -> vector<16x128xf32>
    %244 = arith.addf %243, %189 : vector<16x128xf32>
    %245 = vector.extract_strided_slice %244 {offsets = [0, 0], sizes = [16, 32], strides = [1, 1]} : vector<16x128xf32> to vector<16x32xf32>
    %246 = arith.negf %245 : vector<16x32xf32>
    %247 = math.exp %246 : vector<16x32xf32>
    %cst_89 = arith.constant 1.000000e+00 : f32
    %248 = vector.broadcast %cst_89 : f32 to vector<16x32xf32>
    %249 = arith.addf %248, %247 : vector<16x32xf32>
    %250 = arith.divf %248, %249 : vector<16x32xf32>
    %251 = vector.extract_strided_slice %244 {offsets = [0, 32], sizes = [16, 32], strides = [1, 1]} : vector<16x128xf32> to vector<16x32xf32>
    %252 = arith.negf %251 : vector<16x32xf32>
    %253 = math.exp %252 : vector<16x32xf32>
    %cst_90 = arith.constant 1.000000e+00 : f32
    %254 = vector.broadcast %cst_90 : f32 to vector<16x32xf32>
    %255 = arith.addf %254, %253 : vector<16x32xf32>
    %256 = arith.divf %254, %255 : vector<16x32xf32>
    %257 = vector.extract_strided_slice %244 {offsets = [0, 64], sizes = [16, 32], strides = [1, 1]} : vector<16x128xf32> to vector<16x32xf32>
    %258 = arith.mulf %256, %184 : vector<16x32xf32>
    %cst_91 = arith.constant dense<0.000000e+00> : vector<16x32xf32>
    %259 = tpu.matmul %258, %6, %cst_91 {dimension_numbers = #tpu.dot_dimension_numbers<[1], [0], [0], [1], [0, 0, 1, 1], [], []>} : vector<16x32xf32>, vector<32x32xf32>, vector<16x32xf32> -> vector<16x32xf32>
    %260 = arith.addf %257, %259 : vector<16x32xf32>
    %261 = math.tanh %260 : vector<16x32xf32>
    %262 = arith.subf %261, %184 : vector<16x32xf32>
    %263 = arith.mulf %250, %262 : vector<16x32xf32>
    %264 = arith.addf %184, %263 : vector<16x32xf32>
    %cst_92 = arith.constant dense<0.000000e+00> : vector<16x256xf32>
    %265 = tpu.matmul %264, %5, %cst_92 {dimension_numbers = #tpu.dot_dimension_numbers<[1], [0], [0], [1], [0, 0, 1, 1], [], []>} : vector<16x32xf32>, vector<32x256xf32>, vector<16x256xf32> -> vector<16x256xf32>
    %266 = vector.extract_strided_slice %265 {offsets = [0, 0], sizes = [16, 128], strides = [1, 1]} : vector<16x256xf32> to vector<16x128xf32>
    %267 = arith.addf %266, %9 : vector<16x128xf32>
    %268 = vector.extract_strided_slice %265 {offsets = [0, 128], sizes = [16, 128], strides = [1, 1]} : vector<16x256xf32> to vector<16x128xf32>
    %269 = arith.addf %268, %18 : vector<16x128xf32>
    %270 = arith.mulf %267, %21 : vector<16x128xf32>
    %271 = arith.subf %267, %270 : vector<16x128xf32>
    %cst_93 = arith.constant dense<0.000000e+00> : vector<16xf32>
    %272 = vector.multi_reduction <add>, %270, %cst_93 [1] : vector<16x128xf32> to vector<16xf32>
    %273 = vector.shape_cast %272 : vector<16xf32> to vector<16x1xf32>
    %cst_94 = arith.constant 1.562500e-02 : f32
    %274 = vector.broadcast %cst_94 : f32 to vector<16x1xf32>
    %275 = arith.mulf %273, %274 : vector<16x1xf32>
    %cst_95 = arith.constant dense<0.000000e+00> : vector<16xf32>
    %276 = vector.multi_reduction <add>, %271, %cst_95 [1] : vector<16x128xf32> to vector<16xf32>
    %277 = vector.shape_cast %276 : vector<16xf32> to vector<16x1xf32>
    %cst_96 = arith.constant 1.562500e-02 : f32
    %278 = vector.broadcast %cst_96 : f32 to vector<16x1xf32>
    %279 = arith.mulf %277, %278 : vector<16x1xf32>
    %280 = arith.mulf %270, %270 : vector<16x128xf32>
    %cst_97 = arith.constant dense<0.000000e+00> : vector<16xf32>
    %281 = vector.multi_reduction <add>, %280, %cst_97 [1] : vector<16x128xf32> to vector<16xf32>
    %282 = vector.shape_cast %281 : vector<16xf32> to vector<16x1xf32>
    %cst_98 = arith.constant 1.562500e-02 : f32
    %283 = vector.broadcast %cst_98 : f32 to vector<16x1xf32>
    %284 = arith.mulf %282, %283 : vector<16x1xf32>
    %285 = arith.mulf %271, %271 : vector<16x128xf32>
    %cst_99 = arith.constant dense<0.000000e+00> : vector<16xf32>
    %286 = vector.multi_reduction <add>, %285, %cst_99 [1] : vector<16x128xf32> to vector<16xf32>
    %287 = vector.shape_cast %286 : vector<16xf32> to vector<16x1xf32>
    %cst_100 = arith.constant 1.562500e-02 : f32
    %288 = vector.broadcast %cst_100 : f32 to vector<16x1xf32>
    %289 = arith.mulf %287, %288 : vector<16x1xf32>
    %290 = arith.mulf %275, %275 : vector<16x1xf32>
    %291 = arith.subf %284, %290 : vector<16x1xf32>
    %cst_101 = arith.constant 9.99999974E-6 : f32
    %292 = vector.broadcast %cst_101 : f32 to vector<16x1xf32>
    %293 = arith.addf %291, %292 : vector<16x1xf32>
    %294 = math.rsqrt %293 : vector<16x1xf32>
    %295 = arith.mulf %279, %279 : vector<16x1xf32>
    %296 = arith.subf %289, %295 : vector<16x1xf32>
    %cst_102 = arith.constant 9.99999974E-6 : f32
    %297 = vector.broadcast %cst_102 : f32 to vector<16x1xf32>
    %298 = arith.addf %296, %297 : vector<16x1xf32>
    %299 = math.rsqrt %298 : vector<16x1xf32>
    %300 = arith.subf %275, %279 : vector<16x1xf32>
    %301 = vector.broadcast %300 : vector<16x1xf32> to vector<16x128xf32>
    %302 = arith.mulf %301, %21 : vector<16x128xf32>
    %303 = vector.broadcast %279 : vector<16x1xf32> to vector<16x128xf32>
    %304 = arith.addf %303, %302 : vector<16x128xf32>
    %305 = vector.broadcast %294 : vector<16x1xf32> to vector<16x128xf32>
    %306 = arith.mulf %305, %12 : vector<16x128xf32>
    %307 = vector.broadcast %299 : vector<16x1xf32> to vector<16x128xf32>
    %308 = arith.mulf %307, %24 : vector<16x128xf32>
    %309 = arith.addf %306, %308 : vector<16x128xf32>
    %310 = arith.subf %267, %304 : vector<16x128xf32>
    %311 = arith.mulf %310, %309 : vector<16x128xf32>
    %312 = arith.addf %311, %15 : vector<16x128xf32>
    %313 = vector.extract_strided_slice %312 {offsets = [0, 0], sizes = [16, 32], strides = [1, 1]} : vector<16x128xf32> to vector<16x32xf32>
    %c0_103 = arith.constant 0 : index
    %c0_104 = arith.constant 0 : index
    %314 = vector.load %arg6[%c0_103, %c0_104] : memref<64x64xf32, #tpu.memory_space<vmem>>, vector<16x32xf32>
    tpu.vector_store %arg6[%c0_103, %c0_104], %313 {strides = array<i32>} : memref<64x64xf32, #tpu.memory_space<vmem>>, vector<16x32xf32>,
    %315 = vector.extract_strided_slice %312 {offsets = [0, 32], sizes = [16, 32], strides = [1, 1]} : vector<16x128xf32> to vector<16x32xf32>
    %c16_105 = arith.constant 16 : index
    %c0_106 = arith.constant 0 : index
    %316 = vector.load %arg6[%c16_105, %c0_106] : memref<64x64xf32, #tpu.memory_space<vmem>>, vector<16x32xf32>
    tpu.vector_store %arg6[%c16_105, %c0_106], %315 {strides = array<i32>} : memref<64x64xf32, #tpu.memory_space<vmem>>, vector<16x32xf32>,
    %317 = vector.extract_strided_slice %312 {offsets = [0, 64], sizes = [16, 32], strides = [1, 1]} : vector<16x128xf32> to vector<16x32xf32>
    %c32_107 = arith.constant 32 : index
    %c32_108 = arith.constant 32 : index
    %318 = vector.load %arg6[%c32_107, %c32_108] : memref<64x64xf32, #tpu.memory_space<vmem>>, vector<16x32xf32>
    tpu.vector_store %arg6[%c32_107, %c32_108], %317 {strides = array<i32>} : memref<64x64xf32, #tpu.memory_space<vmem>>, vector<16x32xf32>,
    %319 = vector.extract_strided_slice %312 {offsets = [0, 96], sizes = [16, 32], strides = [1, 1]} : vector<16x128xf32> to vector<16x32xf32>
    %c48_109 = arith.constant 48 : index
    %c32_110 = arith.constant 32 : index
    %320 = vector.load %arg6[%c48_109, %c32_110] : memref<64x64xf32, #tpu.memory_space<vmem>>, vector<16x32xf32>
    tpu.vector_store %arg6[%c48_109, %c32_110], %319 {strides = array<i32>} : memref<64x64xf32, #tpu.memory_space<vmem>>, vector<16x32xf32>,
    %c0_111 = arith.constant 0 : index
    %c0_112 = arith.constant 0 : index
    %321 = vector.load %arg6[%c0_111, %c0_112] : memref<64x64xf32, #tpu.memory_space<vmem>>, vector<64x64xf32>
    %cst_113 = arith.constant dense<0.000000e+00> : vector<16x64xf32>
    %322 = tpu.matmul %3, %321, %cst_113 {dimension_numbers = #tpu.dot_dimension_numbers<[1], [0], [0], [1], [0, 0, 1, 1], [], []>} : vector<16x64xf32>, vector<64x64xf32>, vector<16x64xf32> -> vector<16x64xf32>
    %cst_114 = arith.constant dense<0.000000e+00> : vector<16x128xf32>
    %323 = tpu.matmul %322, %4, %cst_114 {dimension_numbers = #tpu.dot_dimension_numbers<[1], [0], [0], [1], [0, 0, 1, 1], [], []>} : vector<16x64xf32>, vector<64x128xf32>, vector<16x128xf32> -> vector<16x128xf32>
    %324 = arith.addf %323, %269 : vector<16x128xf32>
    %325 = vector.extract_strided_slice %324 {offsets = [0, 0], sizes = [16, 32], strides = [1, 1]} : vector<16x128xf32> to vector<16x32xf32>
    %326 = arith.negf %325 : vector<16x32xf32>
    %327 = math.exp %326 : vector<16x32xf32>
    %cst_115 = arith.constant 1.000000e+00 : f32
    %328 = vector.broadcast %cst_115 : f32 to vector<16x32xf32>
    %329 = arith.addf %328, %327 : vector<16x32xf32>
    %330 = arith.divf %328, %329 : vector<16x32xf32>
    %331 = vector.extract_strided_slice %324 {offsets = [0, 32], sizes = [16, 32], strides = [1, 1]} : vector<16x128xf32> to vector<16x32xf32>
    %332 = arith.negf %331 : vector<16x32xf32>
    %333 = math.exp %332 : vector<16x32xf32>
    %cst_116 = arith.constant 1.000000e+00 : f32
    %334 = vector.broadcast %cst_116 : f32 to vector<16x32xf32>
    %335 = arith.addf %334, %333 : vector<16x32xf32>
    %336 = arith.divf %334, %335 : vector<16x32xf32>
    %337 = vector.extract_strided_slice %324 {offsets = [0, 64], sizes = [16, 32], strides = [1, 1]} : vector<16x128xf32> to vector<16x32xf32>
    %338 = arith.mulf %336, %264 : vector<16x32xf32>
    %cst_117 = arith.constant dense<0.000000e+00> : vector<16x32xf32>
    %339 = tpu.matmul %338, %6, %cst_117 {dimension_numbers = #tpu.dot_dimension_numbers<[1], [0], [0], [1], [0, 0, 1, 1], [], []>} : vector<16x32xf32>, vector<32x32xf32>, vector<16x32xf32> -> vector<16x32xf32>
    %340 = arith.addf %337, %339 : vector<16x32xf32>
    %341 = math.tanh %340 : vector<16x32xf32>
    %342 = arith.subf %341, %264 : vector<16x32xf32>
    %343 = arith.mulf %330, %342 : vector<16x32xf32>
    %344 = arith.addf %264, %343 : vector<16x32xf32>
    %cst_118 = arith.constant dense<0.000000e+00> : vector<16x256xf32>
    %345 = tpu.matmul %344, %5, %cst_118 {dimension_numbers = #tpu.dot_dimension_numbers<[1], [0], [0], [1], [0, 0, 1, 1], [], []>} : vector<16x32xf32>, vector<32x256xf32>, vector<16x256xf32> -> vector<16x256xf32>
    %346 = vector.extract_strided_slice %345 {offsets = [0, 0], sizes = [16, 128], strides = [1, 1]} : vector<16x256xf32> to vector<16x128xf32>
    %347 = arith.addf %346, %9 : vector<16x128xf32>
    %348 = vector.extract_strided_slice %345 {offsets = [0, 128], sizes = [16, 128], strides = [1, 1]} : vector<16x256xf32> to vector<16x128xf32>
    %349 = arith.addf %348, %18 : vector<16x128xf32>
    %350 = arith.mulf %347, %21 : vector<16x128xf32>
    %351 = arith.subf %347, %350 : vector<16x128xf32>
    %cst_119 = arith.constant dense<0.000000e+00> : vector<16xf32>
    %352 = vector.multi_reduction <add>, %350, %cst_119 [1] : vector<16x128xf32> to vector<16xf32>
    %353 = vector.shape_cast %352 : vector<16xf32> to vector<16x1xf32>
    %cst_120 = arith.constant 1.562500e-02 : f32
    %354 = vector.broadcast %cst_120 : f32 to vector<16x1xf32>
    %355 = arith.mulf %353, %354 : vector<16x1xf32>
    %cst_121 = arith.constant dense<0.000000e+00> : vector<16xf32>
    %356 = vector.multi_reduction <add>, %351, %cst_121 [1] : vector<16x128xf32> to vector<16xf32>
    %357 = vector.shape_cast %356 : vector<16xf32> to vector<16x1xf32>
    %cst_122 = arith.constant 1.562500e-02 : f32
    %358 = vector.broadcast %cst_122 : f32 to vector<16x1xf32>
    %359 = arith.mulf %357, %358 : vector<16x1xf32>
    %360 = arith.mulf %350, %350 : vector<16x128xf32>
    %cst_123 = arith.constant dense<0.000000e+00> : vector<16xf32>
    %361 = vector.multi_reduction <add>, %360, %cst_123 [1] : vector<16x128xf32> to vector<16xf32>
    %362 = vector.shape_cast %361 : vector<16xf32> to vector<16x1xf32>
    %cst_124 = arith.constant 1.562500e-02 : f32
    %363 = vector.broadcast %cst_124 : f32 to vector<16x1xf32>
    %364 = arith.mulf %362, %363 : vector<16x1xf32>
    %365 = arith.mulf %351, %351 : vector<16x128xf32>
    %cst_125 = arith.constant dense<0.000000e+00> : vector<16xf32>
    %366 = vector.multi_reduction <add>, %365, %cst_125 [1] : vector<16x128xf32> to vector<16xf32>
    %367 = vector.shape_cast %366 : vector<16xf32> to vector<16x1xf32>
    %cst_126 = arith.constant 1.562500e-02 : f32
    %368 = vector.broadcast %cst_126 : f32 to vector<16x1xf32>
    %369 = arith.mulf %367, %368 : vector<16x1xf32>
    %370 = arith.mulf %355, %355 : vector<16x1xf32>
    %371 = arith.subf %364, %370 : vector<16x1xf32>
    %cst_127 = arith.constant 9.99999974E-6 : f32
    %372 = vector.broadcast %cst_127 : f32 to vector<16x1xf32>
    %373 = arith.addf %371, %372 : vector<16x1xf32>
    %374 = math.rsqrt %373 : vector<16x1xf32>
    %375 = arith.mulf %359, %359 : vector<16x1xf32>
    %376 = arith.subf %369, %375 : vector<16x1xf32>
    %cst_128 = arith.constant 9.99999974E-6 : f32
    %377 = vector.broadcast %cst_128 : f32 to vector<16x1xf32>
    %378 = arith.addf %376, %377 : vector<16x1xf32>
    %379 = math.rsqrt %378 : vector<16x1xf32>
    %380 = arith.subf %355, %359 : vector<16x1xf32>
    %381 = vector.broadcast %380 : vector<16x1xf32> to vector<16x128xf32>
    %382 = arith.mulf %381, %21 : vector<16x128xf32>
    %383 = vector.broadcast %359 : vector<16x1xf32> to vector<16x128xf32>
    %384 = arith.addf %383, %382 : vector<16x128xf32>
    %385 = vector.broadcast %374 : vector<16x1xf32> to vector<16x128xf32>
    %386 = arith.mulf %385, %12 : vector<16x128xf32>
    %387 = vector.broadcast %379 : vector<16x1xf32> to vector<16x128xf32>
    %388 = arith.mulf %387, %24 : vector<16x128xf32>
    %389 = arith.addf %386, %388 : vector<16x128xf32>
    %390 = arith.subf %347, %384 : vector<16x128xf32>
    %391 = arith.mulf %390, %389 : vector<16x128xf32>
    %392 = arith.addf %391, %15 : vector<16x128xf32>
    %393 = vector.extract_strided_slice %392 {offsets = [0, 0], sizes = [16, 32], strides = [1, 1]} : vector<16x128xf32> to vector<16x32xf32>
    %c0_129 = arith.constant 0 : index
    %c0_130 = arith.constant 0 : index
    %394 = vector.load %arg6[%c0_129, %c0_130] : memref<64x64xf32, #tpu.memory_space<vmem>>, vector<16x32xf32>
    tpu.vector_store %arg6[%c0_129, %c0_130], %393 {strides = array<i32>} : memref<64x64xf32, #tpu.memory_space<vmem>>, vector<16x32xf32>,
    %395 = vector.extract_strided_slice %392 {offsets = [0, 32], sizes = [16, 32], strides = [1, 1]} : vector<16x128xf32> to vector<16x32xf32>
    %c16_131 = arith.constant 16 : index
    %c0_132 = arith.constant 0 : index
    %396 = vector.load %arg6[%c16_131, %c0_132] : memref<64x64xf32, #tpu.memory_space<vmem>>, vector<16x32xf32>
    tpu.vector_store %arg6[%c16_131, %c0_132], %395 {strides = array<i32>} : memref<64x64xf32, #tpu.memory_space<vmem>>, vector<16x32xf32>,
    %397 = vector.extract_strided_slice %392 {offsets = [0, 64], sizes = [16, 32], strides = [1, 1]} : vector<16x128xf32> to vector<16x32xf32>
    %c32_133 = arith.constant 32 : index
    %c32_134 = arith.constant 32 : index
    %398 = vector.load %arg6[%c32_133, %c32_134] : memref<64x64xf32, #tpu.memory_space<vmem>>, vector<16x32xf32>
    tpu.vector_store %arg6[%c32_133, %c32_134], %397 {strides = array<i32>} : memref<64x64xf32, #tpu.memory_space<vmem>>, vector<16x32xf32>,
    %399 = vector.extract_strided_slice %392 {offsets = [0, 96], sizes = [16, 32], strides = [1, 1]} : vector<16x128xf32> to vector<16x32xf32>
    %c48_135 = arith.constant 48 : index
    %c32_136 = arith.constant 32 : index
    %400 = vector.load %arg6[%c48_135, %c32_136] : memref<64x64xf32, #tpu.memory_space<vmem>>, vector<16x32xf32>
    tpu.vector_store %arg6[%c48_135, %c32_136], %399 {strides = array<i32>} : memref<64x64xf32, #tpu.memory_space<vmem>>, vector<16x32xf32>,
    %c0_137 = arith.constant 0 : index
    %c0_138 = arith.constant 0 : index
    %401 = vector.load %arg6[%c0_137, %c0_138] : memref<64x64xf32, #tpu.memory_space<vmem>>, vector<64x64xf32>
    %cst_139 = arith.constant dense<0.000000e+00> : vector<16x64xf32>
    %402 = tpu.matmul %3, %401, %cst_139 {dimension_numbers = #tpu.dot_dimension_numbers<[1], [0], [0], [1], [0, 0, 1, 1], [], []>} : vector<16x64xf32>, vector<64x64xf32>, vector<16x64xf32> -> vector<16x64xf32>
    %cst_140 = arith.constant dense<0.000000e+00> : vector<16x128xf32>
    %403 = tpu.matmul %402, %4, %cst_140 {dimension_numbers = #tpu.dot_dimension_numbers<[1], [0], [0], [1], [0, 0, 1, 1], [], []>} : vector<16x64xf32>, vector<64x128xf32>, vector<16x128xf32> -> vector<16x128xf32>
    %404 = arith.addf %403, %349 : vector<16x128xf32>
    %405 = vector.extract_strided_slice %404 {offsets = [0, 0], sizes = [16, 32], strides = [1, 1]} : vector<16x128xf32> to vector<16x32xf32>
    %406 = arith.negf %405 : vector<16x32xf32>
    %407 = math.exp %406 : vector<16x32xf32>
    %cst_141 = arith.constant 1.000000e+00 : f32
    %408 = vector.broadcast %cst_141 : f32 to vector<16x32xf32>
    %409 = arith.addf %408, %407 : vector<16x32xf32>
    %410 = arith.divf %408, %409 : vector<16x32xf32>
    %411 = vector.extract_strided_slice %404 {offsets = [0, 32], sizes = [16, 32], strides = [1, 1]} : vector<16x128xf32> to vector<16x32xf32>
    %412 = arith.negf %411 : vector<16x32xf32>
    %413 = math.exp %412 : vector<16x32xf32>
    %cst_142 = arith.constant 1.000000e+00 : f32
    %414 = vector.broadcast %cst_142 : f32 to vector<16x32xf32>
    %415 = arith.addf %414, %413 : vector<16x32xf32>
    %416 = arith.divf %414, %415 : vector<16x32xf32>
    %417 = vector.extract_strided_slice %404 {offsets = [0, 64], sizes = [16, 32], strides = [1, 1]} : vector<16x128xf32> to vector<16x32xf32>
    %418 = arith.mulf %416, %344 : vector<16x32xf32>
    %cst_143 = arith.constant dense<0.000000e+00> : vector<16x32xf32>
    %419 = tpu.matmul %418, %6, %cst_143 {dimension_numbers = #tpu.dot_dimension_numbers<[1], [0], [0], [1], [0, 0, 1, 1], [], []>} : vector<16x32xf32>, vector<32x32xf32>, vector<16x32xf32> -> vector<16x32xf32>
    %420 = arith.addf %417, %419 : vector<16x32xf32>
    %421 = math.tanh %420 : vector<16x32xf32>
    %422 = arith.subf %421, %344 : vector<16x32xf32>
    %423 = arith.mulf %410, %422 : vector<16x32xf32>
    %424 = arith.addf %344, %423 : vector<16x32xf32>
    %c0_144 = arith.constant 0 : index
    %c32_145 = arith.constant 32 : index
    %425 = vector.load %arg0[%c0_144, %c32_145] : memref<16x64xf32, #tpu.memory_space<vmem>>, vector<16x1xf32>
    %c0_146 = arith.constant 0 : index
    %c288 = arith.constant 288 : index
    %426 = vector.load %arg2[%c0_146, %c288] : memref<32x384xf32, #tpu.memory_space<vmem>>, vector<32x32xf32>
    %c4 = arith.constant 4 : index
    %c0_147 = arith.constant 0 : index
    %427 = vector.load %arg4[%c4, %c0_147] : memref<8x128xf32, #tpu.memory_space<vmem>>, vector<1x128xf32>
    %428 = vector.extract_strided_slice %427 {offsets = [0, 0], sizes = [1, 32], strides = [1, 1]} : vector<1x128xf32> to vector<1x32xf32>
    %429 = vector.shape_cast %428 : vector<1x32xf32> to vector<1x32xf32>
    %430 = vector.broadcast %429 : vector<1x32xf32> to vector<16x32xf32>
    %431 = vector.extract_strided_slice %427 {offsets = [0, 32], sizes = [1, 32], strides = [1, 1]} : vector<1x128xf32> to vector<1x32xf32>
    %432 = vector.shape_cast %431 : vector<1x32xf32> to vector<1x32xf32>
    %433 = vector.broadcast %432 : vector<1x32xf32> to vector<16x32xf32>
    %434 = vector.extract_strided_slice %427 {offsets = [0, 64], sizes = [1, 32], strides = [1, 1]} : vector<1x128xf32> to vector<1x32xf32>
    %435 = vector.shape_cast %434 : vector<1x32xf32> to vector<1x32xf32>
    %436 = vector.broadcast %435 : vector<1x32xf32> to vector<16x32xf32>
    %437 = vector.extract_strided_slice %427 {offsets = [0, 96], sizes = [1, 1], strides = [1, 1]} : vector<1x128xf32> to vector<1x1xf32>
    %cst_148 = arith.constant dense<0.000000e+00> : vector<16x32xf32>
    %438 = tpu.matmul %424, %426, %cst_148 {dimension_numbers = #tpu.dot_dimension_numbers<[1], [0], [0], [1], [0, 0, 1, 1], [], []>} : vector<16x32xf32>, vector<32x32xf32>, vector<16x32xf32> -> vector<16x32xf32>
    %439 = vector.broadcast %425 : vector<16x1xf32> to vector<16x32xf32>
    %440 = arith.mulf %439, %433 : vector<16x32xf32>
    %441 = arith.addf %438, %440 : vector<16x32xf32>
    %442 = arith.addf %441, %430 : vector<16x32xf32>
    %443 = math.tanh %442 : vector<16x32xf32>
    %444 = arith.mulf %443, %436 : vector<16x32xf32>
    %cst_149 = arith.constant dense<0.000000e+00> : vector<16xf32>
    %445 = vector.multi_reduction <add>, %444, %cst_149 [1] : vector<16x32xf32> to vector<16xf32>
    %446 = vector.shape_cast %445 : vector<16xf32> to vector<16x1xf32>
    %447 = vector.broadcast %437 : vector<1x1xf32> to vector<16x1xf32>
    %448 = arith.addf %446, %447 : vector<16x1xf32>
    %c0_150 = arith.constant 0 : index
    %c0_151 = arith.constant 0 : index
    %449 = vector.load %arg5[%c0_150, %c0_151] : memref<16x1xf32, #tpu.memory_space<vmem>>, vector<16x1xf32>
    tpu.vector_store %arg5[%c0_150, %c0_151], %448 {strides = array<i32>} : memref<16x1xf32, #tpu.memory_space<vmem>>, vector<16x1xf32>,
    return
  }
}

</mosaic_0001>

<llo_original>
// kernel: tpu_custom_call.1
$region0: #{tpu_custom_call.1}
  #allocation0 [shape = 'u32[]', space=smem, size = 0x4, offset = 0x4, fixed_abs, tag = 'smem constant byte address 0x4 - core index']
  #allocation1 [shape = 'u32[144,128]{1,0:T(1,128)}', space=vmem, size = 0x12000, scoped, tag = 'internal scratch']
  #allocation2 [shape = 'f32[64,64]{1,0:T(8,128)}', space=vmem, size = 0x8000, scoped, tag = 'scratch operand']
  %s0 = inlined_call_operand.hbm [shape: f32[16,64], index: 0, kind: input, shape index: {}]
  %s1 = inlined_call_operand.hbm [shape: f32[16,64], index: 1, kind: input, shape index: {}]
  %s2 = inlined_call_operand.hbm [shape: f32[32,384], index: 2, kind: input, shape index: {}]
  %s3 = inlined_call_operand.hbm [shape: f32[64,128], index: 3, kind: input, shape index: {}]
  %s4 = inlined_call_operand.vmem [shape: f32[8,128], index: 4, kind: input, shape index: {}]
  %s5 = inlined_call_operand.vmem [shape: f32[16,1], index: 5, kind: output, shape index: {}]
  %s6 = sld [smem:[#allocation0]]
  $region46: #{tpu_custom_call.1} parent=0
    _
  %s8 = ssub.s32 1, %s6
  %s9 = scalar_select 0, %s8, %s6
  $region1: #{tpu_custom_call.1} parent=0
    #allocation3 [shape = 'u8[8192]{0}', space=vmem, size = 0x2000, scoped, tag = 'input window, operand 0, single buffered']
    #allocation4 [shape = 's32[1]{0}', space=sflag, size = 0x4, scoped, tag = 'scoped memory for tpu_custom_call.1']
    #allocation5 [shape = 'u8[8192]{0}', space=vmem, size = 0x2000, scoped, tag = 'input window, operand 1, single buffered']
    #allocation6 [shape = 's32[1]{0}', space=sflag, size = 0x4, scoped, tag = 'scoped memory for tpu_custom_call.1']
    #allocation7 [shape = 'u8[49152]{0}', space=vmem, size = 0xc000, scoped, tag = 'input window, operand 2, single buffered']
    #allocation8 [shape = 'u8[32768]{0}', space=vmem, size = 0x8000, scoped, tag = 'input window, operand 3, single buffered']
    #allocation9 [shape = 's32[1]{0}', space=sflag, size = 0x4, scoped, tag = 'scoped memory for tpu_custom_call.1']
    %10 = vsyncpa [#allocation4], 0
    %11 = vsyncpa [#allocation6], 0
    %12 = vsyncpa [#allocation9], 0
    // Predicated region
    $region2: #{tpu_custom_call.1} parent=1 // pred_check
      _
    $region3: #{tpu_custom_call.1} parent=1 // pred_check_branch
      %14 = sbr.rel (0) target = $region5
    $region4: #{tpu_custom_call.1} parent=1 // pred_region
      %s16 = ssub.s32 256, 256
      %17 = vsyncadd [#allocation4], %s16
      %s18 = sshll.u32 [#allocation3], 4
      %s19 = int_to_ptr.vmem [resolvable:$true] %s18
      %24 = dma.hbm_to_vmem [thread:$0]  %s0, 256, %s19, [#allocation4], 128, 128, 8
    $region5: #{tpu_custom_call.1} parent=1 // pred_fallthru
      _
    // Predicated region
    $region6: #{tpu_custom_call.1} parent=1 // pred_check
      _
    $region7: #{tpu_custom_call.1} parent=1 // pred_check_branch
      %26 = sbr.rel (0) target = $region9
    $region8: #{tpu_custom_call.1} parent=1 // pred_region
      %s28 = ssub.s32 256, 256
      %29 = vsyncadd [#allocation6], %s28
      %s30 = sshll.u32 [#allocation5], 4
      %s31 = int_to_ptr.vmem [resolvable:$true] %s30
      %36 = dma.hbm_to_vmem [thread:$0]  %s1, 256, %s31, [#allocation6], 128, 128, 8
    $region9: #{tpu_custom_call.1} parent=1 // pred_fallthru
      _
    // Predicated region
    $region10: #{tpu_custom_call.1} parent=1 // pred_check
      _
    $region11: #{tpu_custom_call.1} parent=1 // pred_check_branch
      %38 = sbr.rel (0) target = $region13
    $region12: #{tpu_custom_call.1} parent=1 // pred_region
      %s40 = ssub.s32 1536, 1536
      %41 = vsyncadd [#allocation6], %s40
      %s42 = sshll.u32 [#allocation7], 4
      %s43 = int_to_ptr.vmem [resolvable:$true] %s42
      %48 = dma.hbm_to_vmem [thread:$0]  %s2, 1536, %s43, [#allocation6], 384, 384, 24
    $region13: #{tpu_custom_call.1} parent=1 // pred_fallthru
      _
    // Predicated region
    $region14: #{tpu_custom_call.1} parent=1 // pred_check
      _
    $region15: #{tpu_custom_call.1} parent=1 // pred_check_branch
      %50 = sbr.rel (0) target = $region17
    $region16: #{tpu_custom_call.1} parent=1 // pred_region
      %s52 = ssub.s32 1024, 1024
      %53 = vsyncadd [#allocation9], %s52
      %s54 = sshll.u32 [#allocation8], 4
      %s55 = int_to_ptr.vmem [resolvable:$true] %s54
      %60 = dma.hbm_to_vmem [thread:$0]  %s3, 1024, %s55, [#allocation9], 128, 128, 8
    $region17: #{tpu_custom_call.1} parent=1 // pred_fallthru
      _
    // Predicated region
    $region18: #{tpu_custom_call.1} parent=1 // pred_check
      _
    $region19: #{tpu_custom_call.1} parent=1 // pred_check_branch
      %62 = sbr.rel (0) target = $region21
    $region20: #{tpu_custom_call.1} parent=1 // pred_region
      _
    $region21: #{tpu_custom_call.1} parent=1 // pred_fallthru
      _
    // Predicated region
    $region22: #{tpu_custom_call.1} parent=1 // pred_check
      _
    $region23: #{tpu_custom_call.1} parent=1 // pred_check_branch
      %64 = sbr.rel (0) target = $region25
    $region24: #{tpu_custom_call.1} parent=1 // pred_region
      %65 = dma.done [#allocation4], 256
    $region25: #{tpu_custom_call.1} parent=1 // pred_fallthru
      _
    // Predicated region
    $region26: #{tpu_custom_call.1} parent=1 // pred_check
      _
    $region27: #{tpu_custom_call.1} parent=1 // pred_check_branch
      %67 = sbr.rel (0) target = $region29
    $region28: #{tpu_custom_call.1} parent=1 // pred_region
      %68 = dma.done [#allocation6], 256
    $region29: #{tpu_custom_call.1} parent=1 // pred_fallthru
      _
    // Predicated region
    $region30: #{tpu_custom_call.1} parent=1 // pred_check
      _
    $region31: #{tpu_custom_call.1} parent=1 // pred_check_branch
      %70 = sbr.rel (0) target = $region33
    $region32: #{tpu_custom_call.1} parent=1 // pred_region
      %71 = dma.done [#allocation6], 1536
    $region33: #{tpu_custom_call.1} parent=1 // pred_fallthru
      _
    // Predicated region
    $region34: #{tpu_custom_call.1} parent=1 // pred_check
      _
    $region35: #{tpu_custom_call.1} parent=1 // pred_check_branch
      %73 = sbr.rel (0) target = $region37
    $region36: #{tpu_custom_call.1} parent=1 // pred_region
      %74 = dma.done [#allocation9], 1024
    $region37: #{tpu_custom_call.1} parent=1 // pred_fallthru
      _
    %vm75 = vcmask 523264
    %76 = vst.msk [vmem:[#allocation2] sm:$0xff] %vm75, 0.0
    %77 = vst.msk [vmem:[#allocation2 + $0x8] sm:$0xff] %vm75, 0.0
    %78 = vst.msk [vmem:[#allocation2 + $0x10] sm:$0xff] %vm75, 0.0
    %79 = vst.msk [vmem:[#allocation2 + $0x18] sm:$0xff] %vm75, 0.0
    %80 = vst.msk [vmem:[#allocation2 + $0x20] sm:$0xff] %vm75, 0.0
    %81 = vst.msk [vmem:[#allocation2 + $0x28] sm:$0xff] %vm75, 0.0
    %82 = vst.msk [vmem:[#allocation2 + $0x30] sm:$0xff] %vm75, 0.0
    %83 = vst.msk [vmem:[#allocation2 + $0x38] sm:$0xff] %vm75, 0.0
    %v84 = vld [vmem:[#allocation3] sm:$0xff]
    %v85 = vld [vmem:[#allocation3 + $0x8] sm:$0xff]
    %v86 = vld [vmem:[#allocation5] sm:$0xff]
    %v87 = vld [vmem:[#allocation5 + $0x8] sm:$0xff]
    %v88 = vld [vmem:[#allocation8] sm:$0xff]
    %v89 = vld [vmem:[#allocation8 + $0x8] sm:$0xff]
    %v90 = vld [vmem:[#allocation8 + $0x10] sm:$0xff]
    %v91 = vld [vmem:[#allocation8 + $0x18] sm:$0xff]
    %v92 = vld [vmem:[#allocation8 + $0x20] sm:$0xff]
    %v93 = vld [vmem:[#allocation8 + $0x28] sm:$0xff]
    %v94 = vld [vmem:[#allocation8 + $0x30] sm:$0xff]
    %v95 = vld [vmem:[#allocation8 + $0x38] sm:$0xff]
    %v96 = vld [vmem:[#allocation7] sm:$0xff]
    %v97 = vld [vmem:[#allocation7 + $0x8] sm:$0xff]
    %v98 = vld [vmem:[#allocation7 + $0x18] sm:$0xff]
    %v99 = vld [vmem:[#allocation7 + $0x20] sm:$0xff]
    %v100 = vld [vmem:[#allocation7 + $0x30] sm:$0xff]
    %v101 = vld [vmem:[#allocation7 + $0x38] sm:$0xff]
    %v102 = vld [vmem:[#allocation7 + $0x48] sm:$0xff]
    %v103 = vld [vmem:[#allocation7 + $0x50] sm:$0xff]
    %v104 = vld [vmem:[#allocation7 + $0x10] sm:$0xff]
    %v105 = vld [vmem:[#allocation7 + $0x28] sm:$0xff]
    %v106 = vld [vmem:[#allocation7 + $0x40] sm:$0xff]
    %v107 = vld [vmem:[#allocation7 + $0x58] sm:$0xff]
    %v108 = vld [vmem:[%s4] sm:$0x1]
    %v109 = vlaneseq
    %v110 = vshrl.u32 %v109, 7
    %v111 = vsub.s32 0, %v110
    %v112 = vrot.slane %v108, %v111
    %v113 = vld [vmem:[%s4 + $0x1] sm:$0x1]
    %v114 = vlaneseq
    %v115 = vshrl.u32 %v114, 7
    %v116 = vsub.s32 0, %v115
    %v117 = vrot.slane %v113, %v116
    %v118 = vld [vmem:[%s4 + $0x2] sm:$0x1]
    %v119 = vlaneseq
    %v120 = vshrl.u32 %v119, 7
    %v121 = vsub.s32 0, %v120
    %v122 = vrot.slane %v118, %v121
    %v123 = vld [vmem:[%s4 + $0x3] sm:$0x1]
    %v124 = vlaneseq
    %v125 = vshrl.u32 %v124, 7
    %v126 = vsub.s32 0, %v125
    %v127 = vrot.slane %v123, %v126
    %v128 = vld [vmem:[%s4 + $0x5] sm:$0x1]
    %v129 = vlaneseq
    %v130 = vshrl.u32 %v129, 7
    %v131 = vsub.s32 0, %v130
    %v132 = vrot.slane %v128, %v131
    %v133 = vld [vmem:[%s4 + $0x6] sm:$0x1]
    %v134 = vlaneseq
    %v135 = vshrl.u32 %v134, 7
    %v136 = vsub.s32 0, %v135
    %v137 = vrot.slane %v133, %v136
    %vm138 = vcmask 261120
    %v140 = vsel %vm138, %v84, 0
    %v143 = vsel %vm138, %v85, 0
    %145 = vmatprep.subr.mxu0 %v97
    %146 = vmatpush1.msra.mxu0 %v96
    %147 = vmatprep.subr.mxu0 %v99
    %148 = vmatpush1.msra.mxu0 %v98
    %149 = vmatprep.subr.mxu0 %v101
    %150 = vmatpush1.msra.mxu0 %v100
    %151 = vmatprep.subr.mxu0 %v103
    %152 = vmatpush1.msra.mxu0 %v102
    %153 = vmatprep.subr.mxu0 0.0
    %154 = vmatpush1.msra.mxu0 0.0
    %155 = vmatprep.subr.mxu0 0.0
    %156 = vmatpush1.msra.mxu0 0.0
    %157 = vmatprep.subr.mxu0 0.0
    %158 = vmatpush1.msra.mxu0 0.0
    %159 = vmatprep.subr.mxu0 0.0
    %160 = vmatpush1.msra.mxu0 0.0
    %161 = vmatprep.subr.mxu0 0.0
    %162 = vmatpush1.msra.mxu0 0.0
    %163 = vmatprep.subr.mxu0 0.0
    %164 = vmatpush1.msra.mxu0 0.0
    %165 = vmatprep.subr.mxu0 0.0
    %166 = vmatpush1.msra.mxu0 0.0
    %167 = vmatprep.subr.mxu0 0.0
    %168 = vmatpush1.msra.mxu0 0.0
    %169 = vmatprep.subr.mxu0 0.0
    %170 = vmatpush1.msra.mxu0 0.0
    %171 = vmatprep.subr.mxu0 0.0
    %172 = vmatpush1.msra.mxu0 0.0
    %173 = vmatprep.subr.mxu0 0.0
    %174 = vmatpush1.msra.mxu0 0.0
    %175 = vmatprep.subr.mxu0 0.0
    %176 = vmatpush1.msra.mxu0 0.0
    %177 = vmatprep.subr.mxu0 0.0
    %178 = vmatpush1.msra.mxu0 0.0
    %179 = vmatprep.subr.mxu0 0.0
    %180 = vmatpush1.msra.mxu0 0.0
    %181 = vmatprep.subr.mxu0 0.0
    %182 = vmatpush1.msra.mxu0 0.0
    %183 = vmatprep.subr.mxu0 0.0
    %184 = vmatpush1.msra.mxu0 0.0
    %185 = vmatprep.subr.mxu0 0.0
    %186 = vmatpush1.msra.mxu0 0.0
    %187 = vmatprep.subr.mxu0 0.0
    %188 = vmatpush1.msra.mxu0 0.0
    %189 = vmatprep.subr.mxu0 0.0
    %190 = vmatpush1.msra.mxu0 0.0
    %191 = vmatprep.subr.mxu0 0.0
    %192 = vmatpush1.msra.mxu0 0.0
    %193 = vmatprep.subr.mxu0 0.0
    %194 = vmatpush1.msra.mxu0 0.0
    %195 = vmatprep.subr.mxu0 0.0
    %196 = vmatpush1.msra.mxu0 0.0
    %197 = vmatprep.subr.mxu0 0.0
    %198 = vmatpush1.msra.mxu0 0.0
    %199 = vmatprep.subr.mxu0 0.0
    %200 = vmatpush1.msra.mxu0 0.0
    %201 = vmatprep.subr.mxu0 0.0
    %202 = vmatpush1.msra.mxu0 0.0
    %203 = vmatprep.subr.mxu0 0.0
    %204 = vmatpush1.msra.mxu0 0.0
    %205 = vmatprep.subr.mxu0 0.0
    %206 = vmatpush1.msra.mxu0 0.0
    %207 = vmatprep.subr.mxu0 0.0
    %208 = vmatpush1.msra.mxu0 0.0
    %209 = vmatprep.mubr.f32.mxu0 0.0
    %210 = vmatmul.mubr.f32.gmra.mrb[0].mxu0 %v140
    %v211 = vpop.f32.mrb[0].mxu0
    %v212 = vadd.f32 0.0, %v211
    %v213 = vpop.f32.mrb[0].mxu0
    %v214 = vadd.f32 0.0, %v213
    %215 = vmatprep.mubr.f32.mxu0 0.0
    %216 = vmatmul.mubr.f32.gmra.mrb[0].mxu0 %v143
    %v217 = vpop.f32.mrb[0].mxu0
    %v218 = vadd.f32 0.0, %v217
    %v219 = vpop.f32.mrb[0].mxu0
    %v220 = vadd.f32 0.0, %v219
    %221 = vdwg.mxu0
    %v222 = vadd.f32 %v212, %v112
    %v223 = vadd.f32 %v218, %v112
    %v224 = vadd.f32 %v214, %v127
    %v225 = vadd.f32 %v220, %v127
    %v226 = vmul.f32 %v222, %v132
    %v227 = vmul.f32 %v223, %v132
    %v228 = vsub.f32 %v222, %v226
    %v229 = vsub.f32 %v223, %v227
    %230 = vadd.xlane.f32.xlu0 %v226
    %v231 = vpop.xlane.xlu0 %230
    %232 = vadd.xlane.f32.xlu0 %v227
    %v233 = vpop.xlane.xlu0 %232
    %v234 = vmul.f32 %v231, 0.015625
    %v235 = vmul.f32 %v233, 0.015625
    %236 = vadd.xlane.f32.xlu0 %v228
    %v237 = vpop.xlane.xlu0 %236
    %238 = vadd.xlane.f32.xlu0 %v229
    %v239 = vpop.xlane.xlu0 %238
    %v240 = vmul.f32 %v237, 0.015625
    %v241 = vmul.f32 %v239, 0.015625
    %v242 = vmul.f32 %v226, %v226
    %v243 = vmul.f32 %v227, %v227
    %244 = vadd.xlane.f32.xlu0 %v242
    %v245 = vpop.xlane.xlu0 %244
    %246 = vadd.xlane.f32.xlu0 %v243
    %v247 = vpop.xlane.xlu0 %246
    %v248 = vmul.f32 %v245, 0.015625
    %v249 = vmul.f32 %v247, 0.015625
    %v250 = vmul.f32 %v228, %v228
    %v251 = vmul.f32 %v229, %v229
    %252 = vadd.xlane.f32.xlu0 %v250
    %v253 = vpop.xlane.xlu0 %252
    %254 = vadd.xlane.f32.xlu0 %v251
    %v255 = vpop.xlane.xlu0 %254
    %v256 = vmul.f32 %v253, 0.015625
    %v257 = vmul.f32 %v255, 0.015625
    %v258 = vmul.f32 %v234, %v234
    %v259 = vmul.f32 %v235, %v235
    %v260 = vsub.f32 %v248, %v258
    %v261 = vsub.f32 %v249, %v259
    %v262 = vadd.f32 %v260, 1e-05
    %v263 = vadd.f32 %v261, 1e-05
    %v264 = vrsqrt.pop %v262
    %v265 = vrsqrt.pop %v263
    %v266 = vmul.f32 %v240, %v240
    %v267 = vmul.f32 %v241, %v241
    %v268 = vsub.f32 %v256, %v266
    %v269 = vsub.f32 %v257, %v267
    %v270 = vadd.f32 %v268, 1e-05
    %v271 = vadd.f32 %v269, 1e-05
    %v272 = vrsqrt.pop %v270
    %v273 = vrsqrt.pop %v271
    %v274 = vsub.f32 %v234, %v240
    %v275 = vsub.f32 %v235, %v241
    %v276 = vmul.f32 %v274, %v132
    %v277 = vmul.f32 %v275, %v132
    %v278 = vadd.f32 %v240, %v276
    %v279 = vadd.f32 %v241, %v277
    %v280 = vmul.f32 %v264, %v117
    %v281 = vmul.f32 %v265, %v117
    %v282 = vmul.f32 %v272, %v137
    %v283 = vmul.f32 %v273, %v137
    %v284 = vadd.f32 %v280, %v282
    %v285 = vadd.f32 %v281, %v283
    %v286 = vsub.f32 %v222, %v278
    %v287 = vsub.f32 %v223, %v279
    %v288 = vmul.f32 %v286, %v284
    %v289 = vmul.f32 %v287, %v285
    %v290 = vadd.f32 %v288, %v122
    %v291 = vadd.f32 %v289, %v122
    %292 = vst.msk [vmem:[#allocation2] sm:$0xff] %vm138, %v290
    %293 = vst.msk [vmem:[#allocation2 + $0x8] sm:$0xff] %vm138, %v291
    %296 = vrot.lane.b32.xlu0 %v290, 96
    %v297 = vpop.permute.xlu0 %296
    %298 = vrot.lane.b32.xlu0 %v291, 96
    %v299 = vpop.permute.xlu0 %298
    %302 = vst.msk [vmem:[#allocation2 + $0x10] sm:$0xff] %vm138, %v297
    %303 = vst.msk [vmem:[#allocation2 + $0x18] sm:$0xff] %vm138, %v299
    %vm304 = vcmask 523520
    %305 = vst.msk [vmem:[#allocation2 + $0x20] sm:$0xff] %vm304, %v297
    %306 = vst.msk [vmem:[#allocation2 + $0x28] sm:$0xff] %vm304, %v299
    %307 = vrot.lane.b32.xlu0 %v290, 64
    %v308 = vpop.permute.xlu0 %307
    %309 = vrot.lane.b32.xlu0 %v291, 64
    %v310 = vpop.permute.xlu0 %309
    %313 = vst.msk [vmem:[#allocation2 + $0x30] sm:$0xff] %vm304, %v308
    %314 = vst.msk [vmem:[#allocation2 + $0x38] sm:$0xff] %vm304, %v310
    %v315 = vld [vmem:[#allocation2] sm:$0xff]
    %v316 = vld [vmem:[#allocation2 + $0x8] sm:$0xff]
    %v317 = vld [vmem:[#allocation2 + $0x10] sm:$0xff]
    %v318 = vld [vmem:[#allocation2 + $0x18] sm:$0xff]
    %v319 = vld [vmem:[#allocation2 + $0x20] sm:$0xff]
    %v320 = vld [vmem:[#allocation2 + $0x28] sm:$0xff]
    %v321 = vld [vmem:[#allocation2 + $0x30] sm:$0xff]
    %v322 = vld [vmem:[#allocation2 + $0x38] sm:$0xff]
    %v324 = vsel %vm75, %v86, 0
    %v327 = vsel %vm75, %v87, 0
    %329 = vmatprep.subr.mxu0 0.0
    %330 = vmatpush1.msra.mxu0 %v315
    %331 = vmatprep.subr.mxu0 0.0
    %332 = vmatpush1.msra.mxu0 %v316
    %333 = vmatprep.subr.mxu0 0.0
    %334 = vmatpush1.msra.mxu0 %v317
    %335 = vmatprep.subr.mxu0 0.0
    %336 = vmatpush1.msra.mxu0 %v318
    %337 = vmatprep.subr.mxu0 0.0
    %338 = vmatpush1.msra.mxu0 %v319
    %339 = vmatprep.subr.mxu0 0.0
    %340 = vmatpush1.msra.mxu0 %v320
    %341 = vmatprep.subr.mxu0 0.0
    %342 = vmatpush1.msra.mxu0 %v321
    %343 = vmatprep.subr.mxu0 0.0
    %344 = vmatpush1.msra.mxu0 %v322
    %345 = vmatprep.subr.mxu0 0.0
    %346 = vmatpush1.msra.mxu0 0.0
    %347 = vmatprep.subr.mxu0 0.0
    %348 = vmatpush1.msra.mxu0 0.0
    %349 = vmatprep.subr.mxu0 0.0
    %350 = vmatpush1.msra.mxu0 0.0
    %351 = vmatprep.subr.mxu0 0.0
    %352 = vmatpush1.msra.mxu0 0.0
    %353 = vmatprep.subr.mxu0 0.0
    %354 = vmatpush1.msra.mxu0 0.0
    %355 = vmatprep.subr.mxu0 0.0
    %356 = vmatpush1.msra.mxu0 0.0
    %357 = vmatprep.subr.mxu0 0.0
    %358 = vmatpush1.msra.mxu0 0.0
    %359 = vmatprep.subr.mxu0 0.0
    %360 = vmatpush1.msra.mxu0 0.0
    %361 = vmatprep.subr.mxu0 0.0
    %362 = vmatpush1.msra.mxu0 0.0
    %363 = vmatprep.subr.mxu0 0.0
    %364 = vmatpush1.msra.mxu0 0.0
    %365 = vmatprep.subr.mxu0 0.0
    %366 = vmatpush1.msra.mxu0 0.0
    %367 = vmatprep.subr.mxu0 0.0
    %368 = vmatpush1.msra.mxu0 0.0
    %369 = vmatprep.subr.mxu0 0.0
    %370 = vmatpush1.msra.mxu0 0.0
    %371 = vmatprep.subr.mxu0 0.0
    %372 = vmatpush1.msra.mxu0 0.0
    %373 = vmatprep.subr.mxu0 0.0
    %374 = vmatpush1.msra.mxu0 0.0
    %375 = vmatprep.subr.mxu0 0.0
    %376 = vmatpush1.msra.mxu0 0.0
    %377 = vmatprep.subr.mxu0 0.0
    %378 = vmatpush1.msra.mxu0 0.0
    %379 = vmatprep.subr.mxu0 0.0
    %380 = vmatpush1.msra.mxu0 0.0
    %381 = vmatprep.subr.mxu0 0.0
    %382 = vmatpush1.msra.mxu0 0.0
    %383 = vmatprep.subr.mxu0 0.0
    %384 = vmatpush1.msra.mxu0 0.0
    %385 = vmatprep.subr.mxu0 0.0
    %386 = vmatpush1.msra.mxu0 0.0
    %387 = vmatprep.subr.mxu0 0.0
    %388 = vmatpush1.msra.mxu0 0.0
    %389 = vmatprep.subr.mxu0 0.0
    %390 = vmatpush1.msra.mxu0 0.0
    %391 = vmatprep.subr.mxu0 0.0
    %392 = vmatpush1.msra.mxu0 0.0
    %393 = vmatprep.mubr.f32.mxu0 0.0
    %394 = vmatmul.mubr.f32.gmra.mrb[0].mxu0 %v324
    %v395 = vpop.f32.mrb[0].mxu0
    %v396 = vadd.f32 0.0, %v395
    %v397 = vpop.f32.mrb[0].mxu0
    %398 = vmatprep.mubr.f32.mxu0 0.0
    %399 = vmatmul.mubr.f32.gmra.mrb[0].mxu0 %v327
    %v400 = vpop.f32.mrb[0].mxu0
    %v401 = vadd.f32 0.0, %v400
    %v402 = vpop.f32.mrb[0].mxu0
    %403 = vdwg.mxu0
    %v405 = vsel %vm75, %v396, 0
    %v408 = vsel %vm75, %v401, 0
    %410 = vmatprep.subr.mxu0 0.0
    %411 = vmatpush1.msra.mxu0 %v88
    %412 = vmatprep.subr.mxu0 0.0
    %413 = vmatpush1.msra.mxu0 %v89
    %414 = vmatprep.subr.mxu0 0.0
    %415 = vmatpush1.msra.mxu0 %v90
    %416 = vmatprep.subr.mxu0 0.0
    %417 = vmatpush1.msra.mxu0 %v91
    %418 = vmatprep.subr.mxu0 0.0
    %419 = vmatpush1.msra.mxu0 %v92
    %420 = vmatprep.subr.mxu0 0.0
    %421 = vmatpush1.msra.mxu0 %v93
    %422 = vmatprep.subr.mxu0 0.0
    %423 = vmatpush1.msra.mxu0 %v94
    %424 = vmatprep.subr.mxu0 0.0
    %425 = vmatpush1.msra.mxu0 %v95
    %426 = vmatprep.subr.mxu0 0.0
    %427 = vmatpush1.msra.mxu0 0.0
    %428 = vmatprep.subr.mxu0 0.0
    %429 = vmatpush1.msra.mxu0 0.0
    %430 = vmatprep.subr.mxu0 0.0
    %431 = vmatpush1.msra.mxu0 0.0
    %432 = vmatprep.subr.mxu0 0.0
    %433 = vmatpush1.msra.mxu0 0.0
    %434 = vmatprep.subr.mxu0 0.0
    %435 = vmatpush1.msra.mxu0 0.0
    %436 = vmatprep.subr.mxu0 0.0
    %437 = vmatpush1.msra.mxu0 0.0
    %438 = vmatprep.subr.mxu0 0.0
    %439 = vmatpush1.msra.mxu0 0.0
    %440 = vmatprep.subr.mxu0 0.0
    %441 = vmatpush1.msra.mxu0 0.0
    %442 = vmatprep.subr.mxu0 0.0
    %443 = vmatpush1.msra.mxu0 0.0
    %444 = vmatprep.subr.mxu0 0.0
    %445 = vmatpush1.msra.mxu0 0.0
    %446 = vmatprep.subr.mxu0 0.0
    %447 = vmatpush1.msra.mxu0 0.0
    %448 = vmatprep.subr.mxu0 0.0
    %449 = vmatpush1.msra.mxu0 0.0
    %450 = vmatprep.subr.mxu0 0.0
    %451 = vmatpush1.msra.mxu0 0.0
    %452 = vmatprep.subr.mxu0 0.0
    %453 = vmatpush1.msra.mxu0 0.0
    %454 = vmatprep.subr.mxu0 0.0
    %455 = vmatpush1.msra.mxu0 0.0
    %456 = vmatprep.subr.mxu0 0.0
    %457 = vmatpush1.msra.mxu0 0.0
    %458 = vmatprep.subr.mxu0 0.0
    %459 = vmatpush1.msra.mxu0 0.0
    %460 = vmatprep.subr.mxu0 0.0
    %461 = vmatpush1.msra.mxu0 0.0
    %462 = vmatprep.subr.mxu0 0.0
    %463 = vmatpush1.msra.mxu0 0.0
    %464 = vmatprep.subr.mxu0 0.0
    %465 = vmatpush1.msra.mxu0 0.0
    %466 = vmatprep.subr.mxu0 0.0
    %467 = vmatpush1.msra.mxu0 0.0
    %468 = vmatprep.subr.mxu0 0.0
    %469 = vmatpush1.msra.mxu0 0.0
    %470 = vmatprep.subr.mxu0 0.0
    %471 = vmatpush1.msra.mxu0 0.0
    %472 = vmatprep.subr.mxu0 0.0
    %473 = vmatpush1.msra.mxu0 0.0
    %474 = vmatprep.mubr.f32.mxu0 0.0
    %475 = vmatmul.mubr.f32.gmra.mrb[0].mxu0 %v405
    %v476 = vpop.f32.mrb[0].mxu0
    %v477 = vadd.f32 %v224, %v476
    %v478 = vpop.f32.mrb[0].mxu0
    %479 = vmatprep.mubr.f32.mxu0 0.0
    %480 = vmatmul.mubr.f32.gmra.mrb[0].mxu0 %v408
    %v481 = vpop.f32.mrb[0].mxu0
    %v482 = vadd.f32 %v225, %v481
    %v483 = vpop.f32.mrb[0].mxu0
    %484 = vdwg.mxu0
    %v485 = vxor.u32 %v477, 2147483648
    %v486 = vxor.u32 %v482, 2147483648
    %v487 = vmul.f32 %v485, 1.442695
    %v488 = vpow.pop %v487
    %v489 = vmul.f32 %v486, 1.442695
    %v490 = vpow.pop %v489
    %v491 = vadd.f32 %v488, 1.0
    %v492 = vadd.f32 %v490, 1.0
    %v493 = vrcp.pop %v491
    %v494 = vmul.f32 1.0, %v493
    %v495 = vrcp.pop %v492
    %v496 = vmul.f32 1.0, %v495
    %497 = vrot.lane.b32.xlu0 %v84, 32
    %v498 = vpop.permute.xlu0 %497
    %499 = vrot.lane.b32.xlu0 %v85, 32
    %v500 = vpop.permute.xlu0 %499
    %v503 = vmul.f32 %v494, %v498
    %v504 = vmul.f32 %v496, %v500
    %507 = vrot.lane.b32.xlu0 %v503, 96
    %v508 = vpop.permute.xlu0 %507
    %509 = vrot.lane.b32.xlu0 %v504, 96
    %v510 = vpop.permute.xlu0 %509
    %v511 = vsel %vm138, %v508, 0
    %v513 = vsel %vm138, %v510, 0
    %515 = vmatprep.subr.mxu0 0.0
    %516 = vmatpush1.msra.mxu0 %v104
    %517 = vmatprep.subr.mxu0 0.0
    %518 = vmatpush1.msra.mxu0 %v105
    %519 = vmatprep.subr.mxu0 0.0
    %520 = vmatpush1.msra.mxu0 %v106
    %521 = vmatprep.subr.mxu0 0.0
    %522 = vmatpush1.msra.mxu0 %v107
    %523 = vmatprep.subr.mxu0 0.0
    %524 = vmatpush1.msra.mxu0 0.0
    %525 = vmatprep.subr.mxu0 0.0
    %526 = vmatpush1.msra.mxu0 0.0
    %527 = vmatprep.subr.mxu0 0.0
    %528 = vmatpush1.msra.mxu0 0.0
    %529 = vmatprep.subr.mxu0 0.0
    %530 = vmatpush1.msra.mxu0 0.0
    %531 = vmatprep.subr.mxu0 0.0
    %532 = vmatpush1.msra.mxu0 0.0
    %533 = vmatprep.subr.mxu0 0.0
    %534 = vmatpush1.msra.mxu0 0.0
    %535 = vmatprep.subr.mxu0 0.0
    %536 = vmatpush1.msra.mxu0 0.0
    %537 = vmatprep.subr.mxu0 0.0
    %538 = vmatpush1.msra.mxu0 0.0
    %539 = vmatprep.subr.mxu0 0.0
    %540 = vmatpush1.msra.mxu0 0.0
    %541 = vmatprep.subr.mxu0 0.0
    %542 = vmatpush1.msra.mxu0 0.0
    %543 = vmatprep.subr.mxu0 0.0
    %544 = vmatpush1.msra.mxu0 0.0
    %545 = vmatprep.subr.mxu0 0.0
    %546 = vmatpush1.msra.mxu0 0.0
    %547 = vmatprep.subr.mxu0 0.0
    %548 = vmatpush1.msra.mxu0 0.0
    %549 = vmatprep.subr.mxu0 0.0
    %550 = vmatpush1.msra.mxu0 0.0
    %551 = vmatprep.subr.mxu0 0.0
    %552 = vmatpush1.msra.mxu0 0.0
    %553 = vmatprep.subr.mxu0 0.0
    %554 = vmatpush1.msra.mxu0 0.0
    %555 = vmatprep.subr.mxu0 0.0
    %556 = vmatpush1.msra.mxu0 0.0
    %557 = vmatprep.subr.mxu0 0.0
    %558 = vmatpush1.msra.mxu0 0.0
    %559 = vmatprep.subr.mxu0 0.0
    %560 = vmatpush1.msra.mxu0 0.0
    %561 = vmatprep.subr.mxu0 0.0
    %562 = vmatpush1.msra.mxu0 0.0
    %563 = vmatprep.subr.mxu0 0.0
    %564 = vmatpush1.msra.mxu0 0.0
    %565 = vmatprep.subr.mxu0 0.0
    %566 = vmatpush1.msra.mxu0 0.0
    %567 = vmatprep.subr.mxu0 0.0
    %568 = vmatpush1.msra.mxu0 0.0
    %569 = vmatprep.subr.mxu0 0.0
    %570 = vmatpush1.msra.mxu0 0.0
    %571 = vmatprep.subr.mxu0 0.0
    %572 = vmatpush1.msra.mxu0 0.0
    %573 = vmatprep.subr.mxu0 0.0
    %574 = vmatpush1.msra.mxu0 0.0
    %575 = vmatprep.subr.mxu0 0.0
    %576 = vmatpush1.msra.mxu0 0.0
    %577 = vmatprep.subr.mxu0 0.0
    %578 = vmatpush1.msra.mxu0 0.0
    %579 = vmatprep.mubr.f32.mxu0 0.0
    %580 = vmatmul.mubr.f32.gmra.mrb[0].mxu0 %v511
    %v581 = vpop.f32.mrb[0].mxu0
    %v582 = vadd.f32 0.0, %v581
    %v583 = vpop.f32.mrb[0].mxu0
    %584 = vmatprep.mubr.f32.mxu0 0.0
    %585 = vmatmul.mubr.f32.gmra.mrb[0].mxu0 %v513
    %v586 = vpop.f32.mrb[0].mxu0
    %v587 = vadd.f32 0.0, %v586
    %v588 = vpop.f32.mrb[0].mxu0
    %589 = vdwg.mxu0
    %592 = vrot.lane.b32.xlu0 %v582, 64
    %v593 = vpop.permute.xlu0 %592
    %594 = vrot.lane.b32.xlu0 %v587, 64
    %v595 = vpop.permute.xlu0 %594
    %v598 = vadd.f32 %v477, %v593
    %v599 = vadd.f32 %v482, %v595
    %v600 = vtanh.pop %v598
    %v601 = vtanh.pop %v599
    %602 = vrot.lane.b32.xlu0 %v84, 64
    %v603 = vpop.permute.xlu0 %602
    %604 = vrot.lane.b32.xlu0 %v85, 64
    %v605 = vpop.permute.xlu0 %604
    %v608 = vsub.f32 %v600, %v603
    %v609 = vsub.f32 %v601, %v605
    %612 = vrot.lane.b32.xlu0 %v608, 64
    %v613 = vpop.permute.xlu0 %612
    %614 = vrot.lane.b32.xlu0 %v609, 64
    %v615 = vpop.permute.xlu0 %614
    %v618 = vmul.f32 %v494, %v613
    %v619 = vmul.f32 %v496, %v615
    %v620 = vadd.f32 %v84, %v618
    %v621 = vadd.f32 %v85, %v619
    %v623 = vsel %vm138, %v620, 0
    %v626 = vsel %vm138, %v621, 0
    %628 = vmatprep.subr.mxu0 %v97
    %629 = vmatpush1.msra.mxu0 %v96
    %630 = vmatprep.subr.mxu0 %v99
    %631 = vmatpush1.msra.mxu0 %v98
    %632 = vmatprep.subr.mxu0 %v101
    %633 = vmatpush1.msra.mxu0 %v100
    %634 = vmatprep.subr.mxu0 %v103
    %635 = vmatpush1.msra.mxu0 %v102
    %636 = vmatprep.subr.mxu0 0.0
    %637 = vmatpush1.msra.mxu0 0.0
    %638 = vmatprep.subr.mxu0 0.0
    %639 = vmatpush1.msra.mxu0 0.0
    %640 = vmatprep.subr.mxu0 0.0
    %641 = vmatpush1.msra.mxu0 0.0
    %642 = vmatprep.subr.mxu0 0.0
    %643 = vmatpush1.msra.mxu0 0.0
    %644 = vmatprep.subr.mxu0 0.0
    %645 = vmatpush1.msra.mxu0 0.0
    %646 = vmatprep.subr.mxu0 0.0
    %647 = vmatpush1.msra.mxu0 0.0
    %648 = vmatprep.subr.mxu0 0.0
    %649 = vmatpush1.msra.mxu0 0.0
    %650 = vmatprep.subr.mxu0 0.0
    %651 = vmatpush1.msra.mxu0 0.0
    %652 = vmatprep.subr.mxu0 0.0
    %653 = vmatpush1.msra.mxu0 0.0
    %654 = vmatprep.subr.mxu0 0.0
    %655 = vmatpush1.msra.mxu0 0.0
    %656 = vmatprep.subr.mxu0 0.0
    %657 = vmatpush1.msra.mxu0 0.0
    %658 = vmatprep.subr.mxu0 0.0
    %659 = vmatpush1.msra.mxu0 0.0
    %660 = vmatprep.subr.mxu0 0.0
    %661 = vmatpush1.msra.mxu0 0.0
    %662 = vmatprep.subr.mxu0 0.0
    %663 = vmatpush1.msra.mxu0 0.0
    %664 = vmatprep.subr.mxu0 0.0
    %665 = vmatpush1.msra.mxu0 0.0
    %666 = vmatprep.subr.mxu0 0.0
    %667 = vmatpush1.msra.mxu0 0.0
    %668 = vmatprep.subr.mxu0 0.0
    %669 = vmatpush1.msra.mxu0 0.0
    %670 = vmatprep.subr.mxu0 0.0
    %671 = vmatpush1.msra.mxu0 0.0
    %672 = vmatprep.subr.mxu0 0.0
    %673 = vmatpush1.msra.mxu0 0.0
    %674 = vmatprep.subr.mxu0 0.0
    %675 = vmatpush1.msra.mxu0 0.0
    %676 = vmatprep.subr.mxu0 0.0
    %677 = vmatpush1.msra.mxu0 0.0
    %678 = vmatprep.subr.mxu0 0.0
    %679 = vmatpush1.msra.mxu0 0.0
    %680 = vmatprep.subr.mxu0 0.0
    %681 = vmatpush1.msra.mxu0 0.0
    %682 = vmatprep.subr.mxu0 0.0
    %683 = vmatpush1.msra.mxu0 0.0
    %684 = vmatprep.subr.mxu0 0.0
    %685 = vmatpush1.msra.mxu0 0.0
    %686 = vmatprep.subr.mxu0 0.0
    %687 = vmatpush1.msra.mxu0 0.0
    %688 = vmatprep.subr.mxu0 0.0
    %689 = vmatpush1.msra.mxu0 0.0
    %690 = vmatprep.subr.mxu0 0.0
    %691 = vmatpush1.msra.mxu0 0.0
    %692 = vmatprep.mubr.f32.mxu0 0.0
    %693 = vmatmul.mubr.f32.gmra.mrb[0].mxu0 %v623
    %v694 = vpop.f32.mrb[0].mxu0
    %v695 = vadd.f32 0.0, %v694
    %v696 = vpop.f32.mrb[0].mxu0
    %v697 = vadd.f32 0.0, %v696
    %698 = vmatprep.mubr.f32.mxu0 0.0
    %699 = vmatmul.mubr.f32.gmra.mrb[0].mxu0 %v626
    %v700 = vpop.f32.mrb[0].mxu0
    %v701 = vadd.f32 0.0, %v700
    %v702 = vpop.f32.mrb[0].mxu0
    %v703 = vadd.f32 0.0, %v702
    %704 = vdwg.mxu0
    %v705 = vadd.f32 %v695, %v112
    %v706 = vadd.f32 %v701, %v112
    %v707 = vadd.f32 %v697, %v127
    %v708 = vadd.f32 %v703, %v127
    %v709 = vmul.f32 %v705, %v132
    %v710 = vmul.f32 %v706, %v132
    %v711 = vsub.f32 %v705, %v709
    %v712 = vsub.f32 %v706, %v710
    %713 = vadd.xlane.f32.xlu0 %v709
    %v714 = vpop.xlane.xlu0 %713
    %715 = vadd.xlane.f32.xlu0 %v710
    %v716 = vpop.xlane.xlu0 %715
    %v717 = vmul.f32 %v714, 0.015625
    %v718 = vmul.f32 %v716, 0.015625
    %719 = vadd.xlane.f32.xlu0 %v711
    %v720 = vpop.xlane.xlu0 %719
    %721 = vadd.xlane.f32.xlu0 %v712
    %v722 = vpop.xlane.xlu0 %721
    %v723 = vmul.f32 %v720, 0.015625
    %v724 = vmul.f32 %v722, 0.015625
    %v725 = vmul.f32 %v709, %v709
    %v726 = vmul.f32 %v710, %v710
    %727 = vadd.xlane.f32.xlu0 %v725
    %v728 = vpop.xlane.xlu0 %727
    %729 = vadd.xlane.f32.xlu0 %v726
    %v730 = vpop.xlane.xlu0 %729
    %v731 = vmul.f32 %v728, 0.015625
    %v732 = vmul.f32 %v730, 0.015625
    %v733 = vmul.f32 %v711, %v711
    %v734 = vmul.f32 %v712, %v712
    %735 = vadd.xlane.f32.xlu0 %v733
    %v736 = vpop.xlane.xlu0 %735
    %737 = vadd.xlane.f32.xlu0 %v734
    %v738 = vpop.xlane.xlu0 %737
    %v739 = vmul.f32 %v736, 0.015625
    %v740 = vmul.f32 %v738, 0.015625
    %v741 = vmul.f32 %v717, %v717
    %v742 = vmul.f32 %v718, %v718
    %v743 = vsub.f32 %v731, %v741
    %v744 = vsub.f32 %v732, %v742
    %v745 = vadd.f32 %v743, 1e-05
    %v746 = vadd.f32 %v744, 1e-05
    %v747 = vrsqrt.pop %v745
    %v748 = vrsqrt.pop %v746
    %v749 = vmul.f32 %v723, %v723
    %v750 = vmul.f32 %v724, %v724
    %v751 = vsub.f32 %v739, %v749
    %v752 = vsub.f32 %v740, %v750
    %v753 = vadd.f32 %v751, 1e-05
    %v754 = vadd.f32 %v752, 1e-05
    %v755 = vrsqrt.pop %v753
    %v756 = vrsqrt.pop %v754
    %v757 = vsub.f32 %v717, %v723
    %v758 = vsub.f32 %v718, %v724
    %v759 = vmul.f32 %v757, %v132
    %v760 = vmul.f32 %v758, %v132
    %v761 = vadd.f32 %v723, %v759
    %v762 = vadd.f32 %v724, %v760
    %v763 = vmul.f32 %v747, %v117
    %v764 = vmul.f32 %v748, %v117
    %v765 = vmul.f32 %v755, %v137
    %v766 = vmul.f32 %v756, %v137
    %v767 = vadd.f32 %v763, %v765
    %v768 = vadd.f32 %v764, %v766
    %v769 = vsub.f32 %v705, %v761
    %v770 = vsub.f32 %v706, %v762
    %v771 = vmul.f32 %v769, %v767
    %v772 = vmul.f32 %v770, %v768
    %v773 = vadd.f32 %v771, %v122
    %v774 = vadd.f32 %v772, %v122
    %775 = vst.msk [vmem:[#allocation2] sm:$0xff] %vm138, %v773
    %776 = vst.msk [vmem:[#allocation2 + $0x8] sm:$0xff] %vm138, %v774
    %779 = vrot.lane.b32.xlu0 %v773, 96
    %v780 = vpop.permute.xlu0 %779
    %781 = vrot.lane.b32.xlu0 %v774, 96
    %v782 = vpop.permute.xlu0 %781
    %785 = vst.msk [vmem:[#allocation2 + $0x10] sm:$0xff] %vm138, %v780
    %786 = vst.msk [vmem:[#allocation2 + $0x18] sm:$0xff] %vm138, %v782
    %787 = vst.msk [vmem:[#allocation2 + $0x20] sm:$0xff] %vm304, %v780
    %788 = vst.msk [vmem:[#allocation2 + $0x28] sm:$0xff] %vm304, %v782
    %789 = vrot.lane.b32.xlu0 %v773, 64
    %v790 = vpop.permute.xlu0 %789
    %791 = vrot.lane.b32.xlu0 %v774, 64
    %v792 = vpop.permute.xlu0 %791
    %795 = vst.msk [vmem:[#allocation2 + $0x30] sm:$0xff] %vm304, %v790
    %796 = vst.msk [vmem:[#allocation2 + $0x38] sm:$0xff] %vm304, %v792
    %v797 = vld [vmem:[#allocation2] sm:$0xff]
    %v798 = vld [vmem:[#allocation2 + $0x8] sm:$0xff]
    %v799 = vld [vmem:[#allocation2 + $0x10] sm:$0xff]
    %v800 = vld [vmem:[#allocation2 + $0x18] sm:$0xff]
    %v801 = vld [vmem:[#allocation2 + $0x20] sm:$0xff]
    %v802 = vld [vmem:[#allocation2 + $0x28] sm:$0xff]
    %v803 = vld [vmem:[#allocation2 + $0x30] sm:$0xff]
    %v804 = vld [vmem:[#allocation2 + $0x38] sm:$0xff]
    %805 = vmatprep.subr.mxu0 0.0
    %806 = vmatpush1.msra.mxu0 %v797
    %807 = vmatprep.subr.mxu0 0.0
    %808 = vmatpush1.msra.mxu0 %v798
    %809 = vmatprep.subr.mxu0 0.0
    %810 = vmatpush1.msra.mxu0 %v799
    %811 = vmatprep.subr.mxu0 0.0
    %812 = vmatpush1.msra.mxu0 %v800
    %813 = vmatprep.subr.mxu0 0.0
    %814 = vmatpush1.msra.mxu0 %v801
    %815 = vmatprep.subr.mxu0 0.0
    %816 = vmatpush1.msra.mxu0 %v802
    %817 = vmatprep.subr.mxu0 0.0
    %818 = vmatpush1.msra.mxu0 %v803
    %819 = vmatprep.subr.mxu0 0.0
    %820 = vmatpush1.msra.mxu0 %v804
    %821 = vmatprep.subr.mxu0 0.0
    %822 = vmatpush1.msra.mxu0 0.0
    %823 = vmatprep.subr.mxu0 0.0
    %824 = vmatpush1.msra.mxu0 0.0
    %825 = vmatprep.subr.mxu0 0.0
    %826 = vmatpush1.msra.mxu0 0.0
    %827 = vmatprep.subr.mxu0 0.0
    %828 = vmatpush1.msra.mxu0 0.0
    %829 = vmatprep.subr.mxu0 0.0
    %830 = vmatpush1.msra.mxu0 0.0
    %831 = vmatprep.subr.mxu0 0.0
    %832 = vmatpush1.msra.mxu0 0.0
    %833 = vmatprep.subr.mxu0 0.0
    %834 = vmatpush1.msra.mxu0 0.0
    %835 = vmatprep.subr.mxu0 0.0
    %836 = vmatpush1.msra.mxu0 0.0
    %837 = vmatprep.subr.mxu0 0.0
    %838 = vmatpush1.msra.mxu0 0.0
    %839 = vmatprep.subr.mxu0 0.0
    %840 = vmatpush1.msra.mxu0 0.0
    %841 = vmatprep.subr.mxu0 0.0
    %842 = vmatpush1.msra.mxu0 0.0
    %843 = vmatprep.subr.mxu0 0.0
    %844 = vmatpush1.msra.mxu0 0.0
    %845 = vmatprep.subr.mxu0 0.0
    %846 = vmatpush1.msra.mxu0 0.0
    %847 = vmatprep.subr.mxu0 0.0
    %848 = vmatpush1.msra.mxu0 0.0
    %849 = vmatprep.subr.mxu0 0.0
    %850 = vmatpush1.msra.mxu0 0.0
    %851 = vmatprep.subr.mxu0 0.0
    %852 = vmatpush1.msra.mxu0 0.0
    %853 = vmatprep.subr.mxu0 0.0
    %854 = vmatpush1.msra.mxu0 0.0
    %855 = vmatprep.subr.mxu0 0.0
    %856 = vmatpush1.msra.mxu0 0.0
    %857 = vmatprep.subr.mxu0 0.0
    %858 = vmatpush1.msra.mxu0 0.0
    %859 = vmatprep.subr.mxu0 0.0
    %860 = vmatpush1.msra.mxu0 0.0
    %861 = vmatprep.subr.mxu0 0.0
    %862 = vmatpush1.msra.mxu0 0.0
    %863 = vmatprep.subr.mxu0 0.0
    %864 = vmatpush1.msra.mxu0 0.0
    %865 = vmatprep.subr.mxu0 0.0
    %866 = vmatpush1.msra.mxu0 0.0
    %867 = vmatprep.subr.mxu0 0.0
    %868 = vmatpush1.msra.mxu0 0.0
    %869 = vmatprep.mubr.f32.mxu0 0.0
    %870 = vmatmul.mubr.f32.gmra.mrb[0].mxu0 %v324
    %v871 = vpop.f32.mrb[0].mxu0
    %v872 = vadd.f32 0.0, %v871
    %v873 = vpop.f32.mrb[0].mxu0
    %874 = vmatprep.mubr.f32.mxu0 0.0
    %875 = vmatmul.mubr.f32.gmra.mrb[0].mxu0 %v327
    %v876 = vpop.f32.mrb[0].mxu0
    %v877 = vadd.f32 0.0, %v876
    %v878 = vpop.f32.mrb[0].mxu0
    %879 = vdwg.mxu0
    %v881 = vsel %vm75, %v872, 0
    %v884 = vsel %vm75, %v877, 0
    %886 = vmatprep.subr.mxu0 0.0
    %887 = vmatpush1.msra.mxu0 %v88
    %888 = vmatprep.subr.mxu0 0.0
    %889 = vmatpush1.msra.mxu0 %v89
    %890 = vmatprep.subr.mxu0 0.0
    %891 = vmatpush1.msra.mxu0 %v90
    %892 = vmatprep.subr.mxu0 0.0
    %893 = vmatpush1.msra.mxu0 %v91
    %894 = vmatprep.subr.mxu0 0.0
    %895 = vmatpush1.msra.mxu0 %v92
    %896 = vmatprep.subr.mxu0 0.0
    %897 = vmatpush1.msra.mxu0 %v93
    %898 = vmatprep.subr.mxu0 0.0
    %899 = vmatpush1.msra.mxu0 %v94
    %900 = vmatprep.subr.mxu0 0.0
    %901 = vmatpush1.msra.mxu0 %v95
    %902 = vmatprep.subr.mxu0 0.0
    %903 = vmatpush1.msra.mxu0 0.0
    %904 = vmatprep.subr.mxu0 0.0
    %905 = vmatpush1.msra.mxu0 0.0
    %906 = vmatprep.subr.mxu0 0.0
    %907 = vmatpush1.msra.mxu0 0.0
    %908 = vmatprep.subr.mxu0 0.0
    %909 = vmatpush1.msra.mxu0 0.0
    %910 = vmatprep.subr.mxu0 0.0
    %911 = vmatpush1.msra.mxu0 0.0
    %912 = vmatprep.subr.mxu0 0.0
    %913 = vmatpush1.msra.mxu0 0.0
    %914 = vmatprep.subr.mxu0 0.0
    %915 = vmatpush1.msra.mxu0 0.0
    %916 = vmatprep.subr.mxu0 0.0
    %917 = vmatpush1.msra.mxu0 0.0
    %918 = vmatprep.subr.mxu0 0.0
    %919 = vmatpush1.msra.mxu0 0.0
    %920 = vmatprep.subr.mxu0 0.0
    %921 = vmatpush1.msra.mxu0 0.0
    %922 = vmatprep.subr.mxu0 0.0
    %923 = vmatpush1.msra.mxu0 0.0
    %924 = vmatprep.subr.mxu0 0.0
    %925 = vmatpush1.msra.mxu0 0.0
    %926 = vmatprep.subr.mxu0 0.0
    %927 = vmatpush1.msra.mxu0 0.0
    %928 = vmatprep.subr.mxu0 0.0
    %929 = vmatpush1.msra.mxu0 0.0
    %930 = vmatprep.subr.mxu0 0.0
    %931 = vmatpush1.msra.mxu0 0.0
    %932 = vmatprep.subr.mxu0 0.0
    %933 = vmatpush1.msra.mxu0 0.0
    %934 = vmatprep.subr.mxu0 0.0
    %935 = vmatpush1.msra.mxu0 0.0
    %936 = vmatprep.subr.mxu0 0.0
    %937 = vmatpush1.msra.mxu0 0.0
    %938 = vmatprep.subr.mxu0 0.0
    %939 = vmatpush1.msra.mxu0 0.0
    %940 = vmatprep.subr.mxu0 0.0
    %941 = vmatpush1.msra.mxu0 0.0
    %942 = vmatprep.subr.mxu0 0.0
    %943 = vmatpush1.msra.mxu0 0.0
    %944 = vmatprep.subr.mxu0 0.0
    %945 = vmatpush1.msra.mxu0 0.0
    %946 = vmatprep.subr.mxu0 0.0
    %947 = vmatpush1.msra.mxu0 0.0
    %948 = vmatprep.subr.mxu0 0.0
    %949 = vmatpush1.msra.mxu0 0.0
    %950 = vmatprep.mubr.f32.mxu0 0.0
    %951 = vmatmul.mubr.f32.gmra.mrb[0].mxu0 %v881
    %v952 = vpop.f32.mrb[0].mxu0
    %v953 = vadd.f32 %v707, %v952
    %v954 = vpop.f32.mrb[0].mxu0
    %955 = vmatprep.mubr.f32.mxu0 0.0
    %956 = vmatmul.mubr.f32.gmra.mrb[0].mxu0 %v884
    %v957 = vpop.f32.mrb[0].mxu0
    %v958 = vadd.f32 %v708, %v957
    %v959 = vpop.f32.mrb[0].mxu0
    %960 = vdwg.mxu0
    %v961 = vxor.u32 %v953, 2147483648
    %v962 = vxor.u32 %v958, 2147483648
    %v963 = vmul.f32 %v961, 1.442695
    %v964 = vpow.pop %v963
    %v965 = vmul.f32 %v962, 1.442695
    %v966 = vpow.pop %v965
    %v967 = vadd.f32 %v964, 1.0
    %v968 = vadd.f32 %v966, 1.0
    %v969 = vrcp.pop %v967
    %v970 = vmul.f32 1.0, %v969
    %v971 = vrcp.pop %v968
    %v972 = vmul.f32 1.0, %v971
    %973 = vrot.lane.b32.xlu0 %v620, 32
    %v974 = vpop.permute.xlu0 %973
    %975 = vrot.lane.b32.xlu0 %v621, 32
    %v976 = vpop.permute.xlu0 %975
    %v979 = vmul.f32 %v970, %v974
    %v980 = vmul.f32 %v972, %v976
    %983 = vrot.lane.b32.xlu0 %v979, 96
    %v984 = vpop.permute.xlu0 %983
    %985 = vrot.lane.b32.xlu0 %v980, 96
    %v986 = vpop.permute.xlu0 %985
    %v987 = vsel %vm138, %v984, 0
    %v989 = vsel %vm138, %v986, 0
    %991 = vmatprep.subr.mxu0 0.0
    %992 = vmatpush1.msra.mxu0 %v104
    %993 = vmatprep.subr.mxu0 0.0
    %994 = vmatpush1.msra.mxu0 %v105
    %995 = vmatprep.subr.mxu0 0.0
    %996 = vmatpush1.msra.mxu0 %v106
    %997 = vmatprep.subr.mxu0 0.0
    %998 = vmatpush1.msra.mxu0 %v107
    %999 = vmatprep.subr.mxu0 0.0
    %1000 = vmatpush1.msra.mxu0 0.0
    %1001 = vmatprep.subr.mxu0 0.0
    %1002 = vmatpush1.msra.mxu0 0.0
    %1003 = vmatprep.subr.mxu0 0.0
    %1004 = vmatpush1.msra.mxu0 0.0
    %1005 = vmatprep.subr.mxu0 0.0
    %1006 = vmatpush1.msra.mxu0 0.0
    %1007 = vmatprep.subr.mxu0 0.0
    %1008 = vmatpush1.msra.mxu0 0.0
    %1009 = vmatprep.subr.mxu0 0.0
    %1010 = vmatpush1.msra.mxu0 0.0
    %1011 = vmatprep.subr.mxu0 0.0
    %1012 = vmatpush1.msra.mxu0 0.0
    %1013 = vmatprep.subr.mxu0 0.0
    %1014 = vmatpush1.msra.mxu0 0.0
    %1015 = vmatprep.subr.mxu0 0.0
    %1016 = vmatpush1.msra.mxu0 0.0
    %1017 = vmatprep.subr.mxu0 0.0
    %1018 = vmatpush1.msra.mxu0 0.0
    %1019 = vmatprep.subr.mxu0 0.0
    %1020 = vmatpush1.msra.mxu0 0.0
    %1021 = vmatprep.subr.mxu0 0.0
    %1022 = vmatpush1.msra.mxu0 0.0
    %1023 = vmatprep.subr.mxu0 0.0
    %1024 = vmatpush1.msra.mxu0 0.0
    %1025 = vmatprep.subr.mxu0 0.0
    %1026 = vmatpush1.msra.mxu0 0.0
    %1027 = vmatprep.subr.mxu0 0.0
    %1028 = vmatpush1.msra.mxu0 0.0
    %1029 = vmatprep.subr.mxu0 0.0
    %1030 = vmatpush1.msra.mxu0 0.0
    %1031 = vmatprep.subr.mxu0 0.0
    %1032 = vmatpush1.msra.mxu0 0.0
    %1033 = vmatprep.subr.mxu0 0.0
    %1034 = vmatpush1.msra.mxu0 0.0
    %1035 = vmatprep.subr.mxu0 0.0
    %1036 = vmatpush1.msra.mxu0 0.0
    %1037 = vmatprep.subr.mxu0 0.0
    %1038 = vmatpush1.msra.mxu0 0.0
    %1039 = vmatprep.subr.mxu0 0.0
    %1040 = vmatpush1.msra.mxu0 0.0
    %1041 = vmatprep.subr.mxu0 0.0
    %1042 = vmatpush1.msra.mxu0 0.0
    %1043 = vmatprep.subr.mxu0 0.0
    %1044 = vmatpush1.msra.mxu0 0.0
    %1045 = vmatprep.subr.mxu0 0.0
    %1046 = vmatpush1.msra.mxu0 0.0
    %1047 = vmatprep.subr.mxu0 0.0
    %1048 = vmatpush1.msra.mxu0 0.0
    %1049 = vmatprep.subr.mxu0 0.0
    %1050 = vmatpush1.msra.mxu0 0.0
    %1051 = vmatprep.subr.mxu0 0.0
    %1052 = vmatpush1.msra.mxu0 0.0
    %1053 = vmatprep.subr.mxu0 0.0
    %1054 = vmatpush1.msra.mxu0 0.0
    %1055 = vmatprep.mubr.f32.mxu0 0.0
    %1056 = vmatmul.mubr.f32.gmra.mrb[0].mxu0 %v987
    %v1057 = vpop.f32.mrb[0].mxu0
    %v1058 = vadd.f32 0.0, %v1057
    %v1059 = vpop.f32.mrb[0].mxu0
    %1060 = vmatprep.mubr.f32.mxu0 0.0
    %1061 = vmatmul.mubr.f32.gmra.mrb[0].mxu0 %v989
    %v1062 = vpop.f32.mrb[0].mxu0
    %v1063 = vadd.f32 0.0, %v1062
    %v1064 = vpop.f32.mrb[0].mxu0
    %1065 = vdwg.mxu0
    %1068 = vrot.lane.b32.xlu0 %v1058, 64
    %v1069 = vpop.permute.xlu0 %1068
    %1070 = vrot.lane.b32.xlu0 %v1063, 64
    %v1071 = vpop.permute.xlu0 %1070
    %v1074 = vadd.f32 %v953, %v1069
    %v1075 = vadd.f32 %v958, %v1071
    %v1076 = vtanh.pop %v1074
    %v1077 = vtanh.pop %v1075
    %1078 = vrot.lane.b32.xlu0 %v620, 64
    %v1079 = vpop.permute.xlu0 %1078
    %1080 = vrot.lane.b32.xlu0 %v621, 64
    %v1081 = vpop.permute.xlu0 %1080
    %v1084 = vsub.f32 %v1076, %v1079
    %v1085 = vsub.f32 %v1077, %v1081
    %1088 = vrot.lane.b32.xlu0 %v1084, 64
    %v1089 = vpop.permute.xlu0 %1088
    %1090 = vrot.lane.b32.xlu0 %v1085, 64
    %v1091 = vpop.permute.xlu0 %1090
    %v1094 = vmul.f32 %v970, %v1089
    %v1095 = vmul.f32 %v972, %v1091
    %v1096 = vadd.f32 %v620, %v1094
    %v1097 = vadd.f32 %v621, %v1095
    %v1099 = vsel %vm138, %v1096, 0
    %v1102 = vsel %vm138, %v1097, 0
    %1104 = vmatprep.subr.mxu0 %v97
    %1105 = vmatpush1.msra.mxu0 %v96
    %1106 = vmatprep.subr.mxu0 %v99
    %1107 = vmatpush1.msra.mxu0 %v98
    %1108 = vmatprep.subr.mxu0 %v101
    %1109 = vmatpush1.msra.mxu0 %v100
    %1110 = vmatprep.subr.mxu0 %v103
    %1111 = vmatpush1.msra.mxu0 %v102
    %1112 = vmatprep.subr.mxu0 0.0
    %1113 = vmatpush1.msra.mxu0 0.0
    %1114 = vmatprep.subr.mxu0 0.0
    %1115 = vmatpush1.msra.mxu0 0.0
    %1116 = vmatprep.subr.mxu0 0.0
    %1117 = vmatpush1.msra.mxu0 0.0
    %1118 = vmatprep.subr.mxu0 0.0
    %1119 = vmatpush1.msra.mxu0 0.0
    %1120 = vmatprep.subr.mxu0 0.0
    %1121 = vmatpush1.msra.mxu0 0.0
    %1122 = vmatprep.subr.mxu0 0.0
    %1123 = vmatpush1.msra.mxu0 0.0
    %1124 = vmatprep.subr.mxu0 0.0
    %1125 = vmatpush1.msra.mxu0 0.0
    %1126 = vmatprep.subr.mxu0 0.0
    %1127 = vmatpush1.msra.mxu0 0.0
    %1128 = vmatprep.subr.mxu0 0.0
    %1129 = vmatpush1.msra.mxu0 0.0
    %1130 = vmatprep.subr.mxu0 0.0
    %1131 = vmatpush1.msra.mxu0 0.0
    %1132 = vmatprep.subr.mxu0 0.0
    %1133 = vmatpush1.msra.mxu0 0.0
    %1134 = vmatprep.subr.mxu0 0.0
    %1135 = vmatpush1.msra.mxu0 0.0
    %1136 = vmatprep.subr.mxu0 0.0
    %1137 = vmatpush1.msra.mxu0 0.0
    %1138 = vmatprep.subr.mxu0 0.0
    %1139 = vmatpush1.msra.mxu0 0.0
    %1140 = vmatprep.subr.mxu0 0.0
    %1141 = vmatpush1.msra.mxu0 0.0
    %1142 = vmatprep.subr.mxu0 0.0
    %1143 = vmatpush1.msra.mxu0 0.0
    %1144 = vmatprep.subr.mxu0 0.0
    %1145 = vmatpush1.msra.mxu0 0.0
    %1146 = vmatprep.subr.mxu0 0.0
    %1147 = vmatpush1.msra.mxu0 0.0
    %1148 = vmatprep.subr.mxu0 0.0
    %1149 = vmatpush1.msra.mxu0 0.0
    %1150 = vmatprep.subr.mxu0 0.0
    %1151 = vmatpush1.msra.mxu0 0.0
    %1152 = vmatprep.subr.mxu0 0.0
    %1153 = vmatpush1.msra.mxu0 0.0
    %1154 = vmatprep.subr.mxu0 0.0
    %1155 = vmatpush1.msra.mxu0 0.0
    %1156 = vmatprep.subr.mxu0 0.0
    %1157 = vmatpush1.msra.mxu0 0.0
    %1158 = vmatprep.subr.mxu0 0.0
    %1159 = vmatpush1.msra.mxu0 0.0
    %1160 = vmatprep.subr.mxu0 0.0
    %1161 = vmatpush1.msra.mxu0 0.0
    %1162 = vmatprep.subr.mxu0 0.0
    %1163 = vmatpush1.msra.mxu0 0.0
    %1164 = vmatprep.subr.mxu0 0.0
    %1165 = vmatpush1.msra.mxu0 0.0
    %1166 = vmatprep.subr.mxu0 0.0
    %1167 = vmatpush1.msra.mxu0 0.0
    %1168 = vmatprep.mubr.f32.mxu0 0.0
    %1169 = vmatmul.mubr.f32.gmra.mrb[0].mxu0 %v1099
    %v1170 = vpop.f32.mrb[0].mxu0
    %v1171 = vadd.f32 0.0, %v1170
    %v1172 = vpop.f32.mrb[0].mxu0
    %v1173 = vadd.f32 0.0, %v1172
    %1174 = vmatprep.mubr.f32.mxu0 0.0
    %1175 = vmatmul.mubr.f32.gmra.mrb[0].mxu0 %v1102
    %v1176 = vpop.f32.mrb[0].mxu0
    %v1177 = vadd.f32 0.0, %v1176
    %v1178 = vpop.f32.mrb[0].mxu0
    %v1179 = vadd.f32 0.0, %v1178
    %1180 = vdwg.mxu0
    %v1181 = vadd.f32 %v1171, %v112
    %v1182 = vadd.f32 %v1177, %v112
    %v1183 = vadd.f32 %v1173, %v127
    %v1184 = vadd.f32 %v1179, %v127
    %v1185 = vmul.f32 %v1181, %v132
    %v1186 = vmul.f32 %v1182, %v132
    %v1187 = vsub.f32 %v1181, %v1185
    %v1188 = vsub.f32 %v1182, %v1186
    %1189 = vadd.xlane.f32.xlu0 %v1185
    %v1190 = vpop.xlane.xlu0 %1189
    %1191 = vadd.xlane.f32.xlu0 %v1186
    %v1192 = vpop.xlane.xlu0 %1191
    %v1193 = vmul.f32 %v1190, 0.015625
    %v1194 = vmul.f32 %v1192, 0.015625
    %1195 = vadd.xlane.f32.xlu0 %v1187
    %v1196 = vpop.xlane.xlu0 %1195
    %1197 = vadd.xlane.f32.xlu0 %v1188
    %v1198 = vpop.xlane.xlu0 %1197
    %v1199 = vmul.f32 %v1196, 0.015625
    %v1200 = vmul.f32 %v1198, 0.015625
    %v1201 = vmul.f32 %v1185, %v1185
    %v1202 = vmul.f32 %v1186, %v1186
    %1203 = vadd.xlane.f32.xlu0 %v1201
    %v1204 = vpop.xlane.xlu0 %1203
    %1205 = vadd.xlane.f32.xlu0 %v1202
    %v1206 = vpop.xlane.xlu0 %1205
    %v1207 = vmul.f32 %v1204, 0.015625
    %v1208 = vmul.f32 %v1206, 0.015625
    %v1209 = vmul.f32 %v1187, %v1187
    %v1210 = vmul.f32 %v1188, %v1188
    %1211 = vadd.xlane.f32.xlu0 %v1209
    %v1212 = vpop.xlane.xlu0 %1211
    %1213 = vadd.xlane.f32.xlu0 %v1210
    %v1214 = vpop.xlane.xlu0 %1213
    %v1215 = vmul.f32 %v1212, 0.015625
    %v1216 = vmul.f32 %v1214, 0.015625
    %v1217 = vmul.f32 %v1193, %v1193
    %v1218 = vmul.f32 %v1194, %v1194
    %v1219 = vsub.f32 %v1207, %v1217
    %v1220 = vsub.f32 %v1208, %v1218
    %v1221 = vadd.f32 %v1219, 1e-05
    %v1222 = vadd.f32 %v1220, 1e-05
    %v1223 = vrsqrt.pop %v1221
    %v1224 = vrsqrt.pop %v1222
    %v1225 = vmul.f32 %v1199, %v1199
    %v1226 = vmul.f32 %v1200, %v1200
    %v1227 = vsub.f32 %v1215, %v1225
    %v1228 = vsub.f32 %v1216, %v1226
    %v1229 = vadd.f32 %v1227, 1e-05
    %v1230 = vadd.f32 %v1228, 1e-05
    %v1231 = vrsqrt.pop %v1229
    %v1232 = vrsqrt.pop %v1230
    %v1233 = vsub.f32 %v1193, %v1199
    %v1234 = vsub.f32 %v1194, %v1200
    %v1235 = vmul.f32 %v1233, %v132
    %v1236 = vmul.f32 %v1234, %v132
    %v1237 = vadd.f32 %v1199, %v1235
    %v1238 = vadd.f32 %v1200, %v1236
    %v1239 = vmul.f32 %v1223, %v117
    %v1240 = vmul.f32 %v1224, %v117
    %v1241 = vmul.f32 %v1231, %v137
    %v1242 = vmul.f32 %v1232, %v137
    %v1243 = vadd.f32 %v1239, %v1241
    %v1244 = vadd.f32 %v1240, %v1242
    %v1245 = vsub.f32 %v1181, %v1237
    %v1246 = vsub.f32 %v1182, %v1238
    %v1247 = vmul.f32 %v1245, %v1243
    %v1248 = vmul.f32 %v1246, %v1244
    %v1249 = vadd.f32 %v1247, %v122
    %v1250 = vadd.f32 %v1248, %v122
    %1251 = vst.msk [vmem:[#allocation2] sm:$0xff] %vm138, %v1249
    %1252 = vst.msk [vmem:[#allocation2 + $0x8] sm:$0xff] %vm138, %v1250
    %1255 = vrot.lane.b32.xlu0 %v1249, 96
    %v1256 = vpop.permute.xlu0 %1255
    %1257 = vrot.lane.b32.xlu0 %v1250, 96
    %v1258 = vpop.permute.xlu0 %1257
    %1261 = vst.msk [vmem:[#allocation2 + $0x10] sm:$0xff] %vm138, %v1256
    %1262 = vst.msk [vmem:[#allocation2 + $0x18] sm:$0xff] %vm138, %v1258
    %1263 = vst.msk [vmem:[#allocation2 + $0x20] sm:$0xff] %vm304, %v1256
    %1264 = vst.msk [vmem:[#allocation2 + $0x28] sm:$0xff] %vm304, %v1258
    %1265 = vrot.lane.b32.xlu0 %v1249, 64
    %v1266 = vpop.permute.xlu0 %1265
    %1267 = vrot.lane.b32.xlu0 %v1250, 64
    %v1268 = vpop.permute.xlu0 %1267
    %1271 = vst.msk [vmem:[#allocation2 + $0x30] sm:$0xff] %vm304, %v1266
    %1272 = vst.msk [vmem:[#allocation2 + $0x38] sm:$0xff] %vm304, %v1268
    %v1273 = vld [vmem:[#allocation2] sm:$0xff]
    %v1274 = vld [vmem:[#allocation2 + $0x8] sm:$0xff]
    %v1275 = vld [vmem:[#allocation2 + $0x10] sm:$0xff]
    %v1276 = vld [vmem:[#allocation2 + $0x18] sm:$0xff]
    %v1277 = vld [vmem:[#allocation2 + $0x20] sm:$0xff]
    %v1278 = vld [vmem:[#allocation2 + $0x28] sm:$0xff]
    %v1279 = vld [vmem:[#allocation2 + $0x30] sm:$0xff]
    %v1280 = vld [vmem:[#allocation2 + $0x38] sm:$0xff]
    %1281 = vmatprep.subr.mxu0 0.0
    %1282 = vmatpush1.msra.mxu0 %v1273
    %1283 = vmatprep.subr.mxu0 0.0
    %1284 = vmatpush1.msra.mxu0 %v1274
    %1285 = vmatprep.subr.mxu0 0.0
    %1286 = vmatpush1.msra.mxu0 %v1275
    %1287 = vmatprep.subr.mxu0 0.0
    %1288 = vmatpush1.msra.mxu0 %v1276
    %1289 = vmatprep.subr.mxu0 0.0
    %1290 = vmatpush1.msra.mxu0 %v1277
    %1291 = vmatprep.subr.mxu0 0.0
    %1292 = vmatpush1.msra.mxu0 %v1278
    %1293 = vmatprep.subr.mxu0 0.0
    %1294 = vmatpush1.msra.mxu0 %v1279
    %1295 = vmatprep.subr.mxu0 0.0
    %1296 = vmatpush1.msra.mxu0 %v1280
    %1297 = vmatprep.subr.mxu0 0.0
    %1298 = vmatpush1.msra.mxu0 0.0
    %1299 = vmatprep.subr.mxu0 0.0
    %1300 = vmatpush1.msra.mxu0 0.0
    %1301 = vmatprep.subr.mxu0 0.0
    %1302 = vmatpush1.msra.mxu0 0.0
    %1303 = vmatprep.subr.mxu0 0.0
    %1304 = vmatpush1.msra.mxu0 0.0
    %1305 = vmatprep.subr.mxu0 0.0
    %1306 = vmatpush1.msra.mxu0 0.0
    %1307 = vmatprep.subr.mxu0 0.0
    %1308 = vmatpush1.msra.mxu0 0.0
    %1309 = vmatprep.subr.mxu0 0.0
    %1310 = vmatpush1.msra.mxu0 0.0
    %1311 = vmatprep.subr.mxu0 0.0
    %1312 = vmatpush1.msra.mxu0 0.0
    %1313 = vmatprep.subr.mxu0 0.0
    %1314 = vmatpush1.msra.mxu0 0.0
    %1315 = vmatprep.subr.mxu0 0.0
    %1316 = vmatpush1.msra.mxu0 0.0
    %1317 = vmatprep.subr.mxu0 0.0
    %1318 = vmatpush1.msra.mxu0 0.0
    %1319 = vmatprep.subr.mxu0 0.0
    %1320 = vmatpush1.msra.mxu0 0.0
    %1321 = vmatprep.subr.mxu0 0.0
    %1322 = vmatpush1.msra.mxu0 0.0
    %1323 = vmatprep.subr.mxu0 0.0
    %1324 = vmatpush1.msra.mxu0 0.0
    %1325 = vmatprep.subr.mxu0 0.0
    %1326 = vmatpush1.msra.mxu0 0.0
    %1327 = vmatprep.subr.mxu0 0.0
    %1328 = vmatpush1.msra.mxu0 0.0
    %1329 = vmatprep.subr.mxu0 0.0
    %1330 = vmatpush1.msra.mxu0 0.0
    %1331 = vmatprep.subr.mxu0 0.0
    %1332 = vmatpush1.msra.mxu0 0.0
    %1333 = vmatprep.subr.mxu0 0.0
    %1334 = vmatpush1.msra.mxu0 0.0
    %1335 = vmatprep.subr.mxu0 0.0
    %1336 = vmatpush1.msra.mxu0 0.0
    %1337 = vmatprep.subr.mxu0 0.0
    %1338 = vmatpush1.msra.mxu0 0.0
    %1339 = vmatprep.subr.mxu0 0.0
    %1340 = vmatpush1.msra.mxu0 0.0
    %1341 = vmatprep.subr.mxu0 0.0
    %1342 = vmatpush1.msra.mxu0 0.0
    %1343 = vmatprep.subr.mxu0 0.0
    %1344 = vmatpush1.msra.mxu0 0.0
    %1345 = vmatprep.mubr.f32.mxu0 0.0
    %1346 = vmatmul.mubr.f32.gmra.mrb[0].mxu0 %v324
    %v1347 = vpop.f32.mrb[0].mxu0
    %v1348 = vadd.f32 0.0, %v1347
    %v1349 = vpop.f32.mrb[0].mxu0
    %1350 = vmatprep.mubr.f32.mxu0 0.0
    %1351 = vmatmul.mubr.f32.gmra.mrb[0].mxu0 %v327
    %v1352 = vpop.f32.mrb[0].mxu0
    %v1353 = vadd.f32 0.0, %v1352
    %v1354 = vpop.f32.mrb[0].mxu0
    %1355 = vdwg.mxu0
    %v1357 = vsel %vm75, %v1348, 0
    %v1360 = vsel %vm75, %v1353, 0
    %1362 = vmatprep.subr.mxu0 0.0
    %1363 = vmatpush1.msra.mxu0 %v88
    %1364 = vmatprep.subr.mxu0 0.0
    %1365 = vmatpush1.msra.mxu0 %v89
    %1366 = vmatprep.subr.mxu0 0.0
    %1367 = vmatpush1.msra.mxu0 %v90
    %1368 = vmatprep.subr.mxu0 0.0
    %1369 = vmatpush1.msra.mxu0 %v91
    %1370 = vmatprep.subr.mxu0 0.0
    %1371 = vmatpush1.msra.mxu0 %v92
    %1372 = vmatprep.subr.mxu0 0.0
    %1373 = vmatpush1.msra.mxu0 %v93
    %1374 = vmatprep.subr.mxu0 0.0
    %1375 = vmatpush1.msra.mxu0 %v94
    %1376 = vmatprep.subr.mxu0 0.0
    %1377 = vmatpush1.msra.mxu0 %v95
    %1378 = vmatprep.subr.mxu0 0.0
    %1379 = vmatpush1.msra.mxu0 0.0
    %1380 = vmatprep.subr.mxu0 0.0
    %1381 = vmatpush1.msra.mxu0 0.0
    %1382 = vmatprep.subr.mxu0 0.0
    %1383 = vmatpush1.msra.mxu0 0.0
    %1384 = vmatprep.subr.mxu0 0.0
    %1385 = vmatpush1.msra.mxu0 0.0
    %1386 = vmatprep.subr.mxu0 0.0
    %1387 = vmatpush1.msra.mxu0 0.0
    %1388 = vmatprep.subr.mxu0 0.0
    %1389 = vmatpush1.msra.mxu0 0.0
    %1390 = vmatprep.subr.mxu0 0.0
    %1391 = vmatpush1.msra.mxu0 0.0
    %1392 = vmatprep.subr.mxu0 0.0
    %1393 = vmatpush1.msra.mxu0 0.0
    %1394 = vmatprep.subr.mxu0 0.0
    %1395 = vmatpush1.msra.mxu0 0.0
    %1396 = vmatprep.subr.mxu0 0.0
    %1397 = vmatpush1.msra.mxu0 0.0
    %1398 = vmatprep.subr.mxu0 0.0
    %1399 = vmatpush1.msra.mxu0 0.0
    %1400 = vmatprep.subr.mxu0 0.0
    %1401 = vmatpush1.msra.mxu0 0.0
    %1402 = vmatprep.subr.mxu0 0.0
    %1403 = vmatpush1.msra.mxu0 0.0
    %1404 = vmatprep.subr.mxu0 0.0
    %1405 = vmatpush1.msra.mxu0 0.0
    %1406 = vmatprep.subr.mxu0 0.0
    %1407 = vmatpush1.msra.mxu0 0.0
    %1408 = vmatprep.subr.mxu0 0.0
    %1409 = vmatpush1.msra.mxu0 0.0
    %1410 = vmatprep.subr.mxu0 0.0
    %1411 = vmatpush1.msra.mxu0 0.0
    %1412 = vmatprep.subr.mxu0 0.0
    %1413 = vmatpush1.msra.mxu0 0.0
    %1414 = vmatprep.subr.mxu0 0.0
    %1415 = vmatpush1.msra.mxu0 0.0
    %1416 = vmatprep.subr.mxu0 0.0
    %1417 = vmatpush1.msra.mxu0 0.0
    %1418 = vmatprep.subr.mxu0 0.0
    %1419 = vmatpush1.msra.mxu0 0.0
    %1420 = vmatprep.subr.mxu0 0.0
    %1421 = vmatpush1.msra.mxu0 0.0
    %1422 = vmatprep.subr.mxu0 0.0
    %1423 = vmatpush1.msra.mxu0 0.0
    %1424 = vmatprep.subr.mxu0 0.0
    %1425 = vmatpush1.msra.mxu0 0.0
    %1426 = vmatprep.mubr.f32.mxu0 0.0
    %1427 = vmatmul.mubr.f32.gmra.mrb[0].mxu0 %v1357
    %v1428 = vpop.f32.mrb[0].mxu0
    %v1429 = vadd.f32 %v1183, %v1428
    %v1430 = vpop.f32.mrb[0].mxu0
    %1431 = vmatprep.mubr.f32.mxu0 0.0
    %1432 = vmatmul.mubr.f32.gmra.mrb[0].mxu0 %v1360
    %v1433 = vpop.f32.mrb[0].mxu0
    %v1434 = vadd.f32 %v1184, %v1433
    %v1435 = vpop.f32.mrb[0].mxu0
    %1436 = vdwg.mxu0
    %v1437 = vxor.u32 %v1429, 2147483648
    %v1438 = vxor.u32 %v1434, 2147483648
    %v1439 = vmul.f32 %v1437, 1.442695
    %v1440 = vpow.pop %v1439
    %v1441 = vmul.f32 %v1438, 1.442695
    %v1442 = vpow.pop %v1441
    %v1443 = vadd.f32 %v1440, 1.0
    %v1444 = vadd.f32 %v1442, 1.0
    %v1445 = vrcp.pop %v1443
    %v1446 = vmul.f32 1.0, %v1445
    %v1447 = vrcp.pop %v1444
    %v1448 = vmul.f32 1.0, %v1447
    %1449 = vrot.lane.b32.xlu0 %v1096, 32
    %v1450 = vpop.permute.xlu0 %1449
    %1451 = vrot.lane.b32.xlu0 %v1097, 32
    %v1452 = vpop.permute.xlu0 %1451
    %v1455 = vmul.f32 %v1446, %v1450
    %v1456 = vmul.f32 %v1448, %v1452
    %1459 = vrot.lane.b32.xlu0 %v1455, 96
    %v1460 = vpop.permute.xlu0 %1459
    %1461 = vrot.lane.b32.xlu0 %v1456, 96
    %v1462 = vpop.permute.xlu0 %1461
    %v1463 = vsel %vm138, %v1460, 0
    %v1465 = vsel %vm138, %v1462, 0
    %1467 = vmatprep.subr.mxu0 0.0
    %1468 = vmatpush1.msra.mxu0 %v104
    %1469 = vmatprep.subr.mxu0 0.0
    %1470 = vmatpush1.msra.mxu0 %v105
    %1471 = vmatprep.subr.mxu0 0.0
    %1472 = vmatpush1.msra.mxu0 %v106
    %1473 = vmatprep.subr.mxu0 0.0
    %1474 = vmatpush1.msra.mxu0 %v107
    %1475 = vmatprep.subr.mxu0 0.0
    %1476 = vmatpush1.msra.mxu0 0.0
    %1477 = vmatprep.subr.mxu0 0.0
    %1478 = vmatpush1.msra.mxu0 0.0
    %1479 = vmatprep.subr.mxu0 0.0
    %1480 = vmatpush1.msra.mxu0 0.0
    %1481 = vmatprep.subr.mxu0 0.0
    %1482 = vmatpush1.msra.mxu0 0.0
    %1483 = vmatprep.subr.mxu0 0.0
    %1484 = vmatpush1.msra.mxu0 0.0
    %1485 = vmatprep.subr.mxu0 0.0
    %1486 = vmatpush1.msra.mxu0 0.0
    %1487 = vmatprep.subr.mxu0 0.0
    %1488 = vmatpush1.msra.mxu0 0.0
    %1489 = vmatprep.subr.mxu0 0.0
    %1490 = vmatpush1.msra.mxu0 0.0
    %1491 = vmatprep.subr.mxu0 0.0
    %1492 = vmatpush1.msra.mxu0 0.0
    %1493 = vmatprep.subr.mxu0 0.0
    %1494 = vmatpush1.msra.mxu0 0.0
    %1495 = vmatprep.subr.mxu0 0.0
    %1496 = vmatpush1.msra.mxu0 0.0
    %1497 = vmatprep.subr.mxu0 0.0
    %1498 = vmatpush1.msra.mxu0 0.0
    %1499 = vmatprep.subr.mxu0 0.0
    %1500 = vmatpush1.msra.mxu0 0.0
    %1501 = vmatprep.subr.mxu0 0.0
    %1502 = vmatpush1.msra.mxu0 0.0
    %1503 = vmatprep.subr.mxu0 0.0
    %1504 = vmatpush1.msra.mxu0 0.0
    %1505 = vmatprep.subr.mxu0 0.0
    %1506 = vmatpush1.msra.mxu0 0.0
    %1507 = vmatprep.subr.mxu0 0.0
    %1508 = vmatpush1.msra.mxu0 0.0
    %1509 = vmatprep.subr.mxu0 0.0
    %1510 = vmatpush1.msra.mxu0 0.0
    %1511 = vmatprep.subr.mxu0 0.0
    %1512 = vmatpush1.msra.mxu0 0.0
    %1513 = vmatprep.subr.mxu0 0.0
    %1514 = vmatpush1.msra.mxu0 0.0
    %1515 = vmatprep.subr.mxu0 0.0
    %1516 = vmatpush1.msra.mxu0 0.0
    %1517 = vmatprep.subr.mxu0 0.0
    %1518 = vmatpush1.msra.mxu0 0.0
    %1519 = vmatprep.subr.mxu0 0.0
    %1520 = vmatpush1.msra.mxu0 0.0
    %1521 = vmatprep.subr.mxu0 0.0
    %1522 = vmatpush1.msra.mxu0 0.0
    %1523 = vmatprep.subr.mxu0 0.0
    %1524 = vmatpush1.msra.mxu0 0.0
    %1525 = vmatprep.subr.mxu0 0.0
    %1526 = vmatpush1.msra.mxu0 0.0
    %1527 = vmatprep.subr.mxu0 0.0
    %1528 = vmatpush1.msra.mxu0 0.0
    %1529 = vmatprep.subr.mxu0 0.0
    %1530 = vmatpush1.msra.mxu0 0.0
    %1531 = vmatprep.mubr.f32.mxu0 0.0
    %1532 = vmatmul.mubr.f32.gmra.mrb[0].mxu0 %v1463
    %v1533 = vpop.f32.mrb[0].mxu0
    %v1534 = vadd.f32 0.0, %v1533
    %v1535 = vpop.f32.mrb[0].mxu0
    %1536 = vmatprep.mubr.f32.mxu0 0.0
    %1537 = vmatmul.mubr.f32.gmra.mrb[0].mxu0 %v1465
    %v1538 = vpop.f32.mrb[0].mxu0
    %v1539 = vadd.f32 0.0, %v1538
    %v1540 = vpop.f32.mrb[0].mxu0
    %1541 = vdwg.mxu0
    %1544 = vrot.lane.b32.xlu0 %v1534, 64
    %v1545 = vpop.permute.xlu0 %1544
    %1546 = vrot.lane.b32.xlu0 %v1539, 64
    %v1547 = vpop.permute.xlu0 %1546
    %v1550 = vadd.f32 %v1429, %v1545
    %v1551 = vadd.f32 %v1434, %v1547
    %v1552 = vtanh.pop %v1550
    %v1553 = vtanh.pop %v1551
    %1554 = vrot.lane.b32.xlu0 %v1096, 64
    %v1555 = vpop.permute.xlu0 %1554
    %1556 = vrot.lane.b32.xlu0 %v1097, 64
    %v1557 = vpop.permute.xlu0 %1556
    %v1560 = vsub.f32 %v1552, %v1555
    %v1561 = vsub.f32 %v1553, %v1557
    %1564 = vrot.lane.b32.xlu0 %v1560, 64
    %v1565 = vpop.permute.xlu0 %1564
    %1566 = vrot.lane.b32.xlu0 %v1561, 64
    %v1567 = vpop.permute.xlu0 %1566
    %v1570 = vmul.f32 %v1446, %v1565
    %v1571 = vmul.f32 %v1448, %v1567
    %v1572 = vadd.f32 %v1096, %v1570
    %v1573 = vadd.f32 %v1097, %v1571
    %v1575 = vsel %vm138, %v1572, 0
    %v1578 = vsel %vm138, %v1573, 0
    %1580 = vmatprep.subr.mxu0 %v97
    %1581 = vmatpush1.msra.mxu0 %v96
    %1582 = vmatprep.subr.mxu0 %v99
    %1583 = vmatpush1.msra.mxu0 %v98
    %1584 = vmatprep.subr.mxu0 %v101
    %1585 = vmatpush1.msra.mxu0 %v100
    %1586 = vmatprep.subr.mxu0 %v103
    %1587 = vmatpush1.msra.mxu0 %v102
    %1588 = vmatprep.subr.mxu0 0.0
    %1589 = vmatpush1.msra.mxu0 0.0
    %1590 = vmatprep.subr.mxu0 0.0
    %1591 = vmatpush1.msra.mxu0 0.0
    %1592 = vmatprep.subr.mxu0 0.0
    %1593 = vmatpush1.msra.mxu0 0.0
    %1594 = vmatprep.subr.mxu0 0.0
    %1595 = vmatpush1.msra.mxu0 0.0
    %1596 = vmatprep.subr.mxu0 0.0
    %1597 = vmatpush1.msra.mxu0 0.0
    %1598 = vmatprep.subr.mxu0 0.0
    %1599 = vmatpush1.msra.mxu0 0.0
    %1600 = vmatprep.subr.mxu0 0.0
    %1601 = vmatpush1.msra.mxu0 0.0
    %1602 = vmatprep.subr.mxu0 0.0
    %1603 = vmatpush1.msra.mxu0 0.0
    %1604 = vmatprep.subr.mxu0 0.0
    %1605 = vmatpush1.msra.mxu0 0.0
    %1606 = vmatprep.subr.mxu0 0.0
    %1607 = vmatpush1.msra.mxu0 0.0
    %1608 = vmatprep.subr.mxu0 0.0
    %1609 = vmatpush1.msra.mxu0 0.0
    %1610 = vmatprep.subr.mxu0 0.0
    %1611 = vmatpush1.msra.mxu0 0.0
    %1612 = vmatprep.subr.mxu0 0.0
    %1613 = vmatpush1.msra.mxu0 0.0
    %1614 = vmatprep.subr.mxu0 0.0
    %1615 = vmatpush1.msra.mxu0 0.0
    %1616 = vmatprep.subr.mxu0 0.0
    %1617 = vmatpush1.msra.mxu0 0.0
    %1618 = vmatprep.subr.mxu0 0.0
    %1619 = vmatpush1.msra.mxu0 0.0
    %1620 = vmatprep.subr.mxu0 0.0
    %1621 = vmatpush1.msra.mxu0 0.0
    %1622 = vmatprep.subr.mxu0 0.0
    %1623 = vmatpush1.msra.mxu0 0.0
    %1624 = vmatprep.subr.mxu0 0.0
    %1625 = vmatpush1.msra.mxu0 0.0
    %1626 = vmatprep.subr.mxu0 0.0
    %1627 = vmatpush1.msra.mxu0 0.0
    %1628 = vmatprep.subr.mxu0 0.0
    %1629 = vmatpush1.msra.mxu0 0.0
    %1630 = vmatprep.subr.mxu0 0.0
    %1631 = vmatpush1.msra.mxu0 0.0
    %1632 = vmatprep.subr.mxu0 0.0
    %1633 = vmatpush1.msra.mxu0 0.0
    %1634 = vmatprep.subr.mxu0 0.0
    %1635 = vmatpush1.msra.mxu0 0.0
    %1636 = vmatprep.subr.mxu0 0.0
    %1637 = vmatpush1.msra.mxu0 0.0
    %1638 = vmatprep.subr.mxu0 0.0
    %1639 = vmatpush1.msra.mxu0 0.0
    %1640 = vmatprep.subr.mxu0 0.0
    %1641 = vmatpush1.msra.mxu0 0.0
    %1642 = vmatprep.subr.mxu0 0.0
    %1643 = vmatpush1.msra.mxu0 0.0
    %1644 = vmatprep.mubr.f32.mxu0 0.0
    %1645 = vmatmul.mubr.f32.gmra.mrb[0].mxu0 %v1575
    %v1646 = vpop.f32.mrb[0].mxu0
    %v1647 = vadd.f32 0.0, %v1646
    %v1648 = vpop.f32.mrb[0].mxu0
    %v1649 = vadd.f32 0.0, %v1648
    %1650 = vmatprep.mubr.f32.mxu0 0.0
    %1651 = vmatmul.mubr.f32.gmra.mrb[0].mxu0 %v1578
    %v1652 = vpop.f32.mrb[0].mxu0
    %v1653 = vadd.f32 0.0, %v1652
    %v1654 = vpop.f32.mrb[0].mxu0
    %v1655 = vadd.f32 0.0, %v1654
    %1656 = vdwg.mxu0
    %v1657 = vadd.f32 %v1647, %v112
    %v1658 = vadd.f32 %v1653, %v112
    %v1659 = vadd.f32 %v1649, %v127
    %v1660 = vadd.f32 %v1655, %v127
    %v1661 = vmul.f32 %v1657, %v132
    %v1662 = vmul.f32 %v1658, %v132
    %v1663 = vsub.f32 %v1657, %v1661
    %v1664 = vsub.f32 %v1658, %v1662
    %1665 = vadd.xlane.f32.xlu0 %v1661
    %v1666 = vpop.xlane.xlu0 %1665
    %1667 = vadd.xlane.f32.xlu0 %v1662
    %v1668 = vpop.xlane.xlu0 %1667
    %v1669 = vmul.f32 %v1666, 0.015625
    %v1670 = vmul.f32 %v1668, 0.015625
    %1671 = vadd.xlane.f32.xlu0 %v1663
    %v1672 = vpop.xlane.xlu0 %1671
    %1673 = vadd.xlane.f32.xlu0 %v1664
    %v1674 = vpop.xlane.xlu0 %1673
    %v1675 = vmul.f32 %v1672, 0.015625
    %v1676 = vmul.f32 %v1674, 0.015625
    %v1677 = vmul.f32 %v1661, %v1661
    %v1678 = vmul.f32 %v1662, %v1662
    %1679 = vadd.xlane.f32.xlu0 %v1677
    %v1680 = vpop.xlane.xlu0 %1679
    %1681 = vadd.xlane.f32.xlu0 %v1678
    %v1682 = vpop.xlane.xlu0 %1681
    %v1683 = vmul.f32 %v1680, 0.015625
    %v1684 = vmul.f32 %v1682, 0.015625
    %v1685 = vmul.f32 %v1663, %v1663
    %v1686 = vmul.f32 %v1664, %v1664
    %1687 = vadd.xlane.f32.xlu0 %v1685
    %v1688 = vpop.xlane.xlu0 %1687
    %1689 = vadd.xlane.f32.xlu0 %v1686
    %v1690 = vpop.xlane.xlu0 %1689
    %v1691 = vmul.f32 %v1688, 0.015625
    %v1692 = vmul.f32 %v1690, 0.015625
    %v1693 = vmul.f32 %v1669, %v1669
    %v1694 = vmul.f32 %v1670, %v1670
    %v1695 = vsub.f32 %v1683, %v1693
    %v1696 = vsub.f32 %v1684, %v1694
    %v1697 = vadd.f32 %v1695, 1e-05
    %v1698 = vadd.f32 %v1696, 1e-05
    %v1699 = vrsqrt.pop %v1697
    %v1700 = vrsqrt.pop %v1698
    %v1701 = vmul.f32 %v1675, %v1675
    %v1702 = vmul.f32 %v1676, %v1676
    %v1703 = vsub.f32 %v1691, %v1701
    %v1704 = vsub.f32 %v1692, %v1702
    %v1705 = vadd.f32 %v1703, 1e-05
    %v1706 = vadd.f32 %v1704, 1e-05
    %v1707 = vrsqrt.pop %v1705
    %v1708 = vrsqrt.pop %v1706
    %v1709 = vsub.f32 %v1669, %v1675
    %v1710 = vsub.f32 %v1670, %v1676
    %v1711 = vmul.f32 %v1709, %v132
    %v1712 = vmul.f32 %v1710, %v132
    %v1713 = vadd.f32 %v1675, %v1711
    %v1714 = vadd.f32 %v1676, %v1712
    %v1715 = vmul.f32 %v1699, %v117
    %v1716 = vmul.f32 %v1700, %v117
    %v1717 = vmul.f32 %v1707, %v137
    %v1718 = vmul.f32 %v1708, %v137
    %v1719 = vadd.f32 %v1715, %v1717
    %v1720 = vadd.f32 %v1716, %v1718
    %v1721 = vsub.f32 %v1657, %v1713
    %v1722 = vsub.f32 %v1658, %v1714
    %v1723 = vmul.f32 %v1721, %v1719
    %v1724 = vmul.f32 %v1722, %v1720
    %v1725 = vadd.f32 %v1723, %v122
    %v1726 = vadd.f32 %v1724, %v122
    %1727 = vst.msk [vmem:[#allocation2] sm:$0xff] %vm138, %v1725
    %1728 = vst.msk [vmem:[#allocation2 + $0x8] sm:$0xff] %vm138, %v1726
    %1731 = vrot.lane.b32.xlu0 %v1725, 96
    %v1732 = vpop.permute.xlu0 %1731
    %1733 = vrot.lane.b32.xlu0 %v1726, 96
    %v1734 = vpop.permute.xlu0 %1733
    %1737 = vst.msk [vmem:[#allocation2 + $0x10] sm:$0xff] %vm138, %v1732
    %1738 = vst.msk [vmem:[#allocation2 + $0x18] sm:$0xff] %vm138, %v1734
    %1739 = vst.msk [vmem:[#allocation2 + $0x20] sm:$0xff] %vm304, %v1732
    %1740 = vst.msk [vmem:[#allocation2 + $0x28] sm:$0xff] %vm304, %v1734
    %1741 = vrot.lane.b32.xlu0 %v1725, 64
    %v1742 = vpop.permute.xlu0 %1741
    %1743 = vrot.lane.b32.xlu0 %v1726, 64
    %v1744 = vpop.permute.xlu0 %1743
    %1747 = vst.msk [vmem:[#allocation2 + $0x30] sm:$0xff] %vm304, %v1742
    %1748 = vst.msk [vmem:[#allocation2 + $0x38] sm:$0xff] %vm304, %v1744
    %v1749 = vld [vmem:[#allocation2] sm:$0xff]
    %v1750 = vld [vmem:[#allocation2 + $0x8] sm:$0xff]
    %v1751 = vld [vmem:[#allocation2 + $0x10] sm:$0xff]
    %v1752 = vld [vmem:[#allocation2 + $0x18] sm:$0xff]
    %v1753 = vld [vmem:[#allocation2 + $0x20] sm:$0xff]
    %v1754 = vld [vmem:[#allocation2 + $0x28] sm:$0xff]
    %v1755 = vld [vmem:[#allocation2 + $0x30] sm:$0xff]
    %v1756 = vld [vmem:[#allocation2 + $0x38] sm:$0xff]
    %1757 = vmatprep.subr.mxu0 0.0
    %1758 = vmatpush1.msra.mxu0 %v1749
    %1759 = vmatprep.subr.mxu0 0.0
    %1760 = vmatpush1.msra.mxu0 %v1750
    %1761 = vmatprep.subr.mxu0 0.0
    %1762 = vmatpush1.msra.mxu0 %v1751
    %1763 = vmatprep.subr.mxu0 0.0
    %1764 = vmatpush1.msra.mxu0 %v1752
    %1765 = vmatprep.subr.mxu0 0.0
    %1766 = vmatpush1.msra.mxu0 %v1753
    %1767 = vmatprep.subr.mxu0 0.0
    %1768 = vmatpush1.msra.mxu0 %v1754
    %1769 = vmatprep.subr.mxu0 0.0
    %1770 = vmatpush1.msra.mxu0 %v1755
    %1771 = vmatprep.subr.mxu0 0.0
    %1772 = vmatpush1.msra.mxu0 %v1756
    %1773 = vmatprep.subr.mxu0 0.0
    %1774 = vmatpush1.msra.mxu0 0.0
    %1775 = vmatprep.subr.mxu0 0.0
    %1776 = vmatpush1.msra.mxu0 0.0
    %1777 = vmatprep.subr.mxu0 0.0
    %1778 = vmatpush1.msra.mxu0 0.0
    %1779 = vmatprep.subr.mxu0 0.0
    %1780 = vmatpush1.msra.mxu0 0.0
    %1781 = vmatprep.subr.mxu0 0.0
    %1782 = vmatpush1.msra.mxu0 0.0
    %1783 = vmatprep.subr.mxu0 0.0
    %1784 = vmatpush1.msra.mxu0 0.0
    %1785 = vmatprep.subr.mxu0 0.0
    %1786 = vmatpush1.msra.mxu0 0.0
    %1787 = vmatprep.subr.mxu0 0.0
    %1788 = vmatpush1.msra.mxu0 0.0
    %1789 = vmatprep.subr.mxu0 0.0
    %1790 = vmatpush1.msra.mxu0 0.0
    %1791 = vmatprep.subr.mxu0 0.0
    %1792 = vmatpush1.msra.mxu0 0.0
    %1793 = vmatprep.subr.mxu0 0.0
    %1794 = vmatpush1.msra.mxu0 0.0
    %1795 = vmatprep.subr.mxu0 0.0
    %1796 = vmatpush1.msra.mxu0 0.0
    %1797 = vmatprep.subr.mxu0 0.0
    %1798 = vmatpush1.msra.mxu0 0.0
    %1799 = vmatprep.subr.mxu0 0.0
    %1800 = vmatpush1.msra.mxu0 0.0
    %1801 = vmatprep.subr.mxu0 0.0
    %1802 = vmatpush1.msra.mxu0 0.0
    %1803 = vmatprep.subr.mxu0 0.0
    %1804 = vmatpush1.msra.mxu0 0.0
    %1805 = vmatprep.subr.mxu0 0.0
    %1806 = vmatpush1.msra.mxu0 0.0
    %1807 = vmatprep.subr.mxu0 0.0
    %1808 = vmatpush1.msra.mxu0 0.0
    %1809 = vmatprep.subr.mxu0 0.0
    %1810 = vmatpush1.msra.mxu0 0.0
    %1811 = vmatprep.subr.mxu0 0.0
    %1812 = vmatpush1.msra.mxu0 0.0
    %1813 = vmatprep.subr.mxu0 0.0
    %1814 = vmatpush1.msra.mxu0 0.0
    %1815 = vmatprep.subr.mxu0 0.0
    %1816 = vmatpush1.msra.mxu0 0.0
    %1817 = vmatprep.subr.mxu0 0.0
    %1818 = vmatpush1.msra.mxu0 0.0
    %1819 = vmatprep.subr.mxu0 0.0
    %1820 = vmatpush1.msra.mxu0 0.0
    %1821 = vmatprep.mubr.f32.mxu0 0.0
    %1822 = vmatmul.mubr.f32.gmra.mrb[0].mxu0 %v324
    %v1823 = vpop.f32.mrb[0].mxu0
    %v1824 = vadd.f32 0.0, %v1823
    %v1825 = vpop.f32.mrb[0].mxu0
    %1826 = vmatprep.mubr.f32.mxu0 0.0
    %1827 = vmatmul.mubr.f32.gmra.mrb[0].mxu0 %v327
    %v1828 = vpop.f32.mrb[0].mxu0
    %v1829 = vadd.f32 0.0, %v1828
    %v1830 = vpop.f32.mrb[0].mxu0
    %1831 = vdwg.mxu0
    %v1833 = vsel %vm75, %v1824, 0
    %v1836 = vsel %vm75, %v1829, 0
    %1838 = vmatprep.subr.mxu0 0.0
    %1839 = vmatpush1.msra.mxu0 %v88
    %1840 = vmatprep.subr.mxu0 0.0
    %1841 = vmatpush1.msra.mxu0 %v89
    %1842 = vmatprep.subr.mxu0 0.0
    %1843 = vmatpush1.msra.mxu0 %v90
    %1844 = vmatprep.subr.mxu0 0.0
    %1845 = vmatpush1.msra.mxu0 %v91
    %1846 = vmatprep.subr.mxu0 0.0
    %1847 = vmatpush1.msra.mxu0 %v92
    %1848 = vmatprep.subr.mxu0 0.0
    %1849 = vmatpush1.msra.mxu0 %v93
    %1850 = vmatprep.subr.mxu0 0.0
    %1851 = vmatpush1.msra.mxu0 %v94
    %1852 = vmatprep.subr.mxu0 0.0
    %1853 = vmatpush1.msra.mxu0 %v95
    %1854 = vmatprep.subr.mxu0 0.0
    %1855 = vmatpush1.msra.mxu0 0.0
    %1856 = vmatprep.subr.mxu0 0.0
    %1857 = vmatpush1.msra.mxu0 0.0
    %1858 = vmatprep.subr.mxu0 0.0
    %1859 = vmatpush1.msra.mxu0 0.0
    %1860 = vmatprep.subr.mxu0 0.0
    %1861 = vmatpush1.msra.mxu0 0.0
    %1862 = vmatprep.subr.mxu0 0.0
    %1863 = vmatpush1.msra.mxu0 0.0
    %1864 = vmatprep.subr.mxu0 0.0
    %1865 = vmatpush1.msra.mxu0 0.0
    %1866 = vmatprep.subr.mxu0 0.0
    %1867 = vmatpush1.msra.mxu0 0.0
    %1868 = vmatprep.subr.mxu0 0.0
    %1869 = vmatpush1.msra.mxu0 0.0
    %1870 = vmatprep.subr.mxu0 0.0
    %1871 = vmatpush1.msra.mxu0 0.0
    %1872 = vmatprep.subr.mxu0 0.0
    %1873 = vmatpush1.msra.mxu0 0.0
    %1874 = vmatprep.subr.mxu0 0.0
    %1875 = vmatpush1.msra.mxu0 0.0
    %1876 = vmatprep.subr.mxu0 0.0
    %1877 = vmatpush1.msra.mxu0 0.0
    %1878 = vmatprep.subr.mxu0 0.0
    %1879 = vmatpush1.msra.mxu0 0.0
    %1880 = vmatprep.subr.mxu0 0.0
    %1881 = vmatpush1.msra.mxu0 0.0
    %1882 = vmatprep.subr.mxu0 0.0
    %1883 = vmatpush1.msra.mxu0 0.0
    %1884 = vmatprep.subr.mxu0 0.0
    %1885 = vmatpush1.msra.mxu0 0.0
    %1886 = vmatprep.subr.mxu0 0.0
    %1887 = vmatpush1.msra.mxu0 0.0
    %1888 = vmatprep.subr.mxu0 0.0
    %1889 = vmatpush1.msra.mxu0 0.0
    %1890 = vmatprep.subr.mxu0 0.0
    %1891 = vmatpush1.msra.mxu0 0.0
    %1892 = vmatprep.subr.mxu0 0.0
    %1893 = vmatpush1.msra.mxu0 0.0
    %1894 = vmatprep.subr.mxu0 0.0
    %1895 = vmatpush1.msra.mxu0 0.0
    %1896 = vmatprep.subr.mxu0 0.0
    %1897 = vmatpush1.msra.mxu0 0.0
    %1898 = vmatprep.subr.mxu0 0.0
    %1899 = vmatpush1.msra.mxu0 0.0
    %1900 = vmatprep.subr.mxu0 0.0
    %1901 = vmatpush1.msra.mxu0 0.0
    %1902 = vmatprep.mubr.f32.mxu0 0.0
    %1903 = vmatmul.mubr.f32.gmra.mrb[0].mxu0 %v1833
    %v1904 = vpop.f32.mrb[0].mxu0
    %v1905 = vadd.f32 %v1659, %v1904
    %v1906 = vpop.f32.mrb[0].mxu0
    %1907 = vmatprep.mubr.f32.mxu0 0.0
    %1908 = vmatmul.mubr.f32.gmra.mrb[0].mxu0 %v1836
    %v1909 = vpop.f32.mrb[0].mxu0
    %v1910 = vadd.f32 %v1660, %v1909
    %v1911 = vpop.f32.mrb[0].mxu0
    %1912 = vdwg.mxu0
    %v1913 = vxor.u32 %v1905, 2147483648
    %v1914 = vxor.u32 %v1910, 2147483648
    %v1915 = vmul.f32 %v1913, 1.442695
    %v1916 = vpow.pop %v1915
    %v1917 = vmul.f32 %v1914, 1.442695
    %v1918 = vpow.pop %v1917
    %v1919 = vadd.f32 %v1916, 1.0
    %v1920 = vadd.f32 %v1918, 1.0
    %v1921 = vrcp.pop %v1919
    %v1922 = vmul.f32 1.0, %v1921
    %v1923 = vrcp.pop %v1920
    %v1924 = vmul.f32 1.0, %v1923
    %1925 = vrot.lane.b32.xlu0 %v1572, 32
    %v1926 = vpop.permute.xlu0 %1925
    %1927 = vrot.lane.b32.xlu0 %v1573, 32
    %v1928 = vpop.permute.xlu0 %1927
    %v1931 = vmul.f32 %v1922, %v1926
    %v1932 = vmul.f32 %v1924, %v1928
    %1935 = vrot.lane.b32.xlu0 %v1931, 96
    %v1936 = vpop.permute.xlu0 %1935
    %1937 = vrot.lane.b32.xlu0 %v1932, 96
    %v1938 = vpop.permute.xlu0 %1937
    %v1939 = vsel %vm138, %v1936, 0
    %v1941 = vsel %vm138, %v1938, 0
    %1943 = vmatprep.subr.mxu0 0.0
    %1944 = vmatpush1.msra.mxu0 %v104
    %1945 = vmatprep.subr.mxu0 0.0
    %1946 = vmatpush1.msra.mxu0 %v105
    %1947 = vmatprep.subr.mxu0 0.0
    %1948 = vmatpush1.msra.mxu0 %v106
    %1949 = vmatprep.subr.mxu0 0.0
    %1950 = vmatpush1.msra.mxu0 %v107
    %1951 = vmatprep.subr.mxu0 0.0
    %1952 = vmatpush1.msra.mxu0 0.0
    %1953 = vmatprep.subr.mxu0 0.0
    %1954 = vmatpush1.msra.mxu0 0.0
    %1955 = vmatprep.subr.mxu0 0.0
    %1956 = vmatpush1.msra.mxu0 0.0
    %1957 = vmatprep.subr.mxu0 0.0
    %1958 = vmatpush1.msra.mxu0 0.0
    %1959 = vmatprep.subr.mxu0 0.0
    %1960 = vmatpush1.msra.mxu0 0.0
    %1961 = vmatprep.subr.mxu0 0.0
    %1962 = vmatpush1.msra.mxu0 0.0
    %1963 = vmatprep.subr.mxu0 0.0
    %1964 = vmatpush1.msra.mxu0 0.0
    %1965 = vmatprep.subr.mxu0 0.0
    %1966 = vmatpush1.msra.mxu0 0.0
    %1967 = vmatprep.subr.mxu0 0.0
    %1968 = vmatpush1.msra.mxu0 0.0
    %1969 = vmatprep.subr.mxu0 0.0
    %1970 = vmatpush1.msra.mxu0 0.0
    %1971 = vmatprep.subr.mxu0 0.0
    %1972 = vmatpush1.msra.mxu0 0.0
    %1973 = vmatprep.subr.mxu0 0.0
    %1974 = vmatpush1.msra.mxu0 0.0
    %1975 = vmatprep.subr.mxu0 0.0
    %1976 = vmatpush1.msra.mxu0 0.0
    %1977 = vmatprep.subr.mxu0 0.0
    %1978 = vmatpush1.msra.mxu0 0.0
    %1979 = vmatprep.subr.mxu0 0.0
    %1980 = vmatpush1.msra.mxu0 0.0
    %1981 = vmatprep.subr.mxu0 0.0
    %1982 = vmatpush1.msra.mxu0 0.0
    %1983 = vmatprep.subr.mxu0 0.0
    %1984 = vmatpush1.msra.mxu0 0.0
    %1985 = vmatprep.subr.mxu0 0.0
    %1986 = vmatpush1.msra.mxu0 0.0
    %1987 = vmatprep.subr.mxu0 0.0
    %1988 = vmatpush1.msra.mxu0 0.0
    %1989 = vmatprep.subr.mxu0 0.0
    %1990 = vmatpush1.msra.mxu0 0.0
    %1991 = vmatprep.subr.mxu0 0.0
    %1992 = vmatpush1.msra.mxu0 0.0
    %1993 = vmatprep.subr.mxu0 0.0
    %1994 = vmatpush1.msra.mxu0 0.0
    %1995 = vmatprep.subr.mxu0 0.0
    %1996 = vmatpush1.msra.mxu0 0.0
    %1997 = vmatprep.subr.mxu0 0.0
    %1998 = vmatpush1.msra.mxu0 0.0
    %1999 = vmatprep.subr.mxu0 0.0
    %2000 = vmatpush1.msra.mxu0 0.0
    %2001 = vmatprep.subr.mxu0 0.0
    %2002 = vmatpush1.msra.mxu0 0.0
    %2003 = vmatprep.subr.mxu0 0.0
    %2004 = vmatpush1.msra.mxu0 0.0
    %2005 = vmatprep.subr.mxu0 0.0
    %2006 = vmatpush1.msra.mxu0 0.0
    %2007 = vmatprep.mubr.f32.mxu0 0.0
    %2008 = vmatmul.mubr.f32.gmra.mrb[0].mxu0 %v1939
    %v2009 = vpop.f32.mrb[0].mxu0
    %v2010 = vadd.f32 0.0, %v2009
    %v2011 = vpop.f32.mrb[0].mxu0
    %2012 = vmatprep.mubr.f32.mxu0 0.0
    %2013 = vmatmul.mubr.f32.gmra.mrb[0].mxu0 %v1941
    %v2014 = vpop.f32.mrb[0].mxu0
    %v2015 = vadd.f32 0.0, %v2014
    %v2016 = vpop.f32.mrb[0].mxu0
    %2017 = vdwg.mxu0
    %2020 = vrot.lane.b32.xlu0 %v2010, 64
    %v2021 = vpop.permute.xlu0 %2020
    %2022 = vrot.lane.b32.xlu0 %v2015, 64
    %v2023 = vpop.permute.xlu0 %2022
    %v2026 = vadd.f32 %v1905, %v2021
    %v2027 = vadd.f32 %v1910, %v2023
    %v2028 = vtanh.pop %v2026
    %v2029 = vtanh.pop %v2027
    %2030 = vrot.lane.b32.xlu0 %v1572, 64
    %v2031 = vpop.permute.xlu0 %2030
    %2032 = vrot.lane.b32.xlu0 %v1573, 64
    %v2033 = vpop.permute.xlu0 %2032
    %v2036 = vsub.f32 %v2028, %v2031
    %v2037 = vsub.f32 %v2029, %v2033
    %2040 = vrot.lane.b32.xlu0 %v2036, 64
    %v2041 = vpop.permute.xlu0 %2040
    %2042 = vrot.lane.b32.xlu0 %v2037, 64
    %v2043 = vpop.permute.xlu0 %2042
    %v2046 = vmul.f32 %v1922, %v2041
    %v2047 = vmul.f32 %v1924, %v2043
    %v2048 = vadd.f32 %v1572, %v2046
    %v2049 = vadd.f32 %v1573, %v2047
    %v2051 = vsel %vm138, %v2048, 0
    %v2054 = vsel %vm138, %v2049, 0
    %2056 = vmatprep.subr.mxu0 %v97
    %2057 = vmatpush1.msra.mxu0 %v96
    %2058 = vmatprep.subr.mxu0 %v99
    %2059 = vmatpush1.msra.mxu0 %v98
    %2060 = vmatprep.subr.mxu0 %v101
    %2061 = vmatpush1.msra.mxu0 %v100
    %2062 = vmatprep.subr.mxu0 %v103
    %2063 = vmatpush1.msra.mxu0 %v102
    %2064 = vmatprep.subr.mxu0 0.0
    %2065 = vmatpush1.msra.mxu0 0.0
    %2066 = vmatprep.subr.mxu0 0.0
    %2067 = vmatpush1.msra.mxu0 0.0
    %2068 = vmatprep.subr.mxu0 0.0
    %2069 = vmatpush1.msra.mxu0 0.0
    %2070 = vmatprep.subr.mxu0 0.0
    %2071 = vmatpush1.msra.mxu0 0.0
    %2072 = vmatprep.subr.mxu0 0.0
    %2073 = vmatpush1.msra.mxu0 0.0
    %2074 = vmatprep.subr.mxu0 0.0
    %2075 = vmatpush1.msra.mxu0 0.0
    %2076 = vmatprep.subr.mxu0 0.0
    %2077 = vmatpush1.msra.mxu0 0.0
    %2078 = vmatprep.subr.mxu0 0.0
    %2079 = vmatpush1.msra.mxu0 0.0
    %2080 = vmatprep.subr.mxu0 0.0
    %2081 = vmatpush1.msra.mxu0 0.0
    %2082 = vmatprep.subr.mxu0 0.0
    %2083 = vmatpush1.msra.mxu0 0.0
    %2084 = vmatprep.subr.mxu0 0.0
    %2085 = vmatpush1.msra.mxu0 0.0
    %2086 = vmatprep.subr.mxu0 0.0
    %2087 = vmatpush1.msra.mxu0 0.0
    %2088 = vmatprep.subr.mxu0 0.0
    %2089 = vmatpush1.msra.mxu0 0.0
    %2090 = vmatprep.subr.mxu0 0.0
    %2091 = vmatpush1.msra.mxu0 0.0
    %2092 = vmatprep.subr.mxu0 0.0
    %2093 = vmatpush1.msra.mxu0 0.0
    %2094 = vmatprep.subr.mxu0 0.0
    %2095 = vmatpush1.msra.mxu0 0.0
    %2096 = vmatprep.subr.mxu0 0.0
    %2097 = vmatpush1.msra.mxu0 0.0
    %2098 = vmatprep.subr.mxu0 0.0
    %2099 = vmatpush1.msra.mxu0 0.0
    %2100 = vmatprep.subr.mxu0 0.0
    %2101 = vmatpush1.msra.mxu0 0.0
    %2102 = vmatprep.subr.mxu0 0.0
    %2103 = vmatpush1.msra.mxu0 0.0
    %2104 = vmatprep.subr.mxu0 0.0
    %2105 = vmatpush1.msra.mxu0 0.0
    %2106 = vmatprep.subr.mxu0 0.0
    %2107 = vmatpush1.msra.mxu0 0.0
    %2108 = vmatprep.subr.mxu0 0.0
    %2109 = vmatpush1.msra.mxu0 0.0
    %2110 = vmatprep.subr.mxu0 0.0
    %2111 = vmatpush1.msra.mxu0 0.0
    %2112 = vmatprep.subr.mxu0 0.0
    %2113 = vmatpush1.msra.mxu0 0.0
    %2114 = vmatprep.subr.mxu0 0.0
    %2115 = vmatpush1.msra.mxu0 0.0
    %2116 = vmatprep.subr.mxu0 0.0
    %2117 = vmatpush1.msra.mxu0 0.0
    %2118 = vmatprep.subr.mxu0 0.0
    %2119 = vmatpush1.msra.mxu0 0.0
    %2120 = vmatprep.mubr.f32.mxu0 0.0
    %2121 = vmatmul.mubr.f32.gmra.mrb[0].mxu0 %v2051
    %v2122 = vpop.f32.mrb[0].mxu0
    %v2123 = vadd.f32 0.0, %v2122
    %v2124 = vpop.f32.mrb[0].mxu0
    %v2125 = vadd.f32 0.0, %v2124
    %2126 = vmatprep.mubr.f32.mxu0 0.0
    %2127 = vmatmul.mubr.f32.gmra.mrb[0].mxu0 %v2054
    %v2128 = vpop.f32.mrb[0].mxu0
    %v2129 = vadd.f32 0.0, %v2128
    %v2130 = vpop.f32.mrb[0].mxu0
    %v2131 = vadd.f32 0.0, %v2130
    %2132 = vdwg.mxu0
    %v2133 = vadd.f32 %v2123, %v112
    %v2134 = vadd.f32 %v2129, %v112
    %v2135 = vadd.f32 %v2125, %v127
    %v2136 = vadd.f32 %v2131, %v127
    %v2137 = vmul.f32 %v2133, %v132
    %v2138 = vmul.f32 %v2134, %v132
    %v2139 = vsub.f32 %v2133, %v2137
    %v2140 = vsub.f32 %v2134, %v2138
    %2141 = vadd.xlane.f32.xlu0 %v2137
    %v2142 = vpop.xlane.xlu0 %2141
    %2143 = vadd.xlane.f32.xlu0 %v2138
    %v2144 = vpop.xlane.xlu0 %2143
    %v2145 = vmul.f32 %v2142, 0.015625
    %v2146 = vmul.f32 %v2144, 0.015625
    %2147 = vadd.xlane.f32.xlu0 %v2139
    %v2148 = vpop.xlane.xlu0 %2147
    %2149 = vadd.xlane.f32.xlu0 %v2140
    %v2150 = vpop.xlane.xlu0 %2149
    %v2151 = vmul.f32 %v2148, 0.015625
    %v2152 = vmul.f32 %v2150, 0.015625
    %v2153 = vmul.f32 %v2137, %v2137
    %v2154 = vmul.f32 %v2138, %v2138
    %2155 = vadd.xlane.f32.xlu0 %v2153
    %v2156 = vpop.xlane.xlu0 %2155
    %2157 = vadd.xlane.f32.xlu0 %v2154
    %v2158 = vpop.xlane.xlu0 %2157
    %v2159 = vmul.f32 %v2156, 0.015625
    %v2160 = vmul.f32 %v2158, 0.015625
    %v2161 = vmul.f32 %v2139, %v2139
    %v2162 = vmul.f32 %v2140, %v2140
    %2163 = vadd.xlane.f32.xlu0 %v2161
    %v2164 = vpop.xlane.xlu0 %2163
    %2165 = vadd.xlane.f32.xlu0 %v2162
    %v2166 = vpop.xlane.xlu0 %2165
    %v2167 = vmul.f32 %v2164, 0.015625
    %v2168 = vmul.f32 %v2166, 0.015625
    %v2169 = vmul.f32 %v2145, %v2145
    %v2170 = vmul.f32 %v2146, %v2146
    %v2171 = vsub.f32 %v2159, %v2169
    %v2172 = vsub.f32 %v2160, %v2170
    %v2173 = vadd.f32 %v2171, 1e-05
    %v2174 = vadd.f32 %v2172, 1e-05
    %v2175 = vrsqrt.pop %v2173
    %v2176 = vrsqrt.pop %v2174
    %v2177 = vmul.f32 %v2151, %v2151
    %v2178 = vmul.f32 %v2152, %v2152
    %v2179 = vsub.f32 %v2167, %v2177
    %v2180 = vsub.f32 %v2168, %v2178
    %v2181 = vadd.f32 %v2179, 1e-05
    %v2182 = vadd.f32 %v2180, 1e-05
    %v2183 = vrsqrt.pop %v2181
    %v2184 = vrsqrt.pop %v2182
    %v2185 = vsub.f32 %v2145, %v2151
    %v2186 = vsub.f32 %v2146, %v2152
    %v2187 = vmul.f32 %v2185, %v132
    %v2188 = vmul.f32 %v2186, %v132
    %v2189 = vadd.f32 %v2151, %v2187
    %v2190 = vadd.f32 %v2152, %v2188
    %v2191 = vmul.f32 %v2175, %v117
    %v2192 = vmul.f32 %v2176, %v117
    %v2193 = vmul.f32 %v2183, %v137
    %v2194 = vmul.f32 %v2184, %v137
    %v2195 = vadd.f32 %v2191, %v2193
    %v2196 = vadd.f32 %v2192, %v2194
    %v2197 = vsub.f32 %v2133, %v2189
    %v2198 = vsub.f32 %v2134, %v2190
    %v2199 = vmul.f32 %v2197, %v2195
    %v2200 = vmul.f32 %v2198, %v2196
    %v2201 = vadd.f32 %v2199, %v122
    %v2202 = vadd.f32 %v2200, %v122
    %2203 = vst.msk [vmem:[#allocation2] sm:$0xff] %vm138, %v2201
    %2204 = vst.msk [vmem:[#allocation2 + $0x8] sm:$0xff] %vm138, %v2202
    %2207 = vrot.lane.b32.xlu0 %v2201, 96
    %v2208 = vpop.permute.xlu0 %2207
    %2209 = vrot.lane.b32.xlu0 %v2202, 96
    %v2210 = vpop.permute.xlu0 %2209
    %2213 = vst.msk [vmem:[#allocation2 + $0x10] sm:$0xff] %vm138, %v2208
    %2214 = vst.msk [vmem:[#allocation2 + $0x18] sm:$0xff] %vm138, %v2210
    %2215 = vst.msk [vmem:[#allocation2 + $0x20] sm:$0xff] %vm304, %v2208
    %2216 = vst.msk [vmem:[#allocation2 + $0x28] sm:$0xff] %vm304, %v2210
    %2217 = vrot.lane.b32.xlu0 %v2201, 64
    %v2218 = vpop.permute.xlu0 %2217
    %2219 = vrot.lane.b32.xlu0 %v2202, 64
    %v2220 = vpop.permute.xlu0 %2219
    %2223 = vst.msk [vmem:[#allocation2 + $0x30] sm:$0xff] %vm304, %v2218
    %2224 = vst.msk [vmem:[#allocation2 + $0x38] sm:$0xff] %vm304, %v2220
    %v2225 = vld [vmem:[#allocation2] sm:$0xff]
    %v2226 = vld [vmem:[#allocation2 + $0x8] sm:$0xff]
    %v2227 = vld [vmem:[#allocation2 + $0x10] sm:$0xff]
    %v2228 = vld [vmem:[#allocation2 + $0x18] sm:$0xff]
    %v2229 = vld [vmem:[#allocation2 + $0x20] sm:$0xff]
    %v2230 = vld [vmem:[#allocation2 + $0x28] sm:$0xff]
    %v2231 = vld [vmem:[#allocation2 + $0x30] sm:$0xff]
    %v2232 = vld [vmem:[#allocation2 + $0x38] sm:$0xff]
    %2233 = vmatprep.subr.mxu0 0.0
    %2234 = vmatpush1.msra.mxu0 %v2225
    %2235 = vmatprep.subr.mxu0 0.0
    %2236 = vmatpush1.msra.mxu0 %v2226
    %2237 = vmatprep.subr.mxu0 0.0
    %2238 = vmatpush1.msra.mxu0 %v2227
    %2239 = vmatprep.subr.mxu0 0.0
    %2240 = vmatpush1.msra.mxu0 %v2228
    %2241 = vmatprep.subr.mxu0 0.0
    %2242 = vmatpush1.msra.mxu0 %v2229
    %2243 = vmatprep.subr.mxu0 0.0
    %2244 = vmatpush1.msra.mxu0 %v2230
    %2245 = vmatprep.subr.mxu0 0.0
    %2246 = vmatpush1.msra.mxu0 %v2231
    %2247 = vmatprep.subr.mxu0 0.0
    %2248 = vmatpush1.msra.mxu0 %v2232
    %2249 = vmatprep.subr.mxu0 0.0
    %2250 = vmatpush1.msra.mxu0 0.0
    %2251 = vmatprep.subr.mxu0 0.0
    %2252 = vmatpush1.msra.mxu0 0.0
    %2253 = vmatprep.subr.mxu0 0.0
    %2254 = vmatpush1.msra.mxu0 0.0
    %2255 = vmatprep.subr.mxu0 0.0
    %2256 = vmatpush1.msra.mxu0 0.0
    %2257 = vmatprep.subr.mxu0 0.0
    %2258 = vmatpush1.msra.mxu0 0.0
    %2259 = vmatprep.subr.mxu0 0.0
    %2260 = vmatpush1.msra.mxu0 0.0
    %2261 = vmatprep.subr.mxu0 0.0
    %2262 = vmatpush1.msra.mxu0 0.0
    %2263 = vmatprep.subr.mxu0 0.0
    %2264 = vmatpush1.msra.mxu0 0.0
    %2265 = vmatprep.subr.mxu0 0.0
    %2266 = vmatpush1.msra.mxu0 0.0
    %2267 = vmatprep.subr.mxu0 0.0
    %2268 = vmatpush1.msra.mxu0 0.0
    %2269 = vmatprep.subr.mxu0 0.0
    %2270 = vmatpush1.msra.mxu0 0.0
    %2271 = vmatprep.subr.mxu0 0.0
    %2272 = vmatpush1.msra.mxu0 0.0
    %2273 = vmatprep.subr.mxu0 0.0
    %2274 = vmatpush1.msra.mxu0 0.0
    %2275 = vmatprep.subr.mxu0 0.0
    %2276 = vmatpush1.msra.mxu0 0.0
    %2277 = vmatprep.subr.mxu0 0.0
    %2278 = vmatpush1.msra.mxu0 0.0
    %2279 = vmatprep.subr.mxu0 0.0
    %2280 = vmatpush1.msra.mxu0 0.0
    %2281 = vmatprep.subr.mxu0 0.0
    %2282 = vmatpush1.msra.mxu0 0.0
    %2283 = vmatprep.subr.mxu0 0.0
    %2284 = vmatpush1.msra.mxu0 0.0
    %2285 = vmatprep.subr.mxu0 0.0
    %2286 = vmatpush1.msra.mxu0 0.0
    %2287 = vmatprep.subr.mxu0 0.0
    %2288 = vmatpush1.msra.mxu0 0.0
    %2289 = vmatprep.subr.mxu0 0.0
    %2290 = vmatpush1.msra.mxu0 0.0
    %2291 = vmatprep.subr.mxu0 0.0
    %2292 = vmatpush1.msra.mxu0 0.0
    %2293 = vmatprep.subr.mxu0 0.0
    %2294 = vmatpush1.msra.mxu0 0.0
    %2295 = vmatprep.subr.mxu0 0.0
    %2296 = vmatpush1.msra.mxu0 0.0
    %2297 = vmatprep.mubr.f32.mxu0 0.0
    %2298 = vmatmul.mubr.f32.gmra.mrb[0].mxu0 %v324
    %v2299 = vpop.f32.mrb[0].mxu0
    %v2300 = vadd.f32 0.0, %v2299
    %v2301 = vpop.f32.mrb[0].mxu0
    %2302 = vmatprep.mubr.f32.mxu0 0.0
    %2303 = vmatmul.mubr.f32.gmra.mrb[0].mxu0 %v327
    %v2304 = vpop.f32.mrb[0].mxu0
    %v2305 = vadd.f32 0.0, %v2304
    %v2306 = vpop.f32.mrb[0].mxu0
    %2307 = vdwg.mxu0
    %v2309 = vsel %vm75, %v2300, 0
    %v2312 = vsel %vm75, %v2305, 0
    %2314 = vmatprep.subr.mxu0 0.0
    %2315 = vmatpush1.msra.mxu0 %v88
    %2316 = vmatprep.subr.mxu0 0.0
    %2317 = vmatpush1.msra.mxu0 %v89
    %2318 = vmatprep.subr.mxu0 0.0
    %2319 = vmatpush1.msra.mxu0 %v90
    %2320 = vmatprep.subr.mxu0 0.0
    %2321 = vmatpush1.msra.mxu0 %v91
    %2322 = vmatprep.subr.mxu0 0.0
    %2323 = vmatpush1.msra.mxu0 %v92
    %2324 = vmatprep.subr.mxu0 0.0
    %2325 = vmatpush1.msra.mxu0 %v93
    %2326 = vmatprep.subr.mxu0 0.0
    %2327 = vmatpush1.msra.mxu0 %v94
    %2328 = vmatprep.subr.mxu0 0.0
    %2329 = vmatpush1.msra.mxu0 %v95
    %2330 = vmatprep.subr.mxu0 0.0
    %2331 = vmatpush1.msra.mxu0 0.0
    %2332 = vmatprep.subr.mxu0 0.0
    %2333 = vmatpush1.msra.mxu0 0.0
    %2334 = vmatprep.subr.mxu0 0.0
    %2335 = vmatpush1.msra.mxu0 0.0
    %2336 = vmatprep.subr.mxu0 0.0
    %2337 = vmatpush1.msra.mxu0 0.0
    %2338 = vmatprep.subr.mxu0 0.0
    %2339 = vmatpush1.msra.mxu0 0.0
    %2340 = vmatprep.subr.mxu0 0.0
    %2341 = vmatpush1.msra.mxu0 0.0
    %2342 = vmatprep.subr.mxu0 0.0
    %2343 = vmatpush1.msra.mxu0 0.0
    %2344 = vmatprep.subr.mxu0 0.0
    %2345 = vmatpush1.msra.mxu0 0.0
    %2346 = vmatprep.subr.mxu0 0.0
    %2347 = vmatpush1.msra.mxu0 0.0
    %2348 = vmatprep.subr.mxu0 0.0
    %2349 = vmatpush1.msra.mxu0 0.0
    %2350 = vmatprep.subr.mxu0 0.0
    %2351 = vmatpush1.msra.mxu0 0.0
    %2352 = vmatprep.subr.mxu0 0.0
    %2353 = vmatpush1.msra.mxu0 0.0
    %2354 = vmatprep.subr.mxu0 0.0
    %2355 = vmatpush1.msra.mxu0 0.0
    %2356 = vmatprep.subr.mxu0 0.0
    %2357 = vmatpush1.msra.mxu0 0.0
    %2358 = vmatprep.subr.mxu0 0.0
    %2359 = vmatpush1.msra.mxu0 0.0
    %2360 = vmatprep.subr.mxu0 0.0
    %2361 = vmatpush1.msra.mxu0 0.0
    %2362 = vmatprep.subr.mxu0 0.0
    %2363 = vmatpush1.msra.mxu0 0.0
    %2364 = vmatprep.subr.mxu0 0.0
    %2365 = vmatpush1.msra.mxu0 0.0
    %2366 = vmatprep.subr.mxu0 0.0
    %2367 = vmatpush1.msra.mxu0 0.0
    %2368 = vmatprep.subr.mxu0 0.0
    %2369 = vmatpush1.msra.mxu0 0.0
    %2370 = vmatprep.subr.mxu0 0.0
    %2371 = vmatpush1.msra.mxu0 0.0
    %2372 = vmatprep.subr.mxu0 0.0
    %2373 = vmatpush1.msra.mxu0 0.0
    %2374 = vmatprep.subr.mxu0 0.0
    %2375 = vmatpush1.msra.mxu0 0.0
    %2376 = vmatprep.subr.mxu0 0.0
    %2377 = vmatpush1.msra.mxu0 0.0
    %2378 = vmatprep.mubr.f32.mxu0 0.0
    %2379 = vmatmul.mubr.f32.gmra.mrb[0].mxu0 %v2309
    %v2380 = vpop.f32.mrb[0].mxu0
    %v2381 = vadd.f32 %v2135, %v2380
    %v2382 = vpop.f32.mrb[0].mxu0
    %2383 = vmatprep.mubr.f32.mxu0 0.0
    %2384 = vmatmul.mubr.f32.gmra.mrb[0].mxu0 %v2312
    %v2385 = vpop.f32.mrb[0].mxu0
    %v2386 = vadd.f32 %v2136, %v2385
    %v2387 = vpop.f32.mrb[0].mxu0
    %2388 = vdwg.mxu0
    %v2389 = vxor.u32 %v2381, 2147483648
    %v2390 = vxor.u32 %v2386, 2147483648
    %v2391 = vmul.f32 %v2389, 1.442695
    %v2392 = vpow.pop %v2391
    %v2393 = vmul.f32 %v2390, 1.442695
    %v2394 = vpow.pop %v2393
    %v2395 = vadd.f32 %v2392, 1.0
    %v2396 = vadd.f32 %v2394, 1.0
    %v2397 = vrcp.pop %v2395
    %v2398 = vmul.f32 1.0, %v2397
    %v2399 = vrcp.pop %v2396
    %v2400 = vmul.f32 1.0, %v2399
    %2401 = vrot.lane.b32.xlu0 %v2048, 32
    %v2402 = vpop.permute.xlu0 %2401
    %2403 = vrot.lane.b32.xlu0 %v2049, 32
    %v2404 = vpop.permute.xlu0 %2403
    %v2407 = vmul.f32 %v2398, %v2402
    %v2408 = vmul.f32 %v2400, %v2404
    %2411 = vrot.lane.b32.xlu0 %v2407, 96
    %v2412 = vpop.permute.xlu0 %2411
    %2413 = vrot.lane.b32.xlu0 %v2408, 96
    %v2414 = vpop.permute.xlu0 %2413
    %v2415 = vsel %vm138, %v2412, 0
    %v2417 = vsel %vm138, %v2414, 0
    %2419 = vmatprep.subr.mxu0 0.0
    %2420 = vmatpush1.msra.mxu0 %v104
    %2421 = vmatprep.subr.mxu0 0.0
    %2422 = vmatpush1.msra.mxu0 %v105
    %2423 = vmatprep.subr.mxu0 0.0
    %2424 = vmatpush1.msra.mxu0 %v106
    %2425 = vmatprep.subr.mxu0 0.0
    %2426 = vmatpush1.msra.mxu0 %v107
    %2427 = vmatprep.subr.mxu0 0.0
    %2428 = vmatpush1.msra.mxu0 0.0
    %2429 = vmatprep.subr.mxu0 0.0
    %2430 = vmatpush1.msra.mxu0 0.0
    %2431 = vmatprep.subr.mxu0 0.0
    %2432 = vmatpush1.msra.mxu0 0.0
    %2433 = vmatprep.subr.mxu0 0.0
    %2434 = vmatpush1.msra.mxu0 0.0
    %2435 = vmatprep.subr.mxu0 0.0
    %2436 = vmatpush1.msra.mxu0 0.0
    %2437 = vmatprep.subr.mxu0 0.0
    %2438 = vmatpush1.msra.mxu0 0.0
    %2439 = vmatprep.subr.mxu0 0.0
    %2440 = vmatpush1.msra.mxu0 0.0
    %2441 = vmatprep.subr.mxu0 0.0
    %2442 = vmatpush1.msra.mxu0 0.0
    %2443 = vmatprep.subr.mxu0 0.0
    %2444 = vmatpush1.msra.mxu0 0.0
    %2445 = vmatprep.subr.mxu0 0.0
    %2446 = vmatpush1.msra.mxu0 0.0
    %2447 = vmatprep.subr.mxu0 0.0
    %2448 = vmatpush1.msra.mxu0 0.0
    %2449 = vmatprep.subr.mxu0 0.0
    %2450 = vmatpush1.msra.mxu0 0.0
    %2451 = vmatprep.subr.mxu0 0.0
    %2452 = vmatpush1.msra.mxu0 0.0
    %2453 = vmatprep.subr.mxu0 0.0
    %2454 = vmatpush1.msra.mxu0 0.0
    %2455 = vmatprep.subr.mxu0 0.0
    %2456 = vmatpush1.msra.mxu0 0.0
    %2457 = vmatprep.subr.mxu0 0.0
    %2458 = vmatpush1.msra.mxu0 0.0
    %2459 = vmatprep.subr.mxu0 0.0
    %2460 = vmatpush1.msra.mxu0 0.0
    %2461 = vmatprep.subr.mxu0 0.0
    %2462 = vmatpush1.msra.mxu0 0.0
    %2463 = vmatprep.subr.mxu0 0.0
    %2464 = vmatpush1.msra.mxu0 0.0
    %2465 = vmatprep.subr.mxu0 0.0
    %2466 = vmatpush1.msra.mxu0 0.0
    %2467 = vmatprep.subr.mxu0 0.0
    %2468 = vmatpush1.msra.mxu0 0.0
    %2469 = vmatprep.subr.mxu0 0.0
    %2470 = vmatpush1.msra.mxu0 0.0
    %2471 = vmatprep.subr.mxu0 0.0
    %2472 = vmatpush1.msra.mxu0 0.0
    %2473 = vmatprep.subr.mxu0 0.0
    %2474 = vmatpush1.msra.mxu0 0.0
    %2475 = vmatprep.subr.mxu0 0.0
    %2476 = vmatpush1.msra.mxu0 0.0
    %2477 = vmatprep.subr.mxu0 0.0
    %2478 = vmatpush1.msra.mxu0 0.0
    %2479 = vmatprep.subr.mxu0 0.0
    %2480 = vmatpush1.msra.mxu0 0.0
    %2481 = vmatprep.subr.mxu0 0.0
    %2482 = vmatpush1.msra.mxu0 0.0
    %2483 = vmatprep.mubr.f32.mxu0 0.0
    %2484 = vmatmul.mubr.f32.gmra.mrb[0].mxu0 %v2415
    %v2485 = vpop.f32.mrb[0].mxu0
    %v2486 = vadd.f32 0.0, %v2485
    %v2487 = vpop.f32.mrb[0].mxu0
    %2488 = vmatprep.mubr.f32.mxu0 0.0
    %2489 = vmatmul.mubr.f32.gmra.mrb[0].mxu0 %v2417
    %v2490 = vpop.f32.mrb[0].mxu0
    %v2491 = vadd.f32 0.0, %v2490
    %v2492 = vpop.f32.mrb[0].mxu0
    %2493 = vdwg.mxu0
    %2496 = vrot.lane.b32.xlu0 %v2486, 64
    %v2497 = vpop.permute.xlu0 %2496
    %2498 = vrot.lane.b32.xlu0 %v2491, 64
    %v2499 = vpop.permute.xlu0 %2498
    %v2502 = vadd.f32 %v2381, %v2497
    %v2503 = vadd.f32 %v2386, %v2499
    %v2504 = vtanh.pop %v2502
    %v2505 = vtanh.pop %v2503
    %2506 = vrot.lane.b32.xlu0 %v2048, 64
    %v2507 = vpop.permute.xlu0 %2506
    %2508 = vrot.lane.b32.xlu0 %v2049, 64
    %v2509 = vpop.permute.xlu0 %2508
    %v2512 = vsub.f32 %v2504, %v2507
    %v2513 = vsub.f32 %v2505, %v2509
    %2516 = vrot.lane.b32.xlu0 %v2512, 64
    %v2517 = vpop.permute.xlu0 %2516
    %2518 = vrot.lane.b32.xlu0 %v2513, 64
    %v2519 = vpop.permute.xlu0 %2518
    %v2522 = vmul.f32 %v2398, %v2517
    %v2523 = vmul.f32 %v2400, %v2519
    %v2524 = vadd.f32 %v2048, %v2522
    %v2525 = vadd.f32 %v2049, %v2523
    %v2526 = vld [vmem:[#allocation3] sm:$0xff]
    %v2527 = vld [vmem:[#allocation3 + $0x8] sm:$0xff]
    %v2528 = vld [vmem:[#allocation7 + $0x10] sm:$0xff]
    %v2529 = vld [vmem:[#allocation7 + $0x28] sm:$0xff]
    %v2530 = vld [vmem:[#allocation7 + $0x40] sm:$0xff]
    %v2531 = vld [vmem:[#allocation7 + $0x58] sm:$0xff]
    %v2532 = vld [vmem:[%s4 + $0x4] sm:$0x1]
    %v2533 = vlaneseq
    %v2534 = vshrl.u32 %v2533, 7
    %v2535 = vsub.s32 0, %v2534
    %v2536 = vrot.slane %v2532, %v2535
    %2538 = vset.pattern.permute.xlu0 32
    %2539 = vperm.xlu0 %2538, %v2526
    %v2540 = vpop.permute.xlu0 %2539
    %2543 = vset.pattern.permute.xlu0 32
    %2544 = vperm.xlu0 %2543, %v2527
    %v2545 = vpop.permute.xlu0 %2544
    %v2547 = vmul.f32 %v2540, %v2536
    %v2548 = vmul.f32 %v2545, %v2536
    %2553 = vrot.lane.b32.xlu0 %v2528, 96
    %v2554 = vpop.permute.xlu0 %2553
    %2555 = vrot.lane.b32.xlu0 %v2529, 96
    %v2556 = vpop.permute.xlu0 %2555
    %2557 = vrot.lane.b32.xlu0 %v2530, 96
    %v2558 = vpop.permute.xlu0 %2557
    %2559 = vrot.lane.b32.xlu0 %v2531, 96
    %v2560 = vpop.permute.xlu0 %2559
    %2567 = vrot.lane.b32.xlu0 %v2547, 96
    %v2568 = vpop.permute.xlu0 %2567
    %2569 = vrot.lane.b32.xlu0 %v2548, 96
    %v2570 = vpop.permute.xlu0 %2569
    %v2574 = vsel %vm138, %v2524, 0
    %v2577 = vsel %vm138, %v2525, 0
    %2579 = vmatprep.subr.mxu0 0.0
    %2580 = vmatpush1.msra.mxu0 %v2554
    %2581 = vmatprep.subr.mxu0 0.0
    %2582 = vmatpush1.msra.mxu0 %v2556
    %2583 = vmatprep.subr.mxu0 0.0
    %2584 = vmatpush1.msra.mxu0 %v2558
    %2585 = vmatprep.subr.mxu0 0.0
    %2586 = vmatpush1.msra.mxu0 %v2560
    %2587 = vmatprep.subr.mxu0 0.0
    %2588 = vmatpush1.msra.mxu0 0.0
    %2589 = vmatprep.subr.mxu0 0.0
    %2590 = vmatpush1.msra.mxu0 0.0
    %2591 = vmatprep.subr.mxu0 0.0
    %2592 = vmatpush1.msra.mxu0 0.0
    %2593 = vmatprep.subr.mxu0 0.0
    %2594 = vmatpush1.msra.mxu0 0.0
    %2595 = vmatprep.subr.mxu0 0.0
    %2596 = vmatpush1.msra.mxu0 0.0
    %2597 = vmatprep.subr.mxu0 0.0
    %2598 = vmatpush1.msra.mxu0 0.0
    %2599 = vmatprep.subr.mxu0 0.0
    %2600 = vmatpush1.msra.mxu0 0.0
    %2601 = vmatprep.subr.mxu0 0.0
    %2602 = vmatpush1.msra.mxu0 0.0
    %2603 = vmatprep.subr.mxu0 0.0
    %2604 = vmatpush1.msra.mxu0 0.0
    %2605 = vmatprep.subr.mxu0 0.0
    %2606 = vmatpush1.msra.mxu0 0.0
    %2607 = vmatprep.subr.mxu0 0.0
    %2608 = vmatpush1.msra.mxu0 0.0
    %2609 = vmatprep.subr.mxu0 0.0
    %2610 = vmatpush1.msra.mxu0 0.0
    %2611 = vmatprep.subr.mxu0 0.0
    %2612 = vmatpush1.msra.mxu0 0.0
    %2613 = vmatprep.subr.mxu0 0.0
    %2614 = vmatpush1.msra.mxu0 0.0
    %2615 = vmatprep.subr.mxu0 0.0
    %2616 = vmatpush1.msra.mxu0 0.0
    %2617 = vmatprep.subr.mxu0 0.0
    %2618 = vmatpush1.msra.mxu0 0.0
    %2619 = vmatprep.subr.mxu0 0.0
    %2620 = vmatpush1.msra.mxu0 0.0
    %2621 = vmatprep.subr.mxu0 0.0
    %2622 = vmatpush1.msra.mxu0 0.0
    %2623 = vmatprep.subr.mxu0 0.0
    %2624 = vmatpush1.msra.mxu0 0.0
    %2625 = vmatprep.subr.mxu0 0.0
    %2626 = vmatpush1.msra.mxu0 0.0
    %2627 = vmatprep.subr.mxu0 0.0
    %2628 = vmatpush1.msra.mxu0 0.0
    %2629 = vmatprep.subr.mxu0 0.0
    %2630 = vmatpush1.msra.mxu0 0.0
    %2631 = vmatprep.subr.mxu0 0.0
    %2632 = vmatpush1.msra.mxu0 0.0
    %2633 = vmatprep.subr.mxu0 0.0
    %2634 = vmatpush1.msra.mxu0 0.0
    %2635 = vmatprep.subr.mxu0 0.0
    %2636 = vmatpush1.msra.mxu0 0.0
    %2637 = vmatprep.subr.mxu0 0.0
    %2638 = vmatpush1.msra.mxu0 0.0
    %2639 = vmatprep.subr.mxu0 0.0
    %2640 = vmatpush1.msra.mxu0 0.0
    %2641 = vmatprep.subr.mxu0 0.0
    %2642 = vmatpush1.msra.mxu0 0.0
    %2643 = vmatprep.mubr.f32.mxu0 0.0
    %2644 = vmatmul.mubr.f32.gmra.mrb[0].mxu0 %v2574
    %v2645 = vpop.f32.mrb[0].mxu0
    %v2646 = vadd.f32 %v2568, %v2645
    %v2647 = vpop.f32.mrb[0].mxu0
    %2648 = vmatprep.mubr.f32.mxu0 0.0
    %2649 = vmatmul.mubr.f32.gmra.mrb[0].mxu0 %v2577
    %v2650 = vpop.f32.mrb[0].mxu0
    %v2651 = vadd.f32 %v2570, %v2650
    %v2652 = vpop.f32.mrb[0].mxu0
    %2653 = vdwg.mxu0
    %v2654 = vadd.f32 %v2646, %v2536
    %v2655 = vadd.f32 %v2651, %v2536
    %v2656 = vtanh.pop %v2654
    %v2657 = vtanh.pop %v2655
    %2659 = vrot.lane.b32.xlu0 %v2536, 64
    %v2660 = vpop.permute.xlu0 %2659
    %v2662 = vmul.f32 %v2656, %v2660
    %v2663 = vmul.f32 %v2657, %v2660
    %v2664 = vsel %vm138, %v2662, 0.0
    %2665 = vadd.xlane.f32.xlu0 %v2664
    %v2666 = vpop.xlane.xlu0 %2665
    %v2667 = vsel %vm138, %v2663, 0.0
    %2668 = vadd.xlane.f32.xlu0 %v2667
    %v2669 = vpop.xlane.xlu0 %2668
    %v2670 = vadd.f32 %v2666, %v2536
    %v2671 = vadd.f32 %v2669, %v2536
    %2674 = vrot.lane.b32.xlu0 %v2670, 32
    %v2675 = vpop.permute.xlu0 %2674
    %2676 = vrot.lane.b32.xlu0 %v2671, 32
    %v2677 = vpop.permute.xlu0 %2676
    %vm2680 = vcmask 7168
    %2681 = vst.msk [vmem:[%s5] sm:$0xff] %vm2680, %v2675
    %2682 = vst.msk [vmem:[%s5 + $0x8] sm:$0xff] %vm2680, %v2677
    // Predicated region
    $region38: #{tpu_custom_call.1} parent=1 // pred_check
      _
    $region39: #{tpu_custom_call.1} parent=1 // pred_check_branch
      %2684 = sbr.rel (0) target = $region41
    $region40: #{tpu_custom_call.1} parent=1 // pred_region
      _
    $region41: #{tpu_custom_call.1} parent=1 // pred_fallthru
      _
    // Predicated region
    $region42: #{tpu_custom_call.1} parent=1 // pred_check
      _
    $region43: #{tpu_custom_call.1} parent=1 // pred_check_branch
      %2686 = sbr.rel (0) target = $region45
    $region44: #{tpu_custom_call.1} parent=1 // pred_region
      _
    $region45: #{tpu_custom_call.1} parent=1 // pred_fallthru
      _
    %2687 = vsyncpa [#allocation4], 1
    %2688 = vsyncpa [#allocation6], 1
    %2689 = vsyncpa [#allocation9], 1

</llo_original>
